<compile_context>
chip_gen: v6e
topology: v6e:2x2x1
jax: 0.10.0
libtpu: 0.0.40
codegen_flags: <defaults>
</compile_context>

<pallas_src>
import functools
import math

import jax
import jax.numpy as jnp
from jax import lax
from jax.experimental import pallas as pl
from jax.experimental.pallas import tpu as pltpu

jax.config.update("jax_default_matmul_precision", "highest")


def _round_up(x, m):
    return ((x + m - 1) // m) * m


def _qkv_proj_kernel(x_ref, wq_ref, wk_ref, wv_ref, bq_ref, bk_ref, bv_ref,
                     o_ref, *, h_out):
    # x_ref : (tm, Hin) row tile of flattened hidden_states
    # w*_ref: (Hout, Hin) torch-layout weights (contract on their dim 1)
    # b*_ref: (1, Hout)
    # o_ref : (tm, 3*Hout) lane-dense [Q | K | V] slab
    dn = (((1,), (1,)), ((), ()))
    x = x_ref[...]
    q = lax.dot_general(x, wq_ref[...], dn, preferred_element_type=jnp.float32)
    k = lax.dot_general(x, wk_ref[...], dn, preferred_element_type=jnp.float32)
    v = lax.dot_general(x, wv_ref[...], dn, preferred_element_type=jnp.float32)
    q = q + bq_ref[...].astype(jnp.float32)
    k = k + bk_ref[...].astype(jnp.float32)
    v = v + bv_ref[...].astype(jnp.float32)
    o_ref[:, 0:h_out] = q.astype(o_ref.dtype)
    o_ref[:, h_out:2 * h_out] = k.astype(o_ref.dtype)
    o_ref[:, 2 * h_out:3 * h_out] = v.astype(o_ref.dtype)


def _mhsa_kernel(qkv_ref, mask_ref, o_ref, *, num_heads, head_dim, scale):
    # qkv_ref : (1, S, 3*H)  [Q | K | V] for one batch element
    # mask_ref: (1, 1, S)    additive attention mask (broadcast over queries/heads)
    # o_ref   : (1, S, H)    merged-head context
    h_out = num_heads * head_dim
    qkv = qkv_ref[0]                          # (S, 3*H)
    mask = mask_ref[0].astype(jnp.float32)    # (1, S)
    dn = (((1,), (1,)), ((), ()))
    ctxs = []
    for h in range(num_heads):                # static unroll over heads
        q = qkv[:, h * head_dim:(h + 1) * head_dim]
        k = qkv[:, h_out + h * head_dim:h_out + (h + 1) * head_dim]
        v = qkv[:, 2 * h_out + h * head_dim:2 * h_out + (h + 1) * head_dim]
        s = lax.dot_general(q, k, dn, preferred_element_type=jnp.float32)
        s = s * scale + mask                  # (S, S) + (1, S)
        s = s - jnp.max(s, axis=-1, keepdims=True)
        p = jnp.exp(s)
        p = p / jnp.sum(p, axis=-1, keepdims=True)
        # TODO(synk): attention-probs dropout omitted (inference / p=0 semantics).
        ctx = jnp.dot(p.astype(qkv.dtype), v, preferred_element_type=jnp.float32)
        ctxs.append(ctx)
    o_ref[0] = jnp.concatenate(ctxs, axis=-1).astype(o_ref.dtype)


@functools.partial(jax.jit, static_argnames=("num_heads", "tm"))
def bert_image_self_attention(hidden_states, attention_mask,
                              wq, bq, wk, bk, wv, bv, *, num_heads, tm=256):
    """hidden_states: (B, S, Hin); attention_mask: (B, 1, 1, S) additive mask.

    wq/wk/wv: (Hout, Hin) torch nn.Linear layout; bq/bk/bv: (Hout,).
    Returns the context layer (B, S, Hout). attn_data (visualization) is not
    produced; the dynamic_attention gating path is not implemented.
    """
    B, S, h_in = hidden_states.shape
    h_out = wq.shape[0]
    head_dim = h_out // num_heads
    M = B * S

    # ---- Kernel 1: fused QKV projection over flattened rows ----------------
    x2d = hidden_states.reshape(M, h_in)
    tm_eff = min(tm, _round_up(M, 8))         # sublane-aligned row tile
    grid_m = pl.cdiv(M, tm_eff)               # partial last tile is masked

    qkv2d = pl.pallas_call(
        functools.partial(_qkv_proj_kernel, h_out=h_out),
        out_shape=jax.ShapeDtypeStruct((M, 3 * h_out), hidden_states.dtype),
        grid_spec=pltpu.PrefetchScalarGridSpec(
            num_scalar_prefetch=0,
            grid=(grid_m,),
            in_specs=[
                pl.BlockSpec((tm_eff, h_in), lambda i: (i, 0)),   # x tile
                pl.BlockSpec((h_out, h_in), lambda i: (0, 0)),    # Wq (resident)
                pl.BlockSpec((h_out, h_in), lambda i: (0, 0)),    # Wk
                pl.BlockSpec((h_out, h_in), lambda i: (0, 0)),    # Wv
                pl.BlockSpec((1, h_out), lambda i: (0, 0)),       # bq
                pl.BlockSpec((1, h_out), lambda i: (0, 0)),       # bk
                pl.BlockSpec((1, h_out), lambda i: (0, 0)),       # bv
            ],
            out_specs=pl.BlockSpec((tm_eff, 3 * h_out), lambda i: (i, 0)),
        ),
        compiler_params=pltpu.CompilerParams(
            dimension_semantics=("parallel",)),
        # TODO(synk): for very large Hin/Hout (real ViLBERT sizes on v7x), add a
        # K-split grid axis + f32 accumulator and/or raise vmem_limit_bytes.
    )(x2d, wq, wk, wv, bq.reshape(1, h_out), bk.reshape(1, h_out),
      bv.reshape(1, h_out))

    qkv3d = qkv2d.reshape(B, S, 3 * h_out)
    mask3d = attention_mask.reshape(B, 1, S)

    # ---- Kernel 2: per-batch multi-head attention ---------------------------
    scale = 1.0 / math.sqrt(head_dim)
    context = pl.pallas_call(
        functools.partial(_mhsa_kernel, num_heads=num_heads,
                          head_dim=head_dim, scale=scale),
        out_shape=jax.ShapeDtypeStruct((B, S, h_out), hidden_states.dtype),
        grid_spec=pltpu.PrefetchScalarGridSpec(
            num_scalar_prefetch=0,
            grid=(B,),
            in_specs=[
                pl.BlockSpec((1, S, 3 * h_out), lambda b: (b, 0, 0)),
                pl.BlockSpec((1, 1, S), lambda b: (b, 0, 0)),
            ],
            out_specs=pl.BlockSpec((1, S, h_out), lambda b: (b, 0, 0)),
        ),
        compiler_params=pltpu.CompilerParams(
            dimension_semantics=("parallel",)),
    )(qkv3d, mask3d)

    return context


def _reference(hidden_states, attention_mask, wq, bq, wk, bk, wv, bv,
               num_heads):
    B, S, _ = hidden_states.shape
    h_out = wq.shape[0]
    dh = h_out // num_heads

    def proj(w, b):
        y = jnp.einsum("bsi,oi->bso", hidden_states, w,
                       precision=lax.Precision.HIGHEST) + b
        return y.reshape(B, S, num_heads, dh).transpose(0, 2, 1, 3)

    q = proj(wq, bq)
    k = proj(wk, bk)
    v = proj(wv, bv)
    scores = jnp.einsum("bhqd,bhkd->bhqk", q, k,
                        precision=lax.Precision.HIGHEST) / math.sqrt(dh)
    scores = scores + attention_mask            # (B,1,1,S) broadcast
    probs = jax.nn.softmax(scores, axis=-1)
    ctx = jnp.einsum("bhqk,bhkd->bhqd", probs, v,
                     precision=lax.Precision.HIGHEST)
    return ctx.transpose(0, 2, 1, 3).reshape(B, S, h_out)


if __name__ == "__main__":
    # Toy ViLBERT image-stream config: v_hidden_size=32, v_num_attention_heads=4
    B, S, HIDDEN, NUM_HEADS = 2, 8, 32, 4

    key = jax.random.PRNGKey(0)
    ks = jax.random.split(key, 8)

    hidden_states = jax.random.normal(ks[0], (B, S, HIDDEN), dtype=jnp.float32)
    wq = jax.random.normal(ks[1], (HIDDEN, HIDDEN), dtype=jnp.float32) * 0.05
    wk = jax.random.normal(ks[2], (HIDDEN, HIDDEN), dtype=jnp.float32) * 0.05
    wv = jax.random.normal(ks[3], (HIDDEN, HIDDEN), dtype=jnp.float32) * 0.05
    bq = jax.random.normal(ks[4], (HIDDEN,), dtype=jnp.float32) * 0.02
    bk = jax.random.normal(ks[5], (HIDDEN,), dtype=jnp.float32) * 0.02
    bv = jax.random.normal(ks[6], (HIDDEN,), dtype=jnp.float32) * 0.02

    # Standard BERT extended attention mask: 0 = attend, -10000 = masked.
    keep = (jax.random.uniform(ks[7], (B, 1, 1, S)) < 0.8).astype(jnp.float32)
    attention_mask = (1.0 - keep) * -10000.0

    out = bert_image_self_attention(hidden_states, attention_mask,
                                    wq, bq, wk, bk, wv, bv,
                                    num_heads=NUM_HEADS)
    out = jax.block_until_ready(out)

    ref = _reference(hidden_states, attention_mask, wq, bq, wk, bk, wv, bv,
                     NUM_HEADS)
    assert out.shape == (B, S, HIDDEN)
    assert jnp.allclose(out, ref, atol=2e-4, rtol=2e-4), "mismatch vs reference"
    print("KERNEL_OK")
</pallas_src>

<mosaic_0001>
module attributes {stable_mosaic.version = 11 : i64} {
  func.func @_mhsa_kernel(%arg0: i32, %arg1: memref<1x8x96xf32, #tpu.memory_space<vmem>>, %arg2: memref<1x1x8xf32, #tpu.memory_space<vmem>>, %arg3: memref<1x8x32xf32, #tpu.memory_space<vmem>>) attributes {dimension_semantics = [#tpu.dimension_semantics<parallel>], iteration_bounds = array<i64: 2>, scalar_prefetch = 0 : i64, scratch_operands = 0 : i64, tpu.core_type = #tpu.core_type<tc>, window_params = [{transform_indices = @transform_0, window_bounds = array<i64: 1, 8, 96>}, {transform_indices = @transform_1, window_bounds = array<i64: 1, 1, 8>}, {transform_indices = @transform_2, window_bounds = array<i64: 1, 8, 32>}]} {
    %c0 = arith.constant 0 : index
    %c0_0 = arith.constant 0 : index
    %c0_1 = arith.constant 0 : index
    %0 = vector.load %arg1[%c0, %c0_0, %c0_1] : memref<1x8x96xf32, #tpu.memory_space<vmem>>, vector<1x8x96xf32>
    %1 = vector.shape_cast %0 : vector<1x8x96xf32> to vector<8x96xf32>
    %c0_2 = arith.constant 0 : index
    %c0_3 = arith.constant 0 : index
    %c0_4 = arith.constant 0 : index
    %2 = vector.load %arg2[%c0_2, %c0_3, %c0_4] : memref<1x1x8xf32, #tpu.memory_space<vmem>>, vector<1x1x8xf32>
    %3 = vector.shape_cast %2 : vector<1x1x8xf32> to vector<1x8xf32>
    %4 = vector.extract_strided_slice %1 {offsets = [0, 0], sizes = [8, 8], strides = [1, 1]} : vector<8x96xf32> to vector<8x8xf32>
    %5 = vector.extract_strided_slice %1 {offsets = [0, 32], sizes = [8, 8], strides = [1, 1]} : vector<8x96xf32> to vector<8x8xf32>
    %6 = vector.extract_strided_slice %1 {offsets = [0, 64], sizes = [8, 8], strides = [1, 1]} : vector<8x96xf32> to vector<8x8xf32>
    %cst = arith.constant dense<0.000000e+00> : vector<8x8xf32>
    %7 = tpu.matmul %4, %5, %cst {dimension_numbers = #tpu.dot_dimension_numbers<[1], [1], [0], [0], [0, 0, 1, 0], [], []>, precision = #tpu.contract_precision<fp32>} : vector<8x8xf32>, vector<8x8xf32>, vector<8x8xf32> -> vector<8x8xf32>
    %cst_5 = arith.constant 0.353553385 : f32
    %8 = vector.broadcast %cst_5 : f32 to vector<8x8xf32>
    %9 = arith.mulf %7, %8 : vector<8x8xf32>
    %10 = vector.broadcast %3 : vector<1x8xf32> to vector<8x8xf32>
    %11 = arith.addf %9, %10 : vector<8x8xf32>
    %cst_6 = arith.constant dense<0xFF800000> : vector<8xf32>
    %12 = vector.multi_reduction <maximumf>, %11, %cst_6 [1] : vector<8x8xf32> to vector<8xf32>
    %13 = vector.shape_cast %12 : vector<8xf32> to vector<8x1xf32>
    %14 = vector.broadcast %13 : vector<8x1xf32> to vector<8x8xf32>
    %15 = arith.subf %11, %14 : vector<8x8xf32>
    %16 = math.exp %15 : vector<8x8xf32>
    %cst_7 = arith.constant dense<0.000000e+00> : vector<8xf32>
    %17 = vector.multi_reduction <add>, %16, %cst_7 [1] : vector<8x8xf32> to vector<8xf32>
    %18 = vector.shape_cast %17 : vector<8xf32> to vector<8x1xf32>
    %19 = vector.broadcast %18 : vector<8x1xf32> to vector<8x8xf32>
    %20 = arith.divf %16, %19 : vector<8x8xf32>
    %cst_8 = arith.constant dense<0.000000e+00> : vector<8x8xf32>
    %21 = tpu.matmul %20, %6, %cst_8 {dimension_numbers = #tpu.dot_dimension_numbers<[1], [0], [0], [1], [0, 0, 1, 1], [], []>, precision = #tpu.contract_precision<fp32>} : vector<8x8xf32>, vector<8x8xf32>, vector<8x8xf32> -> vector<8x8xf32>
    %22 = vector.extract_strided_slice %1 {offsets = [0, 8], sizes = [8, 8], strides = [1, 1]} : vector<8x96xf32> to vector<8x8xf32>
    %23 = vector.extract_strided_slice %1 {offsets = [0, 40], sizes = [8, 8], strides = [1, 1]} : vector<8x96xf32> to vector<8x8xf32>
    %24 = vector.extract_strided_slice %1 {offsets = [0, 72], sizes = [8, 8], strides = [1, 1]} : vector<8x96xf32> to vector<8x8xf32>
    %cst_9 = arith.constant dense<0.000000e+00> : vector<8x8xf32>
    %25 = tpu.matmul %22, %23, %cst_9 {dimension_numbers = #tpu.dot_dimension_numbers<[1], [1], [0], [0], [0, 0, 1, 0], [], []>, precision = #tpu.contract_precision<fp32>} : vector<8x8xf32>, vector<8x8xf32>, vector<8x8xf32> -> vector<8x8xf32>
    %cst_10 = arith.constant 0.353553385 : f32
    %26 = vector.broadcast %cst_10 : f32 to vector<8x8xf32>
    %27 = arith.mulf %25, %26 : vector<8x8xf32>
    %28 = vector.broadcast %3 : vector<1x8xf32> to vector<8x8xf32>
    %29 = arith.addf %27, %28 : vector<8x8xf32>
    %cst_11 = arith.constant dense<0xFF800000> : vector<8xf32>
    %30 = vector.multi_reduction <maximumf>, %29, %cst_11 [1] : vector<8x8xf32> to vector<8xf32>
    %31 = vector.shape_cast %30 : vector<8xf32> to vector<8x1xf32>
    %32 = vector.broadcast %31 : vector<8x1xf32> to vector<8x8xf32>
    %33 = arith.subf %29, %32 : vector<8x8xf32>
    %34 = math.exp %33 : vector<8x8xf32>
    %cst_12 = arith.constant dense<0.000000e+00> : vector<8xf32>
    %35 = vector.multi_reduction <add>, %34, %cst_12 [1] : vector<8x8xf32> to vector<8xf32>
    %36 = vector.shape_cast %35 : vector<8xf32> to vector<8x1xf32>
    %37 = vector.broadcast %36 : vector<8x1xf32> to vector<8x8xf32>
    %38 = arith.divf %34, %37 : vector<8x8xf32>
    %cst_13 = arith.constant dense<0.000000e+00> : vector<8x8xf32>
    %39 = tpu.matmul %38, %24, %cst_13 {dimension_numbers = #tpu.dot_dimension_numbers<[1], [0], [0], [1], [0, 0, 1, 1], [], []>, precision = #tpu.contract_precision<fp32>} : vector<8x8xf32>, vector<8x8xf32>, vector<8x8xf32> -> vector<8x8xf32>
    %40 = vector.extract_strided_slice %1 {offsets = [0, 16], sizes = [8, 8], strides = [1, 1]} : vector<8x96xf32> to vector<8x8xf32>
    %41 = vector.extract_strided_slice %1 {offsets = [0, 48], sizes = [8, 8], strides = [1, 1]} : vector<8x96xf32> to vector<8x8xf32>
    %42 = vector.extract_strided_slice %1 {offsets = [0, 80], sizes = [8, 8], strides = [1, 1]} : vector<8x96xf32> to vector<8x8xf32>
    %cst_14 = arith.constant dense<0.000000e+00> : vector<8x8xf32>
    %43 = tpu.matmul %40, %41, %cst_14 {dimension_numbers = #tpu.dot_dimension_numbers<[1], [1], [0], [0], [0, 0, 1, 0], [], []>, precision = #tpu.contract_precision<fp32>} : vector<8x8xf32>, vector<8x8xf32>, vector<8x8xf32> -> vector<8x8xf32>
    %cst_15 = arith.constant 0.353553385 : f32
    %44 = vector.broadcast %cst_15 : f32 to vector<8x8xf32>
    %45 = arith.mulf %43, %44 : vector<8x8xf32>
    %46 = vector.broadcast %3 : vector<1x8xf32> to vector<8x8xf32>
    %47 = arith.addf %45, %46 : vector<8x8xf32>
    %cst_16 = arith.constant dense<0xFF800000> : vector<8xf32>
    %48 = vector.multi_reduction <maximumf>, %47, %cst_16 [1] : vector<8x8xf32> to vector<8xf32>
    %49 = vector.shape_cast %48 : vector<8xf32> to vector<8x1xf32>
    %50 = vector.broadcast %49 : vector<8x1xf32> to vector<8x8xf32>
    %51 = arith.subf %47, %50 : vector<8x8xf32>
    %52 = math.exp %51 : vector<8x8xf32>
    %cst_17 = arith.constant dense<0.000000e+00> : vector<8xf32>
    %53 = vector.multi_reduction <add>, %52, %cst_17 [1] : vector<8x8xf32> to vector<8xf32>
    %54 = vector.shape_cast %53 : vector<8xf32> to vector<8x1xf32>
    %55 = vector.broadcast %54 : vector<8x1xf32> to vector<8x8xf32>
    %56 = arith.divf %52, %55 : vector<8x8xf32>
    %cst_18 = arith.constant dense<0.000000e+00> : vector<8x8xf32>
    %57 = tpu.matmul %56, %42, %cst_18 {dimension_numbers = #tpu.dot_dimension_numbers<[1], [0], [0], [1], [0, 0, 1, 1], [], []>, precision = #tpu.contract_precision<fp32>} : vector<8x8xf32>, vector<8x8xf32>, vector<8x8xf32> -> vector<8x8xf32>
    %58 = vector.extract_strided_slice %1 {offsets = [0, 24], sizes = [8, 8], strides = [1, 1]} : vector<8x96xf32> to vector<8x8xf32>
    %59 = vector.extract_strided_slice %1 {offsets = [0, 56], sizes = [8, 8], strides = [1, 1]} : vector<8x96xf32> to vector<8x8xf32>
    %60 = vector.extract_strided_slice %1 {offsets = [0, 88], sizes = [8, 8], strides = [1, 1]} : vector<8x96xf32> to vector<8x8xf32>
    %cst_19 = arith.constant dense<0.000000e+00> : vector<8x8xf32>
    %61 = tpu.matmul %58, %59, %cst_19 {dimension_numbers = #tpu.dot_dimension_numbers<[1], [1], [0], [0], [0, 0, 1, 0], [], []>, precision = #tpu.contract_precision<fp32>} : vector<8x8xf32>, vector<8x8xf32>, vector<8x8xf32> -> vector<8x8xf32>
    %cst_20 = arith.constant 0.353553385 : f32
    %62 = vector.broadcast %cst_20 : f32 to vector<8x8xf32>
    %63 = arith.mulf %61, %62 : vector<8x8xf32>
    %64 = vector.broadcast %3 : vector<1x8xf32> to vector<8x8xf32>
    %65 = arith.addf %63, %64 : vector<8x8xf32>
    %cst_21 = arith.constant dense<0xFF800000> : vector<8xf32>
    %66 = vector.multi_reduction <maximumf>, %65, %cst_21 [1] : vector<8x8xf32> to vector<8xf32>
    %67 = vector.shape_cast %66 : vector<8xf32> to vector<8x1xf32>
    %68 = vector.broadcast %67 : vector<8x1xf32> to vector<8x8xf32>
    %69 = arith.subf %65, %68 : vector<8x8xf32>
    %70 = math.exp %69 : vector<8x8xf32>
    %cst_22 = arith.constant dense<0.000000e+00> : vector<8xf32>
    %71 = vector.multi_reduction <add>, %70, %cst_22 [1] : vector<8x8xf32> to vector<8xf32>
    %72 = vector.shape_cast %71 : vector<8xf32> to vector<8x1xf32>
    %73 = vector.broadcast %72 : vector<8x1xf32> to vector<8x8xf32>
    %74 = arith.divf %70, %73 : vector<8x8xf32>
    %cst_23 = arith.constant dense<0.000000e+00> : vector<8x8xf32>
    %75 = tpu.matmul %74, %60, %cst_23 {dimension_numbers = #tpu.dot_dimension_numbers<[1], [0], [0], [1], [0, 0, 1, 1], [], []>, precision = #tpu.contract_precision<fp32>} : vector<8x8xf32>, vector<8x8xf32>, vector<8x8xf32> -> vector<8x8xf32>
    %76 = tpu.concatenate %21, %39, %57, %75 in 1 : vector<8x8xf32>, vector<8x8xf32>, vector<8x8xf32>, vector<8x8xf32> -> vector<8x32xf32>
    %c0_24 = arith.constant 0 : index
    %c0_25 = arith.constant 0 : index
    %c0_26 = arith.constant 0 : index
    %77 = vector.load %arg3[%c0_24, %c0_25, %c0_26] : memref<1x8x32xf32, #tpu.memory_space<vmem>>, vector<1x8x32xf32>
    %78 = vector.shape_cast %77 : vector<1x8x32xf32> to vector<8x32xf32>
    %79 = vector.shape_cast %76 : vector<8x32xf32> to vector<1x8x32xf32>
    tpu.vector_store %arg3[%c0_24, %c0_25, %c0_26], %79 {strides = array<i32>} : memref<1x8x32xf32, #tpu.memory_space<vmem>>, vector<1x8x32xf32>,
    return
  }
  func.func @transform_0(%arg0: i32) -> (i32, i32, i32) {
    %c0_i32 = arith.constant 0 : i32
    %c0_i32_0 = arith.constant 0 : i32
    %c0_i32_1 = arith.constant 0 : i32
    return %arg0, %c0_i32, %c0_i32_0 : i32, i32, i32
  }
  func.func @transform_1(%arg0: i32) -> (i32, i32, i32) {
    %c0_i32 = arith.constant 0 : i32
    %c0_i32_0 = arith.constant 0 : i32
    %c0_i32_1 = arith.constant 0 : i32
    return %arg0, %c0_i32, %c0_i32_0 : i32, i32, i32
  }
  func.func @transform_2(%arg0: i32) -> (i32, i32, i32) {
    %c0_i32 = arith.constant 0 : i32
    %c0_i32_0 = arith.constant 0 : i32
    %c0_i32_1 = arith.constant 0 : i32
    return %arg0, %c0_i32, %c0_i32_0 : i32, i32, i32
  }
}

module attributes {stable_mosaic.version = 11 : i64} {
  func.func @_qkv_proj_kernel(%arg0: i32, %arg1: memref<16x32xf32, #tpu.memory_space<vmem>>, %arg2: memref<32x32xf32, #tpu.memory_space<vmem>>, %arg3: memref<32x32xf32, #tpu.memory_space<vmem>>, %arg4: memref<32x32xf32, #tpu.memory_space<vmem>>, %arg5: memref<1x32xf32, #tpu.memory_space<vmem>>, %arg6: memref<1x32xf32, #tpu.memory_space<vmem>>, %arg7: memref<1x32xf32, #tpu.memory_space<vmem>>, %arg8: memref<16x96xf32, #tpu.memory_space<vmem>>) attributes {dimension_semantics = [#tpu.dimension_semantics<parallel>], iteration_bounds = array<i64: 1>, scalar_prefetch = 0 : i64, scratch_operands = 0 : i64, tpu.core_type = #tpu.core_type<tc>, window_params = [{transform_indices = @transform_0, window_bounds = array<i64: 16, 32>}, {pipeline_mode = #tpu.pipeline_mode<synchronous>, transform_indices = @transform_1, window_bounds = array<i64: 32, 32>}, {pipeline_mode = #tpu.pipeline_mode<synchronous>, transform_indices = @transform_2, window_bounds = array<i64: 32, 32>}, {pipeline_mode = #tpu.pipeline_mode<synchronous>, transform_indices = @transform_3, window_bounds = array<i64: 32, 32>}, {pipeline_mode = #tpu.pipeline_mode<synchronous>, transform_indices = @transform_4, window_bounds = array<i64: 1, 32>}, {pipeline_mode = #tpu.pipeline_mode<synchronous>, transform_indices = @transform_5, window_bounds = array<i64: 1, 32>}, {pipeline_mode = #tpu.pipeline_mode<synchronous>, transform_indices = @transform_6, window_bounds = array<i64: 1, 32>}, {transform_indices = @transform_7, window_bounds = array<i64: 16, 96>}]} {
    %c0 = arith.constant 0 : index
    %c0_0 = arith.constant 0 : index
    %0 = vector.load %arg1[%c0, %c0_0] : memref<16x32xf32, #tpu.memory_space<vmem>>, vector<16x32xf32>
    %c0_1 = arith.constant 0 : index
    %c0_2 = arith.constant 0 : index
    %1 = vector.load %arg2[%c0_1, %c0_2] : memref<32x32xf32, #tpu.memory_space<vmem>>, vector<32x32xf32>
    %cst = arith.constant dense<0.000000e+00> : vector<16x32xf32>
    %2 = tpu.matmul %0, %1, %cst {dimension_numbers = #tpu.dot_dimension_numbers<[1], [1], [0], [0], [0, 0, 1, 0], [], []>, precision = #tpu.contract_precision<fp32>} : vector<16x32xf32>, vector<32x32xf32>, vector<16x32xf32> -> vector<16x32xf32>
    %c0_3 = arith.constant 0 : index
    %c0_4 = arith.constant 0 : index
    %3 = vector.load %arg3[%c0_3, %c0_4] : memref<32x32xf32, #tpu.memory_space<vmem>>, vector<32x32xf32>
    %cst_5 = arith.constant dense<0.000000e+00> : vector<16x32xf32>
    %4 = tpu.matmul %0, %3, %cst_5 {dimension_numbers = #tpu.dot_dimension_numbers<[1], [1], [0], [0], [0, 0, 1, 0], [], []>, precision = #tpu.contract_precision<fp32>} : vector<16x32xf32>, vector<32x32xf32>, vector<16x32xf32> -> vector<16x32xf32>
    %c0_6 = arith.constant 0 : index
    %c0_7 = arith.constant 0 : index
    %5 = vector.load %arg4[%c0_6, %c0_7] : memref<32x32xf32, #tpu.memory_space<vmem>>, vector<32x32xf32>
    %cst_8 = arith.constant dense<0.000000e+00> : vector<16x32xf32>
    %6 = tpu.matmul %0, %5, %cst_8 {dimension_numbers = #tpu.dot_dimension_numbers<[1], [1], [0], [0], [0, 0, 1, 0], [], []>, precision = #tpu.contract_precision<fp32>} : vector<16x32xf32>, vector<32x32xf32>, vector<16x32xf32> -> vector<16x32xf32>
    %c0_9 = arith.constant 0 : index
    %c0_10 = arith.constant 0 : index
    %7 = vector.load %arg5[%c0_9, %c0_10] : memref<1x32xf32, #tpu.memory_space<vmem>>, vector<1x32xf32>
    %8 = vector.broadcast %7 : vector<1x32xf32> to vector<16x32xf32>
    %9 = arith.addf %2, %8 : vector<16x32xf32>
    %c0_11 = arith.constant 0 : index
    %c0_12 = arith.constant 0 : index
    %10 = vector.load %arg6[%c0_11, %c0_12] : memref<1x32xf32, #tpu.memory_space<vmem>>, vector<1x32xf32>
    %11 = vector.broadcast %10 : vector<1x32xf32> to vector<16x32xf32>
    %12 = arith.addf %4, %11 : vector<16x32xf32>
    %c0_13 = arith.constant 0 : index
    %c0_14 = arith.constant 0 : index
    %13 = vector.load %arg7[%c0_13, %c0_14] : memref<1x32xf32, #tpu.memory_space<vmem>>, vector<1x32xf32>
    %14 = vector.broadcast %13 : vector<1x32xf32> to vector<16x32xf32>
    %15 = arith.addf %6, %14 : vector<16x32xf32>
    %c0_15 = arith.constant 0 : index
    %c0_16 = arith.constant 0 : index
    %16 = vector.load %arg8[%c0_15, %c0_16] : memref<16x96xf32, #tpu.memory_space<vmem>>, vector<16x32xf32>
    tpu.vector_store %arg8[%c0_15, %c0_16], %9 {strides = array<i32>} : memref<16x96xf32, #tpu.memory_space<vmem>>, vector<16x32xf32>,
    %c0_17 = arith.constant 0 : index
    %c32 = arith.constant 32 : index
    %17 = vector.load %arg8[%c0_17, %c32] : memref<16x96xf32, #tpu.memory_space<vmem>>, vector<16x32xf32>
    tpu.vector_store %arg8[%c0_17, %c32], %12 {strides = array<i32>} : memref<16x96xf32, #tpu.memory_space<vmem>>, vector<16x32xf32>,
    %c0_18 = arith.constant 0 : index
    %c64 = arith.constant 64 : index
    %18 = vector.load %arg8[%c0_18, %c64] : memref<16x96xf32, #tpu.memory_space<vmem>>, vector<16x32xf32>
    tpu.vector_store %arg8[%c0_18, %c64], %15 {strides = array<i32>} : memref<16x96xf32, #tpu.memory_space<vmem>>, vector<16x32xf32>,
    return
  }
  func.func @transform_0(%arg0: i32) -> (i32, i32) {
    %c0_i32 = arith.constant 0 : i32
    %c0_i32_0 = arith.constant 0 : i32
    return %arg0, %c0_i32 : i32, i32
  }
  func.func @transform_1(%arg0: i32) -> (i32, i32) {
    %c0_i32 = arith.constant 0 : i32
    %c0_i32_0 = arith.constant 0 : i32
    %c0_i32_1 = arith.constant 0 : i32
    return %c0_i32, %c0_i32_0 : i32, i32
  }
  func.func @transform_2(%arg0: i32) -> (i32, i32) {
    %c0_i32 = arith.constant 0 : i32
    %c0_i32_0 = arith.constant 0 : i32
    %c0_i32_1 = arith.constant 0 : i32
    return %c0_i32, %c0_i32_0 : i32, i32
  }
  func.func @transform_3(%arg0: i32) -> (i32, i32) {
    %c0_i32 = arith.constant 0 : i32
    %c0_i32_0 = arith.constant 0 : i32
    %c0_i32_1 = arith.constant 0 : i32
    return %c0_i32, %c0_i32_0 : i32, i32
  }
  func.func @transform_4(%arg0: i32) -> (i32, i32) {
    %c0_i32 = arith.constant 0 : i32
    %c0_i32_0 = arith.constant 0 : i32
    %c0_i32_1 = arith.constant 0 : i32
    return %c0_i32, %c0_i32_0 : i32, i32
  }
  func.func @transform_5(%arg0: i32) -> (i32, i32) {
    %c0_i32 = arith.constant 0 : i32
    %c0_i32_0 = arith.constant 0 : i32
    %c0_i32_1 = arith.constant 0 : i32
    return %c0_i32, %c0_i32_0 : i32, i32
  }
  func.func @transform_6(%arg0: i32) -> (i32, i32) {
    %c0_i32 = arith.constant 0 : i32
    %c0_i32_0 = arith.constant 0 : i32
    %c0_i32_1 = arith.constant 0 : i32
    return %c0_i32, %c0_i32_0 : i32, i32
  }
  func.func @transform_7(%arg0: i32) -> (i32, i32) {
    %c0_i32 = arith.constant 0 : i32
    %c0_i32_0 = arith.constant 0 : i32
    return %arg0, %c0_i32 : i32, i32
  }
}

</mosaic_0001>

<llo_original>
// kernel: bert_image_self_attention.2
$region0: #{bert_image_self_attention.2}
  #allocation0 [shape = 'u32[]', space=smem, size = 0x4, offset = 0x4, fixed_abs, tag = 'smem constant byte address 0x4 - core index']
  #allocation1 [shape = 'u32[144,128]{1,0:T(1,128)}', space=vmem, size = 0x12000, scoped, tag = 'internal scratch']
  %s0 = inlined_call_operand.hbm [shape: f32[16,32], index: 0, kind: input, shape index: {}]
  %s1 = inlined_call_operand.hbm [shape: f32[32,32], index: 1, kind: input, shape index: {}]
  %s2 = inlined_call_operand.hbm [shape: f32[32,32], index: 2, kind: input, shape index: {}]
  %s3 = inlined_call_operand.hbm [shape: f32[32,32], index: 3, kind: input, shape index: {}]
  %s4 = inlined_call_operand.vmem [shape: f32[1,32], index: 4, kind: input, shape index: {}]
  %s5 = inlined_call_operand.vmem [shape: f32[1,32], index: 5, kind: input, shape index: {}]
  %s6 = inlined_call_operand.vmem [shape: f32[1,32], index: 6, kind: input, shape index: {}]
  %s7 = inlined_call_operand.vmem [shape: f32[16,96], index: 7, kind: output, shape index: {}]
  %s8 = sld [smem:[#allocation0]]
  $region54: #{bert_image_self_attention.2} parent=0
    _
  %s10 = ssub.s32 1, %s8
  %s11 = scalar_select 0, %s10, %s8
  $region1: #{bert_image_self_attention.2} parent=0
    #allocation2 [shape = 'u8[8192]{0}', space=vmem, size = 0x2000, scoped, tag = 'input window, operand 0, single buffered']
    #allocation3 [shape = 's32[1]{0}', space=sflag, size = 0x4, scoped, tag = 'scoped memory for bert_image_self_attention.2']
    #allocation4 [shape = 'u8[16384]{0}', space=vmem, size = 0x4000, scoped, tag = 'input window, operand 1, single buffered']
    #allocation5 [shape = 's32[1]{0}', space=sflag, size = 0x4, scoped, tag = 'scoped memory for bert_image_self_attention.2']
    #allocation6 [shape = 'u8[16384]{0}', space=vmem, size = 0x4000, scoped, tag = 'input window, operand 2, single buffered']
    #allocation7 [shape = 'u8[16384]{0}', space=vmem, size = 0x4000, scoped, tag = 'input window, operand 3, single buffered']
    #allocation8 [shape = 's32[1]{0}', space=sflag, size = 0x4, scoped, tag = 'scoped memory for bert_image_self_attention.2']
    %12 = vsyncpa [#allocation3], 0
    %13 = vsyncpa [#allocation5], 0
    %14 = vsyncpa [#allocation8], 0
    // Predicated region
    $region2: #{bert_image_self_attention.2} parent=1 // pred_check
      _
    $region3: #{bert_image_self_attention.2} parent=1 // pred_check_branch
      %16 = sbr.rel (0) target = $region5
    $region4: #{bert_image_self_attention.2} parent=1 // pred_region
      %s18 = ssub.s32 256, 256
      %19 = vsyncadd [#allocation3], %s18
      %s20 = sshll.u32 [#allocation2], 4
      %s21 = int_to_ptr.vmem [resolvable:$true] %s20
      %26 = dma.hbm_to_vmem [thread:$0]  %s0, 256, %s21, [#allocation3], 128, 128, 8
    $region5: #{bert_image_self_attention.2} parent=1 // pred_fallthru
      _
    // Predicated region
    $region6: #{bert_image_self_attention.2} parent=1 // pred_check
      _
    $region7: #{bert_image_self_attention.2} parent=1 // pred_check_branch
      %28 = sbr.rel (0) target = $region9
    $region8: #{bert_image_self_attention.2} parent=1 // pred_region
      %s30 = ssub.s32 512, 512
      %31 = vsyncadd [#allocation5], %s30
      %s32 = sshll.u32 [#allocation4], 4
      %s33 = int_to_ptr.vmem [resolvable:$true] %s32
      %38 = dma.hbm_to_vmem [thread:$0]  %s1, 512, %s33, [#allocation5], 128, 128, 8
    $region9: #{bert_image_self_attention.2} parent=1 // pred_fallthru
      _
    // Predicated region
    $region10: #{bert_image_self_attention.2} parent=1 // pred_check
      _
    $region11: #{bert_image_self_attention.2} parent=1 // pred_check_branch
      %40 = sbr.rel (0) target = $region13
    $region12: #{bert_image_self_attention.2} parent=1 // pred_region
      %s42 = ssub.s32 512, 512
      %43 = vsyncadd [#allocation5], %s42
      %s44 = sshll.u32 [#allocation6], 4
      %s45 = int_to_ptr.vmem [resolvable:$true] %s44
      %50 = dma.hbm_to_vmem [thread:$0]  %s2, 512, %s45, [#allocation5], 128, 128, 8
    $region13: #{bert_image_self_attention.2} parent=1 // pred_fallthru
      _
    // Predicated region
    $region14: #{bert_image_self_attention.2} parent=1 // pred_check
      _
    $region15: #{bert_image_self_attention.2} parent=1 // pred_check_branch
      %52 = sbr.rel (0) target = $region17
    $region16: #{bert_image_self_attention.2} parent=1 // pred_region
      %s54 = ssub.s32 512, 512
      %55 = vsyncadd [#allocation8], %s54
      %s56 = sshll.u32 [#allocation7], 4
      %s57 = int_to_ptr.vmem [resolvable:$true] %s56
      %62 = dma.hbm_to_vmem [thread:$0]  %s3, 512, %s57, [#allocation8], 128, 128, 8
    $region17: #{bert_image_self_attention.2} parent=1 // pred_fallthru
      _
    // Predicated region
    $region18: #{bert_image_self_attention.2} parent=1 // pred_check
      _
    $region19: #{bert_image_self_attention.2} parent=1 // pred_check_branch
      %64 = sbr.rel (0) target = $region21
    $region20: #{bert_image_self_attention.2} parent=1 // pred_region
      _
    $region21: #{bert_image_self_attention.2} parent=1 // pred_fallthru
      _
    // Predicated region
    $region22: #{bert_image_self_attention.2} parent=1 // pred_check
      _
    $region23: #{bert_image_self_attention.2} parent=1 // pred_check_branch
      %66 = sbr.rel (0) target = $region25
    $region24: #{bert_image_self_attention.2} parent=1 // pred_region
      _
    $region25: #{bert_image_self_attention.2} parent=1 // pred_fallthru
      _
    // Predicated region
    $region26: #{bert_image_self_attention.2} parent=1 // pred_check
      _
    $region27: #{bert_image_self_attention.2} parent=1 // pred_check_branch
      %68 = sbr.rel (0) target = $region29
    $region28: #{bert_image_self_attention.2} parent=1 // pred_region
      _
    $region29: #{bert_image_self_attention.2} parent=1 // pred_fallthru
      _
    // Predicated region
    $region30: #{bert_image_self_attention.2} parent=1 // pred_check
      _
    $region31: #{bert_image_self_attention.2} parent=1 // pred_check_branch
      %70 = sbr.rel (0) target = $region33
    $region32: #{bert_image_self_attention.2} parent=1 // pred_region
      %71 = dma.done [#allocation3], 256
    $region33: #{bert_image_self_attention.2} parent=1 // pred_fallthru
      _
    // Predicated region
    $region34: #{bert_image_self_attention.2} parent=1 // pred_check
      _
    $region35: #{bert_image_self_attention.2} parent=1 // pred_check_branch
      %73 = sbr.rel (0) target = $region37
    $region36: #{bert_image_self_attention.2} parent=1 // pred_region
      %74 = dma.done [#allocation5], 512
    $region37: #{bert_image_self_attention.2} parent=1 // pred_fallthru
      _
    // Predicated region
    $region38: #{bert_image_self_attention.2} parent=1 // pred_check
      _
    $region39: #{bert_image_self_attention.2} parent=1 // pred_check_branch
      %76 = sbr.rel (0) target = $region41
    $region40: #{bert_image_self_attention.2} parent=1 // pred_region
      %77 = dma.done [#allocation5], 512
    $region41: #{bert_image_self_attention.2} parent=1 // pred_fallthru
      _
    // Predicated region
    $region42: #{bert_image_self_attention.2} parent=1 // pred_check
      _
    $region43: #{bert_image_self_attention.2} parent=1 // pred_check_branch
      %79 = sbr.rel (0) target = $region45
    $region44: #{bert_image_self_attention.2} parent=1 // pred_region
      %80 = dma.done [#allocation8], 512
    $region45: #{bert_image_self_attention.2} parent=1 // pred_fallthru
      _
    %v81 = vld [vmem:[#allocation2] sm:$0xff]
    %v82 = vld [vmem:[#allocation2 + $0x8] sm:$0xff]
    %v83 = vld [vmem:[#allocation4] sm:$0xff]
    %v84 = vld [vmem:[#allocation4 + $0x8] sm:$0xff]
    %v85 = vld [vmem:[#allocation4 + $0x10] sm:$0xff]
    %v86 = vld [vmem:[#allocation4 + $0x18] sm:$0xff]
    %v87 = vld [vmem:[#allocation6] sm:$0xff]
    %v88 = vld [vmem:[#allocation6 + $0x8] sm:$0xff]
    %v89 = vld [vmem:[#allocation6 + $0x10] sm:$0xff]
    %v90 = vld [vmem:[#allocation6 + $0x18] sm:$0xff]
    %v91 = vld [vmem:[#allocation7] sm:$0xff]
    %v92 = vld [vmem:[#allocation7 + $0x8] sm:$0xff]
    %v93 = vld [vmem:[#allocation7 + $0x10] sm:$0xff]
    %v94 = vld [vmem:[#allocation7 + $0x18] sm:$0xff]
    %v95 = vld [vmem:[%s4] sm:$0x1]
    %v97 = vlaneseq
    %v98 = vshrl.u32 %v97, 7
    %v99 = vsub.s32 0, %v98
    %v100 = vrot.slane %v95, %v99
    %vm102 = vcmask 261120
    %v104 = vsel %vm102, %v81, 0
    %v107 = vsel %vm102, %v82, 0
    %v110 = vsel %vm102, %v83, 0
    %v113 = vsel %vm102, %v84, 0
    %v116 = vsel %vm102, %v85, 0
    %v119 = vsel %vm102, %v86, 0
    %121 = vmatprep.subr.mxu0 0.0
    %122 = vmatpush1.xpose.msra.mxu0 0.0
    %123 = vmatprep.subr.mxu0 0.0
    %124 = vmatpush1.xpose.msra.mxu0 0.0
    %125 = vmatprep.subr.mxu0 0.0
    %126 = vmatpush1.xpose.msra.mxu0 0.0
    %127 = vmatprep.subr.mxu0 0.0
    %128 = vmatpush1.xpose.msra.mxu0 0.0
    %129 = vmatprep.subr.mxu0 0.0
    %130 = vmatpush1.xpose.msra.mxu0 0.0
    %131 = vmatprep.subr.mxu0 0.0
    %132 = vmatpush1.xpose.msra.mxu0 0.0
    %133 = vmatprep.subr.mxu0 0.0
    %134 = vmatpush1.xpose.msra.mxu0 0.0
    %135 = vmatprep.subr.mxu0 0.0
    %136 = vmatpush1.xpose.msra.mxu0 0.0
    %137 = vmatprep.subr.mxu0 0.0
    %138 = vmatpush1.xpose.msra.mxu0 0.0
    %139 = vmatprep.subr.mxu0 0.0
    %140 = vmatpush1.xpose.msra.mxu0 0.0
    %141 = vmatprep.subr.mxu0 0.0
    %142 = vmatpush1.xpose.msra.mxu0 0.0
    %143 = vmatprep.subr.mxu0 0.0
    %144 = vmatpush1.xpose.msra.mxu0 0.0
    %145 = vmatprep.subr.mxu0 0.0
    %v146 = vand.u32 %v119, 4294901760
    %147 = vmatpush1.xpose.msra.mxu0 %v146
    %148 = vmatprep.subr.mxu0 0.0
    %v149 = vand.u32 %v116, 4294901760
    %150 = vmatpush1.xpose.msra.mxu0 %v149
    %151 = vmatprep.subr.mxu0 0.0
    %v152 = vand.u32 %v113, 4294901760
    %153 = vmatpush1.xpose.msra.mxu0 %v152
    %154 = vmatprep.subr.mxu0 0.0
    %v155 = vand.u32 %v110, 4294901760
    %156 = vmatpush1.xpose.msra.mxu0 %v155
    %157 = vmatprep.subr.mxu0 0.0
    %158 = vmatpush2.xpose.msra.mxu0 0.0
    %159 = vmatprep.subr.mxu0 0.0
    %160 = vmatpush2.xpose.msra.mxu0 0.0
    %161 = vmatprep.subr.mxu0 0.0
    %162 = vmatpush2.xpose.msra.mxu0 0.0
    %163 = vmatprep.subr.mxu0 0.0
    %164 = vmatpush2.xpose.msra.mxu0 0.0
    %165 = vmatprep.subr.mxu0 0.0
    %166 = vmatpush2.xpose.msra.mxu0 0.0
    %167 = vmatprep.subr.mxu0 0.0
    %168 = vmatpush2.xpose.msra.mxu0 0.0
    %169 = vmatprep.subr.mxu0 0.0
    %170 = vmatpush2.xpose.msra.mxu0 0.0
    %171 = vmatprep.subr.mxu0 0.0
    %172 = vmatpush2.xpose.msra.mxu0 0.0
    %173 = vmatprep.subr.mxu0 0.0
    %174 = vmatpush2.xpose.msra.mxu0 0.0
    %175 = vmatprep.subr.mxu0 0.0
    %176 = vmatpush2.xpose.msra.mxu0 0.0
    %177 = vmatprep.subr.mxu0 0.0
    %178 = vmatpush2.xpose.msra.mxu0 0.0
    %179 = vmatprep.subr.mxu0 0.0
    %180 = vmatpush2.xpose.msra.mxu0 0.0
    %181 = vmatprep.subr.mxu0 0.0
    %182 = vmatpush2.xpose.msra.mxu0 0.0
    %183 = vmatprep.subr.mxu0 0.0
    %184 = vmatpush2.xpose.msra.mxu0 0.0
    %185 = vmatprep.subr.mxu0 0.0
    %186 = vmatpush2.xpose.msra.mxu0 0.0
    %187 = vmatprep.subr.mxu0 0.0
    %188 = vmatpush2.xpose.msra.mxu0 0.0
    %189 = vmatprep.mubr.f32.mxu0 0.0
    %v190 = vand.u32 %v104, 4294901760
    %v191 = vsub.f32 %v104, %v190
    %v192 = vand.u32 %v191, 4294901760
    %v193 = vsub.f32 %v191, %v192
    %v194 = vand.u32 %v193, 4294901760
    %195 = vmatmul.mubr.f32.gmra.mxu0 %v194
    %v196 = vpop.f32.mrf.mxu0
    %v197 = vadd.f32 %v100, %v196
    %v198 = vpop.f32.mrf.mxu0
    %199 = vmatprep.mubr.f32.mxu0 0.0
    %v200 = vand.u32 %v107, 4294901760
    %v201 = vsub.f32 %v107, %v200
    %v202 = vand.u32 %v201, 4294901760
    %v203 = vsub.f32 %v201, %v202
    %v204 = vand.u32 %v203, 4294901760
    %205 = vmatmul.mubr.f32.gmra.mxu0 %v204
    %v206 = vpop.f32.mrf.mxu0
    %v207 = vadd.f32 %v100, %v206
    %v208 = vpop.f32.mrf.mxu0
    %209 = vdwg.mxu0
    %210 = vmatprep.subr.mxu0 0.0
    %211 = vmatpush1.xpose.msra.mxu0 0.0
    %212 = vmatprep.subr.mxu0 0.0
    %213 = vmatpush1.xpose.msra.mxu0 0.0
    %214 = vmatprep.subr.mxu0 0.0
    %215 = vmatpush1.xpose.msra.mxu0 0.0
    %216 = vmatprep.subr.mxu0 0.0
    %217 = vmatpush1.xpose.msra.mxu0 0.0
    %218 = vmatprep.subr.mxu0 0.0
    %219 = vmatpush1.xpose.msra.mxu0 0.0
    %220 = vmatprep.subr.mxu0 0.0
    %221 = vmatpush1.xpose.msra.mxu0 0.0
    %222 = vmatprep.subr.mxu0 0.0
    %223 = vmatpush1.xpose.msra.mxu0 0.0
    %224 = vmatprep.subr.mxu0 0.0
    %225 = vmatpush1.xpose.msra.mxu0 0.0
    %226 = vmatprep.subr.mxu0 0.0
    %227 = vmatpush1.xpose.msra.mxu0 0.0
    %228 = vmatprep.subr.mxu0 0.0
    %229 = vmatpush1.xpose.msra.mxu0 0.0
    %230 = vmatprep.subr.mxu0 0.0
    %231 = vmatpush1.xpose.msra.mxu0 0.0
    %232 = vmatprep.subr.mxu0 0.0
    %233 = vmatpush1.xpose.msra.mxu0 0.0
    %234 = vmatprep.subr.mxu0 0.0
    %v235 = vand.u32 %v119, 4294901760
    %v236 = vsub.f32 %v119, %v235
    %v237 = vand.u32 %v236, 4294901760
    %v238 = vsub.f32 %v236, %v237
    %v239 = vand.u32 %v238, 4294901760
    %240 = vmatpush1.xpose.msra.mxu0 %v239
    %241 = vmatprep.subr.mxu0 0.0
    %v242 = vand.u32 %v116, 4294901760
    %v243 = vsub.f32 %v116, %v242
    %v244 = vand.u32 %v243, 4294901760
    %v245 = vsub.f32 %v243, %v244
    %v246 = vand.u32 %v245, 4294901760
    %247 = vmatpush1.xpose.msra.mxu0 %v246
    %248 = vmatprep.subr.mxu0 0.0
    %v249 = vand.u32 %v113, 4294901760
    %v250 = vsub.f32 %v113, %v249
    %v251 = vand.u32 %v250, 4294901760
    %v252 = vsub.f32 %v250, %v251
    %v253 = vand.u32 %v252, 4294901760
    %254 = vmatpush1.xpose.msra.mxu0 %v253
    %255 = vmatprep.subr.mxu0 0.0
    %v256 = vand.u32 %v110, 4294901760
    %v257 = vsub.f32 %v110, %v256
    %v258 = vand.u32 %v257, 4294901760
    %v259 = vsub.f32 %v257, %v258
    %v260 = vand.u32 %v259, 4294901760
    %261 = vmatpush1.xpose.msra.mxu0 %v260
    %262 = vmatprep.subr.mxu0 0.0
    %263 = vmatpush2.xpose.msra.mxu0 0.0
    %264 = vmatprep.subr.mxu0 0.0
    %265 = vmatpush2.xpose.msra.mxu0 0.0
    %266 = vmatprep.subr.mxu0 0.0
    %267 = vmatpush2.xpose.msra.mxu0 0.0
    %268 = vmatprep.subr.mxu0 0.0
    %269 = vmatpush2.xpose.msra.mxu0 0.0
    %270 = vmatprep.subr.mxu0 0.0
    %271 = vmatpush2.xpose.msra.mxu0 0.0
    %272 = vmatprep.subr.mxu0 0.0
    %273 = vmatpush2.xpose.msra.mxu0 0.0
    %274 = vmatprep.subr.mxu0 0.0
    %275 = vmatpush2.xpose.msra.mxu0 0.0
    %276 = vmatprep.subr.mxu0 0.0
    %277 = vmatpush2.xpose.msra.mxu0 0.0
    %278 = vmatprep.subr.mxu0 0.0
    %279 = vmatpush2.xpose.msra.mxu0 0.0
    %280 = vmatprep.subr.mxu0 0.0
    %281 = vmatpush2.xpose.msra.mxu0 0.0
    %282 = vmatprep.subr.mxu0 0.0
    %283 = vmatpush2.xpose.msra.mxu0 0.0
    %284 = vmatprep.subr.mxu0 0.0
    %285 = vmatpush2.xpose.msra.mxu0 0.0
    %286 = vmatprep.subr.mxu0 0.0
    %287 = vmatpush2.xpose.msra.mxu0 0.0
    %288 = vmatprep.subr.mxu0 0.0
    %289 = vmatpush2.xpose.msra.mxu0 0.0
    %290 = vmatprep.subr.mxu0 0.0
    %291 = vmatpush2.xpose.msra.mxu0 0.0
    %292 = vmatprep.subr.mxu0 0.0
    %293 = vmatpush2.xpose.msra.mxu0 0.0
    %294 = vmatprep.mubr.f32.mxu0 0.0
    %v295 = vand.u32 %v104, 4294901760
    %296 = vmatmul.mubr.f32.gmra.mxu0 %v295
    %v297 = vpop.f32.mrf.mxu0
    %v298 = vadd.f32 %v197, %v297
    %v299 = vpop.f32.mrf.mxu0
    %300 = vmatprep.mubr.f32.mxu0 0.0
    %v301 = vand.u32 %v107, 4294901760
    %302 = vmatmul.mubr.f32.gmra.mxu0 %v301
    %v303 = vpop.f32.mrf.mxu0
    %v304 = vadd.f32 %v207, %v303
    %v305 = vpop.f32.mrf.mxu0
    %306 = vdwg.mxu0
    %307 = vmatprep.subr.mxu0 0.0
    %308 = vmatpush1.xpose.msra.mxu0 0.0
    %309 = vmatprep.subr.mxu0 0.0
    %310 = vmatpush1.xpose.msra.mxu0 0.0
    %311 = vmatprep.subr.mxu0 0.0
    %312 = vmatpush1.xpose.msra.mxu0 0.0
    %313 = vmatprep.subr.mxu0 0.0
    %314 = vmatpush1.xpose.msra.mxu0 0.0
    %315 = vmatprep.subr.mxu0 0.0
    %316 = vmatpush1.xpose.msra.mxu0 0.0
    %317 = vmatprep.subr.mxu0 0.0
    %318 = vmatpush1.xpose.msra.mxu0 0.0
    %319 = vmatprep.subr.mxu0 0.0
    %320 = vmatpush1.xpose.msra.mxu0 0.0
    %321 = vmatprep.subr.mxu0 0.0
    %322 = vmatpush1.xpose.msra.mxu0 0.0
    %323 = vmatprep.subr.mxu0 0.0
    %324 = vmatpush1.xpose.msra.mxu0 0.0
    %325 = vmatprep.subr.mxu0 0.0
    %326 = vmatpush1.xpose.msra.mxu0 0.0
    %327 = vmatprep.subr.mxu0 0.0
    %328 = vmatpush1.xpose.msra.mxu0 0.0
    %329 = vmatprep.subr.mxu0 0.0
    %330 = vmatpush1.xpose.msra.mxu0 0.0
    %331 = vmatprep.subr.mxu0 0.0
    %v332 = vand.u32 %v119, 4294901760
    %v333 = vsub.f32 %v119, %v332
    %334 = vmatpush1.xpose.msra.mxu0 %v333
    %335 = vmatprep.subr.mxu0 0.0
    %v336 = vand.u32 %v116, 4294901760
    %v337 = vsub.f32 %v116, %v336
    %338 = vmatpush1.xpose.msra.mxu0 %v337
    %339 = vmatprep.subr.mxu0 0.0
    %v340 = vand.u32 %v113, 4294901760
    %v341 = vsub.f32 %v113, %v340
    %342 = vmatpush1.xpose.msra.mxu0 %v341
    %343 = vmatprep.subr.mxu0 0.0
    %v344 = vand.u32 %v110, 4294901760
    %v345 = vsub.f32 %v110, %v344
    %346 = vmatpush1.xpose.msra.mxu0 %v345
    %347 = vmatprep.subr.mxu0 0.0
    %348 = vmatpush2.xpose.msra.mxu0 0.0
    %349 = vmatprep.subr.mxu0 0.0
    %350 = vmatpush2.xpose.msra.mxu0 0.0
    %351 = vmatprep.subr.mxu0 0.0
    %352 = vmatpush2.xpose.msra.mxu0 0.0
    %353 = vmatprep.subr.mxu0 0.0
    %354 = vmatpush2.xpose.msra.mxu0 0.0
    %355 = vmatprep.subr.mxu0 0.0
    %356 = vmatpush2.xpose.msra.mxu0 0.0
    %357 = vmatprep.subr.mxu0 0.0
    %358 = vmatpush2.xpose.msra.mxu0 0.0
    %359 = vmatprep.subr.mxu0 0.0
    %360 = vmatpush2.xpose.msra.mxu0 0.0
    %361 = vmatprep.subr.mxu0 0.0
    %362 = vmatpush2.xpose.msra.mxu0 0.0
    %363 = vmatprep.subr.mxu0 0.0
    %364 = vmatpush2.xpose.msra.mxu0 0.0
    %365 = vmatprep.subr.mxu0 0.0
    %366 = vmatpush2.xpose.msra.mxu0 0.0
    %367 = vmatprep.subr.mxu0 0.0
    %368 = vmatpush2.xpose.msra.mxu0 0.0
    %369 = vmatprep.subr.mxu0 0.0
    %370 = vmatpush2.xpose.msra.mxu0 0.0
    %371 = vmatprep.subr.mxu0 0.0
    %372 = vmatpush2.xpose.msra.mxu0 0.0
    %373 = vmatprep.subr.mxu0 0.0
    %374 = vmatpush2.xpose.msra.mxu0 0.0
    %375 = vmatprep.subr.mxu0 0.0
    %376 = vmatpush2.xpose.msra.mxu0 0.0
    %377 = vmatprep.subr.mxu0 0.0
    %378 = vmatpush2.xpose.msra.mxu0 0.0
    %379 = vmatprep.mubr.f32.mxu0 0.0
    %v380 = vand.u32 %v104, 4294901760
    %v381 = vsub.f32 %v104, %v380
    %382 = vmatmul.mubr.f32.gmra.mxu0 %v381
    %v383 = vpop.f32.mrf.mxu0
    %v384 = vadd.f32 %v298, %v383
    %v385 = vpop.f32.mrf.mxu0
    %386 = vmatprep.mubr.f32.mxu0 0.0
    %v387 = vand.u32 %v107, 4294901760
    %v388 = vsub.f32 %v107, %v387
    %389 = vmatmul.mubr.f32.gmra.mxu0 %v388
    %v390 = vpop.f32.mrf.mxu0
    %v391 = vadd.f32 %v304, %v390
    %v392 = vpop.f32.mrf.mxu0
    %393 = vdwg.mxu0
    %394 = vmatprep.subr.mxu0 0.0
    %395 = vmatpush1.xpose.msra.mxu0 0.0
    %396 = vmatprep.subr.mxu0 0.0
    %397 = vmatpush1.xpose.msra.mxu0 0.0
    %398 = vmatprep.subr.mxu0 0.0
    %399 = vmatpush1.xpose.msra.mxu0 0.0
    %400 = vmatprep.subr.mxu0 0.0
    %401 = vmatpush1.xpose.msra.mxu0 0.0
    %402 = vmatprep.subr.mxu0 0.0
    %403 = vmatpush1.xpose.msra.mxu0 0.0
    %404 = vmatprep.subr.mxu0 0.0
    %405 = vmatpush1.xpose.msra.mxu0 0.0
    %406 = vmatprep.subr.mxu0 0.0
    %407 = vmatpush1.xpose.msra.mxu0 0.0
    %408 = vmatprep.subr.mxu0 0.0
    %409 = vmatpush1.xpose.msra.mxu0 0.0
    %410 = vmatprep.subr.mxu0 0.0
    %411 = vmatpush1.xpose.msra.mxu0 0.0
    %412 = vmatprep.subr.mxu0 0.0
    %413 = vmatpush1.xpose.msra.mxu0 0.0
    %414 = vmatprep.subr.mxu0 0.0
    %415 = vmatpush1.xpose.msra.mxu0 0.0
    %416 = vmatprep.subr.mxu0 0.0
    %417 = vmatpush1.xpose.msra.mxu0 0.0
    %418 = vmatprep.subr.mxu0 0.0
    %v419 = vand.u32 %v119, 4294901760
    %420 = vmatpush1.xpose.msra.mxu0 %v419
    %421 = vmatprep.subr.mxu0 0.0
    %v422 = vand.u32 %v116, 4294901760
    %423 = vmatpush1.xpose.msra.mxu0 %v422
    %424 = vmatprep.subr.mxu0 0.0
    %v425 = vand.u32 %v113, 4294901760
    %426 = vmatpush1.xpose.msra.mxu0 %v425
    %427 = vmatprep.subr.mxu0 0.0
    %v428 = vand.u32 %v110, 4294901760
    %429 = vmatpush1.xpose.msra.mxu0 %v428
    %430 = vmatprep.subr.mxu0 0.0
    %431 = vmatpush2.xpose.msra.mxu0 0.0
    %432 = vmatprep.subr.mxu0 0.0
    %433 = vmatpush2.xpose.msra.mxu0 0.0
    %434 = vmatprep.subr.mxu0 0.0
    %435 = vmatpush2.xpose.msra.mxu0 0.0
    %436 = vmatprep.subr.mxu0 0.0
    %437 = vmatpush2.xpose.msra.mxu0 0.0
    %438 = vmatprep.subr.mxu0 0.0
    %439 = vmatpush2.xpose.msra.mxu0 0.0
    %440 = vmatprep.subr.mxu0 0.0
    %441 = vmatpush2.xpose.msra.mxu0 0.0
    %442 = vmatprep.subr.mxu0 0.0
    %443 = vmatpush2.xpose.msra.mxu0 0.0
    %444 = vmatprep.subr.mxu0 0.0
    %445 = vmatpush2.xpose.msra.mxu0 0.0
    %446 = vmatprep.subr.mxu0 0.0
    %447 = vmatpush2.xpose.msra.mxu0 0.0
    %448 = vmatprep.subr.mxu0 0.0
    %449 = vmatpush2.xpose.msra.mxu0 0.0
    %450 = vmatprep.subr.mxu0 0.0
    %451 = vmatpush2.xpose.msra.mxu0 0.0
    %452 = vmatprep.subr.mxu0 0.0
    %453 = vmatpush2.xpose.msra.mxu0 0.0
    %454 = vmatprep.subr.mxu0 0.0
    %455 = vmatpush2.xpose.msra.mxu0 0.0
    %456 = vmatprep.subr.mxu0 0.0
    %457 = vmatpush2.xpose.msra.mxu0 0.0
    %458 = vmatprep.subr.mxu0 0.0
    %459 = vmatpush2.xpose.msra.mxu0 0.0
    %460 = vmatprep.subr.mxu0 0.0
    %461 = vmatpush2.xpose.msra.mxu0 0.0
    %462 = vmatprep.mubr.f32.mxu0 0.0
    %v463 = vand.u32 %v104, 4294901760
    %v464 = vsub.f32 %v104, %v463
    %v465 = vand.u32 %v464, 4294901760
    %466 = vmatmul.mubr.f32.gmra.mxu0 %v465
    %v467 = vpop.f32.mrf.mxu0
    %v468 = vadd.f32 %v384, %v467
    %v469 = vpop.f32.mrf.mxu0
    %470 = vmatprep.mubr.f32.mxu0 0.0
    %v471 = vand.u32 %v107, 4294901760
    %v472 = vsub.f32 %v107, %v471
    %v473 = vand.u32 %v472, 4294901760
    %474 = vmatmul.mubr.f32.gmra.mxu0 %v473
    %v475 = vpop.f32.mrf.mxu0
    %v476 = vadd.f32 %v391, %v475
    %v477 = vpop.f32.mrf.mxu0
    %478 = vdwg.mxu0
    %479 = vmatprep.subr.mxu0 0.0
    %480 = vmatpush1.xpose.msra.mxu0 0.0
    %481 = vmatprep.subr.mxu0 0.0
    %482 = vmatpush1.xpose.msra.mxu0 0.0
    %483 = vmatprep.subr.mxu0 0.0
    %484 = vmatpush1.xpose.msra.mxu0 0.0
    %485 = vmatprep.subr.mxu0 0.0
    %486 = vmatpush1.xpose.msra.mxu0 0.0
    %487 = vmatprep.subr.mxu0 0.0
    %488 = vmatpush1.xpose.msra.mxu0 0.0
    %489 = vmatprep.subr.mxu0 0.0
    %490 = vmatpush1.xpose.msra.mxu0 0.0
    %491 = vmatprep.subr.mxu0 0.0
    %492 = vmatpush1.xpose.msra.mxu0 0.0
    %493 = vmatprep.subr.mxu0 0.0
    %494 = vmatpush1.xpose.msra.mxu0 0.0
    %495 = vmatprep.subr.mxu0 0.0
    %496 = vmatpush1.xpose.msra.mxu0 0.0
    %497 = vmatprep.subr.mxu0 0.0
    %498 = vmatpush1.xpose.msra.mxu0 0.0
    %499 = vmatprep.subr.mxu0 0.0
    %500 = vmatpush1.xpose.msra.mxu0 0.0
    %501 = vmatprep.subr.mxu0 0.0
    %502 = vmatpush1.xpose.msra.mxu0 0.0
    %503 = vmatprep.subr.mxu0 0.0
    %v504 = vand.u32 %v119, 4294901760
    %v505 = vsub.f32 %v119, %v504
    %v506 = vand.u32 %v505, 4294901760
    %507 = vmatpush1.xpose.msra.mxu0 %v506
    %508 = vmatprep.subr.mxu0 0.0
    %v509 = vand.u32 %v116, 4294901760
    %v510 = vsub.f32 %v116, %v509
    %v511 = vand.u32 %v510, 4294901760
    %512 = vmatpush1.xpose.msra.mxu0 %v511
    %513 = vmatprep.subr.mxu0 0.0
    %v514 = vand.u32 %v113, 4294901760
    %v515 = vsub.f32 %v113, %v514
    %v516 = vand.u32 %v515, 4294901760
    %517 = vmatpush1.xpose.msra.mxu0 %v516
    %518 = vmatprep.subr.mxu0 0.0
    %v519 = vand.u32 %v110, 4294901760
    %v520 = vsub.f32 %v110, %v519
    %v521 = vand.u32 %v520, 4294901760
    %522 = vmatpush1.xpose.msra.mxu0 %v521
    %523 = vmatprep.subr.mxu0 0.0
    %524 = vmatpush2.xpose.msra.mxu0 0.0
    %525 = vmatprep.subr.mxu0 0.0
    %526 = vmatpush2.xpose.msra.mxu0 0.0
    %527 = vmatprep.subr.mxu0 0.0
    %528 = vmatpush2.xpose.msra.mxu0 0.0
    %529 = vmatprep.subr.mxu0 0.0
    %530 = vmatpush2.xpose.msra.mxu0 0.0
    %531 = vmatprep.subr.mxu0 0.0
    %532 = vmatpush2.xpose.msra.mxu0 0.0
    %533 = vmatprep.subr.mxu0 0.0
    %534 = vmatpush2.xpose.msra.mxu0 0.0
    %535 = vmatprep.subr.mxu0 0.0
    %536 = vmatpush2.xpose.msra.mxu0 0.0
    %537 = vmatprep.subr.mxu0 0.0
    %538 = vmatpush2.xpose.msra.mxu0 0.0
    %539 = vmatprep.subr.mxu0 0.0
    %540 = vmatpush2.xpose.msra.mxu0 0.0
    %541 = vmatprep.subr.mxu0 0.0
    %542 = vmatpush2.xpose.msra.mxu0 0.0
    %543 = vmatprep.subr.mxu0 0.0
    %544 = vmatpush2.xpose.msra.mxu0 0.0
    %545 = vmatprep.subr.mxu0 0.0
    %546 = vmatpush2.xpose.msra.mxu0 0.0
    %547 = vmatprep.subr.mxu0 0.0
    %548 = vmatpush2.xpose.msra.mxu0 0.0
    %549 = vmatprep.subr.mxu0 0.0
    %550 = vmatpush2.xpose.msra.mxu0 0.0
    %551 = vmatprep.subr.mxu0 0.0
    %552 = vmatpush2.xpose.msra.mxu0 0.0
    %553 = vmatprep.subr.mxu0 0.0
    %554 = vmatpush2.xpose.msra.mxu0 0.0
    %555 = vmatprep.mubr.f32.mxu0 0.0
    %v556 = vand.u32 %v104, 4294901760
    %557 = vmatmul.mubr.f32.gmra.mxu0 %v556
    %v558 = vpop.f32.mrf.mxu0
    %v559 = vadd.f32 %v468, %v558
    %v560 = vpop.f32.mrf.mxu0
    %561 = vmatprep.mubr.f32.mxu0 0.0
    %v562 = vand.u32 %v107, 4294901760
    %563 = vmatmul.mubr.f32.gmra.mxu0 %v562
    %v564 = vpop.f32.mrf.mxu0
    %v565 = vadd.f32 %v476, %v564
    %v566 = vpop.f32.mrf.mxu0
    %567 = vdwg.mxu0
    %568 = vmatprep.subr.mxu0 0.0
    %569 = vmatpush1.xpose.msra.mxu0 0.0
    %570 = vmatprep.subr.mxu0 0.0
    %571 = vmatpush1.xpose.msra.mxu0 0.0
    %572 = vmatprep.subr.mxu0 0.0
    %573 = vmatpush1.xpose.msra.mxu0 0.0
    %574 = vmatprep.subr.mxu0 0.0
    %575 = vmatpush1.xpose.msra.mxu0 0.0
    %576 = vmatprep.subr.mxu0 0.0
    %577 = vmatpush1.xpose.msra.mxu0 0.0
    %578 = vmatprep.subr.mxu0 0.0
    %579 = vmatpush1.xpose.msra.mxu0 0.0
    %580 = vmatprep.subr.mxu0 0.0
    %581 = vmatpush1.xpose.msra.mxu0 0.0
    %582 = vmatprep.subr.mxu0 0.0
    %583 = vmatpush1.xpose.msra.mxu0 0.0
    %584 = vmatprep.subr.mxu0 0.0
    %585 = vmatpush1.xpose.msra.mxu0 0.0
    %586 = vmatprep.subr.mxu0 0.0
    %587 = vmatpush1.xpose.msra.mxu0 0.0
    %588 = vmatprep.subr.mxu0 0.0
    %589 = vmatpush1.xpose.msra.mxu0 0.0
    %590 = vmatprep.subr.mxu0 0.0
    %591 = vmatpush1.xpose.msra.mxu0 0.0
    %592 = vmatprep.subr.mxu0 0.0
    %v593 = vand.u32 %v119, 4294901760
    %594 = vmatpush1.xpose.msra.mxu0 %v593
    %595 = vmatprep.subr.mxu0 0.0
    %v596 = vand.u32 %v116, 4294901760
    %597 = vmatpush1.xpose.msra.mxu0 %v596
    %598 = vmatprep.subr.mxu0 0.0
    %v599 = vand.u32 %v113, 4294901760
    %600 = vmatpush1.xpose.msra.mxu0 %v599
    %601 = vmatprep.subr.mxu0 0.0
    %v602 = vand.u32 %v110, 4294901760
    %603 = vmatpush1.xpose.msra.mxu0 %v602
    %604 = vmatprep.subr.mxu0 0.0
    %605 = vmatpush2.xpose.msra.mxu0 0.0
    %606 = vmatprep.subr.mxu0 0.0
    %607 = vmatpush2.xpose.msra.mxu0 0.0
    %608 = vmatprep.subr.mxu0 0.0
    %609 = vmatpush2.xpose.msra.mxu0 0.0
    %610 = vmatprep.subr.mxu0 0.0
    %611 = vmatpush2.xpose.msra.mxu0 0.0
    %612 = vmatprep.subr.mxu0 0.0
    %613 = vmatpush2.xpose.msra.mxu0 0.0
    %614 = vmatprep.subr.mxu0 0.0
    %615 = vmatpush2.xpose.msra.mxu0 0.0
    %616 = vmatprep.subr.mxu0 0.0
    %617 = vmatpush2.xpose.msra.mxu0 0.0
    %618 = vmatprep.subr.mxu0 0.0
    %619 = vmatpush2.xpose.msra.mxu0 0.0
    %620 = vmatprep.subr.mxu0 0.0
    %621 = vmatpush2.xpose.msra.mxu0 0.0
    %622 = vmatprep.subr.mxu0 0.0
    %623 = vmatpush2.xpose.msra.mxu0 0.0
    %624 = vmatprep.subr.mxu0 0.0
    %625 = vmatpush2.xpose.msra.mxu0 0.0
    %626 = vmatprep.subr.mxu0 0.0
    %627 = vmatpush2.xpose.msra.mxu0 0.0
    %628 = vmatprep.subr.mxu0 0.0
    %629 = vmatpush2.xpose.msra.mxu0 0.0
    %630 = vmatprep.subr.mxu0 0.0
    %631 = vmatpush2.xpose.msra.mxu0 0.0
    %632 = vmatprep.subr.mxu0 0.0
    %633 = vmatpush2.xpose.msra.mxu0 0.0
    %634 = vmatprep.subr.mxu0 0.0
    %635 = vmatpush2.xpose.msra.mxu0 0.0
    %636 = vmatprep.mubr.f32.mxu0 0.0
    %v637 = vand.u32 %v104, 4294901760
    %638 = vmatmul.mubr.f32.gmra.mxu0 %v637
    %v639 = vpop.f32.mrf.mxu0
    %v640 = vadd.f32 %v559, %v639
    %v641 = vpop.f32.mrf.mxu0
    %642 = vmatprep.mubr.f32.mxu0 0.0
    %v643 = vand.u32 %v107, 4294901760
    %644 = vmatmul.mubr.f32.gmra.mxu0 %v643
    %v645 = vpop.f32.mrf.mxu0
    %v646 = vadd.f32 %v565, %v645
    %v647 = vpop.f32.mrf.mxu0
    %648 = vdwg.mxu0
    %v649 = vld [vmem:[%s5] sm:$0x1]
    %v651 = vlaneseq
    %v652 = vshrl.u32 %v651, 7
    %v653 = vsub.s32 0, %v652
    %v654 = vrot.slane %v649, %v653
    %v657 = vsel %vm102, %v87, 0
    %v660 = vsel %vm102, %v88, 0
    %v663 = vsel %vm102, %v89, 0
    %v666 = vsel %vm102, %v90, 0
    %668 = vmatprep.subr.mxu0 0.0
    %669 = vmatpush1.xpose.msra.mxu0 0.0
    %670 = vmatprep.subr.mxu0 0.0
    %671 = vmatpush1.xpose.msra.mxu0 0.0
    %672 = vmatprep.subr.mxu0 0.0
    %673 = vmatpush1.xpose.msra.mxu0 0.0
    %674 = vmatprep.subr.mxu0 0.0
    %675 = vmatpush1.xpose.msra.mxu0 0.0
    %676 = vmatprep.subr.mxu0 0.0
    %677 = vmatpush1.xpose.msra.mxu0 0.0
    %678 = vmatprep.subr.mxu0 0.0
    %679 = vmatpush1.xpose.msra.mxu0 0.0
    %680 = vmatprep.subr.mxu0 0.0
    %681 = vmatpush1.xpose.msra.mxu0 0.0
    %682 = vmatprep.subr.mxu0 0.0
    %683 = vmatpush1.xpose.msra.mxu0 0.0
    %684 = vmatprep.subr.mxu0 0.0
    %685 = vmatpush1.xpose.msra.mxu0 0.0
    %686 = vmatprep.subr.mxu0 0.0
    %687 = vmatpush1.xpose.msra.mxu0 0.0
    %688 = vmatprep.subr.mxu0 0.0
    %689 = vmatpush1.xpose.msra.mxu0 0.0
    %690 = vmatprep.subr.mxu0 0.0
    %691 = vmatpush1.xpose.msra.mxu0 0.0
    %692 = vmatprep.subr.mxu0 0.0
    %v693 = vand.u32 %v666, 4294901760
    %694 = vmatpush1.xpose.msra.mxu0 %v693
    %695 = vmatprep.subr.mxu0 0.0
    %v696 = vand.u32 %v663, 4294901760
    %697 = vmatpush1.xpose.msra.mxu0 %v696
    %698 = vmatprep.subr.mxu0 0.0
    %v699 = vand.u32 %v660, 4294901760
    %700 = vmatpush1.xpose.msra.mxu0 %v699
    %701 = vmatprep.subr.mxu0 0.0
    %v702 = vand.u32 %v657, 4294901760
    %703 = vmatpush1.xpose.msra.mxu0 %v702
    %704 = vmatprep.subr.mxu0 0.0
    %705 = vmatpush2.xpose.msra.mxu0 0.0
    %706 = vmatprep.subr.mxu0 0.0
    %707 = vmatpush2.xpose.msra.mxu0 0.0
    %708 = vmatprep.subr.mxu0 0.0
    %709 = vmatpush2.xpose.msra.mxu0 0.0
    %710 = vmatprep.subr.mxu0 0.0
    %711 = vmatpush2.xpose.msra.mxu0 0.0
    %712 = vmatprep.subr.mxu0 0.0
    %713 = vmatpush2.xpose.msra.mxu0 0.0
    %714 = vmatprep.subr.mxu0 0.0
    %715 = vmatpush2.xpose.msra.mxu0 0.0
    %716 = vmatprep.subr.mxu0 0.0
    %717 = vmatpush2.xpose.msra.mxu0 0.0
    %718 = vmatprep.subr.mxu0 0.0
    %719 = vmatpush2.xpose.msra.mxu0 0.0
    %720 = vmatprep.subr.mxu0 0.0
    %721 = vmatpush2.xpose.msra.mxu0 0.0
    %722 = vmatprep.subr.mxu0 0.0
    %723 = vmatpush2.xpose.msra.mxu0 0.0
    %724 = vmatprep.subr.mxu0 0.0
    %725 = vmatpush2.xpose.msra.mxu0 0.0
    %726 = vmatprep.subr.mxu0 0.0
    %727 = vmatpush2.xpose.msra.mxu0 0.0
    %728 = vmatprep.subr.mxu0 0.0
    %729 = vmatpush2.xpose.msra.mxu0 0.0
    %730 = vmatprep.subr.mxu0 0.0
    %731 = vmatpush2.xpose.msra.mxu0 0.0
    %732 = vmatprep.subr.mxu0 0.0
    %733 = vmatpush2.xpose.msra.mxu0 0.0
    %734 = vmatprep.subr.mxu0 0.0
    %735 = vmatpush2.xpose.msra.mxu0 0.0
    %736 = vmatprep.mubr.f32.mxu0 0.0
    %v737 = vand.u32 %v104, 4294901760
    %v738 = vsub.f32 %v104, %v737
    %v739 = vand.u32 %v738, 4294901760
    %v740 = vsub.f32 %v738, %v739
    %v741 = vand.u32 %v740, 4294901760
    %742 = vmatmul.mubr.f32.gmra.mxu0 %v741
    %v743 = vpop.f32.mrf.mxu0
    %v744 = vadd.f32 %v654, %v743
    %v745 = vpop.f32.mrf.mxu0
    %746 = vmatprep.mubr.f32.mxu0 0.0
    %v747 = vand.u32 %v107, 4294901760
    %v748 = vsub.f32 %v107, %v747
    %v749 = vand.u32 %v748, 4294901760
    %v750 = vsub.f32 %v748, %v749
    %v751 = vand.u32 %v750, 4294901760
    %752 = vmatmul.mubr.f32.gmra.mxu0 %v751
    %v753 = vpop.f32.mrf.mxu0
    %v754 = vadd.f32 %v654, %v753
    %v755 = vpop.f32.mrf.mxu0
    %756 = vdwg.mxu0
    %757 = vmatprep.subr.mxu0 0.0
    %758 = vmatpush1.xpose.msra.mxu0 0.0
    %759 = vmatprep.subr.mxu0 0.0
    %760 = vmatpush1.xpose.msra.mxu0 0.0
    %761 = vmatprep.subr.mxu0 0.0
    %762 = vmatpush1.xpose.msra.mxu0 0.0
    %763 = vmatprep.subr.mxu0 0.0
    %764 = vmatpush1.xpose.msra.mxu0 0.0
    %765 = vmatprep.subr.mxu0 0.0
    %766 = vmatpush1.xpose.msra.mxu0 0.0
    %767 = vmatprep.subr.mxu0 0.0
    %768 = vmatpush1.xpose.msra.mxu0 0.0
    %769 = vmatprep.subr.mxu0 0.0
    %770 = vmatpush1.xpose.msra.mxu0 0.0
    %771 = vmatprep.subr.mxu0 0.0
    %772 = vmatpush1.xpose.msra.mxu0 0.0
    %773 = vmatprep.subr.mxu0 0.0
    %774 = vmatpush1.xpose.msra.mxu0 0.0
    %775 = vmatprep.subr.mxu0 0.0
    %776 = vmatpush1.xpose.msra.mxu0 0.0
    %777 = vmatprep.subr.mxu0 0.0
    %778 = vmatpush1.xpose.msra.mxu0 0.0
    %779 = vmatprep.subr.mxu0 0.0
    %780 = vmatpush1.xpose.msra.mxu0 0.0
    %781 = vmatprep.subr.mxu0 0.0
    %v782 = vand.u32 %v666, 4294901760
    %v783 = vsub.f32 %v666, %v782
    %v784 = vand.u32 %v783, 4294901760
    %v785 = vsub.f32 %v783, %v784
    %v786 = vand.u32 %v785, 4294901760
    %787 = vmatpush1.xpose.msra.mxu0 %v786
    %788 = vmatprep.subr.mxu0 0.0
    %v789 = vand.u32 %v663, 4294901760
    %v790 = vsub.f32 %v663, %v789
    %v791 = vand.u32 %v790, 4294901760
    %v792 = vsub.f32 %v790, %v791
    %v793 = vand.u32 %v792, 4294901760
    %794 = vmatpush1.xpose.msra.mxu0 %v793
    %795 = vmatprep.subr.mxu0 0.0
    %v796 = vand.u32 %v660, 4294901760
    %v797 = vsub.f32 %v660, %v796
    %v798 = vand.u32 %v797, 4294901760
    %v799 = vsub.f32 %v797, %v798
    %v800 = vand.u32 %v799, 4294901760
    %801 = vmatpush1.xpose.msra.mxu0 %v800
    %802 = vmatprep.subr.mxu0 0.0
    %v803 = vand.u32 %v657, 4294901760
    %v804 = vsub.f32 %v657, %v803
    %v805 = vand.u32 %v804, 4294901760
    %v806 = vsub.f32 %v804, %v805
    %v807 = vand.u32 %v806, 4294901760
    %808 = vmatpush1.xpose.msra.mxu0 %v807
    %809 = vmatprep.subr.mxu0 0.0
    %810 = vmatpush2.xpose.msra.mxu0 0.0
    %811 = vmatprep.subr.mxu0 0.0
    %812 = vmatpush2.xpose.msra.mxu0 0.0
    %813 = vmatprep.subr.mxu0 0.0
    %814 = vmatpush2.xpose.msra.mxu0 0.0
    %815 = vmatprep.subr.mxu0 0.0
    %816 = vmatpush2.xpose.msra.mxu0 0.0
    %817 = vmatprep.subr.mxu0 0.0
    %818 = vmatpush2.xpose.msra.mxu0 0.0
    %819 = vmatprep.subr.mxu0 0.0
    %820 = vmatpush2.xpose.msra.mxu0 0.0
    %821 = vmatprep.subr.mxu0 0.0
    %822 = vmatpush2.xpose.msra.mxu0 0.0
    %823 = vmatprep.subr.mxu0 0.0
    %824 = vmatpush2.xpose.msra.mxu0 0.0
    %825 = vmatprep.subr.mxu0 0.0
    %826 = vmatpush2.xpose.msra.mxu0 0.0
    %827 = vmatprep.subr.mxu0 0.0
    %828 = vmatpush2.xpose.msra.mxu0 0.0
    %829 = vmatprep.subr.mxu0 0.0
    %830 = vmatpush2.xpose.msra.mxu0 0.0
    %831 = vmatprep.subr.mxu0 0.0
    %832 = vmatpush2.xpose.msra.mxu0 0.0
    %833 = vmatprep.subr.mxu0 0.0
    %834 = vmatpush2.xpose.msra.mxu0 0.0
    %835 = vmatprep.subr.mxu0 0.0
    %836 = vmatpush2.xpose.msra.mxu0 0.0
    %837 = vmatprep.subr.mxu0 0.0
    %838 = vmatpush2.xpose.msra.mxu0 0.0
    %839 = vmatprep.subr.mxu0 0.0
    %840 = vmatpush2.xpose.msra.mxu0 0.0
    %841 = vmatprep.mubr.f32.mxu0 0.0
    %v842 = vand.u32 %v104, 4294901760
    %843 = vmatmul.mubr.f32.gmra.mxu0 %v842
    %v844 = vpop.f32.mrf.mxu0
    %v845 = vadd.f32 %v744, %v844
    %v846 = vpop.f32.mrf.mxu0
    %847 = vmatprep.mubr.f32.mxu0 0.0
    %v848 = vand.u32 %v107, 4294901760
    %849 = vmatmul.mubr.f32.gmra.mxu0 %v848
    %v850 = vpop.f32.mrf.mxu0
    %v851 = vadd.f32 %v754, %v850
    %v852 = vpop.f32.mrf.mxu0
    %853 = vdwg.mxu0
    %854 = vmatprep.subr.mxu0 0.0
    %855 = vmatpush1.xpose.msra.mxu0 0.0
    %856 = vmatprep.subr.mxu0 0.0
    %857 = vmatpush1.xpose.msra.mxu0 0.0
    %858 = vmatprep.subr.mxu0 0.0
    %859 = vmatpush1.xpose.msra.mxu0 0.0
    %860 = vmatprep.subr.mxu0 0.0
    %861 = vmatpush1.xpose.msra.mxu0 0.0
    %862 = vmatprep.subr.mxu0 0.0
    %863 = vmatpush1.xpose.msra.mxu0 0.0
    %864 = vmatprep.subr.mxu0 0.0
    %865 = vmatpush1.xpose.msra.mxu0 0.0
    %866 = vmatprep.subr.mxu0 0.0
    %867 = vmatpush1.xpose.msra.mxu0 0.0
    %868 = vmatprep.subr.mxu0 0.0
    %869 = vmatpush1.xpose.msra.mxu0 0.0
    %870 = vmatprep.subr.mxu0 0.0
    %871 = vmatpush1.xpose.msra.mxu0 0.0
    %872 = vmatprep.subr.mxu0 0.0
    %873 = vmatpush1.xpose.msra.mxu0 0.0
    %874 = vmatprep.subr.mxu0 0.0
    %875 = vmatpush1.xpose.msra.mxu0 0.0
    %876 = vmatprep.subr.mxu0 0.0
    %877 = vmatpush1.xpose.msra.mxu0 0.0
    %878 = vmatprep.subr.mxu0 0.0
    %v879 = vand.u32 %v666, 4294901760
    %v880 = vsub.f32 %v666, %v879
    %881 = vmatpush1.xpose.msra.mxu0 %v880
    %882 = vmatprep.subr.mxu0 0.0
    %v883 = vand.u32 %v663, 4294901760
    %v884 = vsub.f32 %v663, %v883
    %885 = vmatpush1.xpose.msra.mxu0 %v884
    %886 = vmatprep.subr.mxu0 0.0
    %v887 = vand.u32 %v660, 4294901760
    %v888 = vsub.f32 %v660, %v887
    %889 = vmatpush1.xpose.msra.mxu0 %v888
    %890 = vmatprep.subr.mxu0 0.0
    %v891 = vand.u32 %v657, 4294901760
    %v892 = vsub.f32 %v657, %v891
    %893 = vmatpush1.xpose.msra.mxu0 %v892
    %894 = vmatprep.subr.mxu0 0.0
    %895 = vmatpush2.xpose.msra.mxu0 0.0
    %896 = vmatprep.subr.mxu0 0.0
    %897 = vmatpush2.xpose.msra.mxu0 0.0
    %898 = vmatprep.subr.mxu0 0.0
    %899 = vmatpush2.xpose.msra.mxu0 0.0
    %900 = vmatprep.subr.mxu0 0.0
    %901 = vmatpush2.xpose.msra.mxu0 0.0
    %902 = vmatprep.subr.mxu0 0.0
    %903 = vmatpush2.xpose.msra.mxu0 0.0
    %904 = vmatprep.subr.mxu0 0.0
    %905 = vmatpush2.xpose.msra.mxu0 0.0
    %906 = vmatprep.subr.mxu0 0.0
    %907 = vmatpush2.xpose.msra.mxu0 0.0
    %908 = vmatprep.subr.mxu0 0.0
    %909 = vmatpush2.xpose.msra.mxu0 0.0
    %910 = vmatprep.subr.mxu0 0.0
    %911 = vmatpush2.xpose.msra.mxu0 0.0
    %912 = vmatprep.subr.mxu0 0.0
    %913 = vmatpush2.xpose.msra.mxu0 0.0
    %914 = vmatprep.subr.mxu0 0.0
    %915 = vmatpush2.xpose.msra.mxu0 0.0
    %916 = vmatprep.subr.mxu0 0.0
    %917 = vmatpush2.xpose.msra.mxu0 0.0
    %918 = vmatprep.subr.mxu0 0.0
    %919 = vmatpush2.xpose.msra.mxu0 0.0
    %920 = vmatprep.subr.mxu0 0.0
    %921 = vmatpush2.xpose.msra.mxu0 0.0
    %922 = vmatprep.subr.mxu0 0.0
    %923 = vmatpush2.xpose.msra.mxu0 0.0
    %924 = vmatprep.subr.mxu0 0.0
    %925 = vmatpush2.xpose.msra.mxu0 0.0
    %926 = vmatprep.mubr.f32.mxu0 0.0
    %v927 = vand.u32 %v104, 4294901760
    %v928 = vsub.f32 %v104, %v927
    %929 = vmatmul.mubr.f32.gmra.mxu0 %v928
    %v930 = vpop.f32.mrf.mxu0
    %v931 = vadd.f32 %v845, %v930
    %v932 = vpop.f32.mrf.mxu0
    %933 = vmatprep.mubr.f32.mxu0 0.0
    %v934 = vand.u32 %v107, 4294901760
    %v935 = vsub.f32 %v107, %v934
    %936 = vmatmul.mubr.f32.gmra.mxu0 %v935
    %v937 = vpop.f32.mrf.mxu0
    %v938 = vadd.f32 %v851, %v937
    %v939 = vpop.f32.mrf.mxu0
    %940 = vdwg.mxu0
    %941 = vmatprep.subr.mxu0 0.0
    %942 = vmatpush1.xpose.msra.mxu0 0.0
    %943 = vmatprep.subr.mxu0 0.0
    %944 = vmatpush1.xpose.msra.mxu0 0.0
    %945 = vmatprep.subr.mxu0 0.0
    %946 = vmatpush1.xpose.msra.mxu0 0.0
    %947 = vmatprep.subr.mxu0 0.0
    %948 = vmatpush1.xpose.msra.mxu0 0.0
    %949 = vmatprep.subr.mxu0 0.0
    %950 = vmatpush1.xpose.msra.mxu0 0.0
    %951 = vmatprep.subr.mxu0 0.0
    %952 = vmatpush1.xpose.msra.mxu0 0.0
    %953 = vmatprep.subr.mxu0 0.0
    %954 = vmatpush1.xpose.msra.mxu0 0.0
    %955 = vmatprep.subr.mxu0 0.0
    %956 = vmatpush1.xpose.msra.mxu0 0.0
    %957 = vmatprep.subr.mxu0 0.0
    %958 = vmatpush1.xpose.msra.mxu0 0.0
    %959 = vmatprep.subr.mxu0 0.0
    %960 = vmatpush1.xpose.msra.mxu0 0.0
    %961 = vmatprep.subr.mxu0 0.0
    %962 = vmatpush1.xpose.msra.mxu0 0.0
    %963 = vmatprep.subr.mxu0 0.0
    %964 = vmatpush1.xpose.msra.mxu0 0.0
    %965 = vmatprep.subr.mxu0 0.0
    %v966 = vand.u32 %v666, 4294901760
    %967 = vmatpush1.xpose.msra.mxu0 %v966
    %968 = vmatprep.subr.mxu0 0.0
    %v969 = vand.u32 %v663, 4294901760
    %970 = vmatpush1.xpose.msra.mxu0 %v969
    %971 = vmatprep.subr.mxu0 0.0
    %v972 = vand.u32 %v660, 4294901760
    %973 = vmatpush1.xpose.msra.mxu0 %v972
    %974 = vmatprep.subr.mxu0 0.0
    %v975 = vand.u32 %v657, 4294901760
    %976 = vmatpush1.xpose.msra.mxu0 %v975
    %977 = vmatprep.subr.mxu0 0.0
    %978 = vmatpush2.xpose.msra.mxu0 0.0
    %979 = vmatprep.subr.mxu0 0.0
    %980 = vmatpush2.xpose.msra.mxu0 0.0
    %981 = vmatprep.subr.mxu0 0.0
    %982 = vmatpush2.xpose.msra.mxu0 0.0
    %983 = vmatprep.subr.mxu0 0.0
    %984 = vmatpush2.xpose.msra.mxu0 0.0
    %985 = vmatprep.subr.mxu0 0.0
    %986 = vmatpush2.xpose.msra.mxu0 0.0
    %987 = vmatprep.subr.mxu0 0.0
    %988 = vmatpush2.xpose.msra.mxu0 0.0
    %989 = vmatprep.subr.mxu0 0.0
    %990 = vmatpush2.xpose.msra.mxu0 0.0
    %991 = vmatprep.subr.mxu0 0.0
    %992 = vmatpush2.xpose.msra.mxu0 0.0
    %993 = vmatprep.subr.mxu0 0.0
    %994 = vmatpush2.xpose.msra.mxu0 0.0
    %995 = vmatprep.subr.mxu0 0.0
    %996 = vmatpush2.xpose.msra.mxu0 0.0
    %997 = vmatprep.subr.mxu0 0.0
    %998 = vmatpush2.xpose.msra.mxu0 0.0
    %999 = vmatprep.subr.mxu0 0.0
    %1000 = vmatpush2.xpose.msra.mxu0 0.0
    %1001 = vmatprep.subr.mxu0 0.0
    %1002 = vmatpush2.xpose.msra.mxu0 0.0
    %1003 = vmatprep.subr.mxu0 0.0
    %1004 = vmatpush2.xpose.msra.mxu0 0.0
    %1005 = vmatprep.subr.mxu0 0.0
    %1006 = vmatpush2.xpose.msra.mxu0 0.0
    %1007 = vmatprep.subr.mxu0 0.0
    %1008 = vmatpush2.xpose.msra.mxu0 0.0
    %1009 = vmatprep.mubr.f32.mxu0 0.0
    %v1010 = vand.u32 %v104, 4294901760
    %v1011 = vsub.f32 %v104, %v1010
    %v1012 = vand.u32 %v1011, 4294901760
    %1013 = vmatmul.mubr.f32.gmra.mxu0 %v1012
    %v1014 = vpop.f32.mrf.mxu0
    %v1015 = vadd.f32 %v931, %v1014
    %v1016 = vpop.f32.mrf.mxu0
    %1017 = vmatprep.mubr.f32.mxu0 0.0
    %v1018 = vand.u32 %v107, 4294901760
    %v1019 = vsub.f32 %v107, %v1018
    %v1020 = vand.u32 %v1019, 4294901760
    %1021 = vmatmul.mubr.f32.gmra.mxu0 %v1020
    %v1022 = vpop.f32.mrf.mxu0
    %v1023 = vadd.f32 %v938, %v1022
    %v1024 = vpop.f32.mrf.mxu0
    %1025 = vdwg.mxu0
    %1026 = vmatprep.subr.mxu0 0.0
    %1027 = vmatpush1.xpose.msra.mxu0 0.0
    %1028 = vmatprep.subr.mxu0 0.0
    %1029 = vmatpush1.xpose.msra.mxu0 0.0
    %1030 = vmatprep.subr.mxu0 0.0
    %1031 = vmatpush1.xpose.msra.mxu0 0.0
    %1032 = vmatprep.subr.mxu0 0.0
    %1033 = vmatpush1.xpose.msra.mxu0 0.0
    %1034 = vmatprep.subr.mxu0 0.0
    %1035 = vmatpush1.xpose.msra.mxu0 0.0
    %1036 = vmatprep.subr.mxu0 0.0
    %1037 = vmatpush1.xpose.msra.mxu0 0.0
    %1038 = vmatprep.subr.mxu0 0.0
    %1039 = vmatpush1.xpose.msra.mxu0 0.0
    %1040 = vmatprep.subr.mxu0 0.0
    %1041 = vmatpush1.xpose.msra.mxu0 0.0
    %1042 = vmatprep.subr.mxu0 0.0
    %1043 = vmatpush1.xpose.msra.mxu0 0.0
    %1044 = vmatprep.subr.mxu0 0.0
    %1045 = vmatpush1.xpose.msra.mxu0 0.0
    %1046 = vmatprep.subr.mxu0 0.0
    %1047 = vmatpush1.xpose.msra.mxu0 0.0
    %1048 = vmatprep.subr.mxu0 0.0
    %1049 = vmatpush1.xpose.msra.mxu0 0.0
    %1050 = vmatprep.subr.mxu0 0.0
    %v1051 = vand.u32 %v666, 4294901760
    %v1052 = vsub.f32 %v666, %v1051
    %v1053 = vand.u32 %v1052, 4294901760
    %1054 = vmatpush1.xpose.msra.mxu0 %v1053
    %1055 = vmatprep.subr.mxu0 0.0
    %v1056 = vand.u32 %v663, 4294901760
    %v1057 = vsub.f32 %v663, %v1056
    %v1058 = vand.u32 %v1057, 4294901760
    %1059 = vmatpush1.xpose.msra.mxu0 %v1058
    %1060 = vmatprep.subr.mxu0 0.0
    %v1061 = vand.u32 %v660, 4294901760
    %v1062 = vsub.f32 %v660, %v1061
    %v1063 = vand.u32 %v1062, 4294901760
    %1064 = vmatpush1.xpose.msra.mxu0 %v1063
    %1065 = vmatprep.subr.mxu0 0.0
    %v1066 = vand.u32 %v657, 4294901760
    %v1067 = vsub.f32 %v657, %v1066
    %v1068 = vand.u32 %v1067, 4294901760
    %1069 = vmatpush1.xpose.msra.mxu0 %v1068
    %1070 = vmatprep.subr.mxu0 0.0
    %1071 = vmatpush2.xpose.msra.mxu0 0.0
    %1072 = vmatprep.subr.mxu0 0.0
    %1073 = vmatpush2.xpose.msra.mxu0 0.0
    %1074 = vmatprep.subr.mxu0 0.0
    %1075 = vmatpush2.xpose.msra.mxu0 0.0
    %1076 = vmatprep.subr.mxu0 0.0
    %1077 = vmatpush2.xpose.msra.mxu0 0.0
    %1078 = vmatprep.subr.mxu0 0.0
    %1079 = vmatpush2.xpose.msra.mxu0 0.0
    %1080 = vmatprep.subr.mxu0 0.0
    %1081 = vmatpush2.xpose.msra.mxu0 0.0
    %1082 = vmatprep.subr.mxu0 0.0
    %1083 = vmatpush2.xpose.msra.mxu0 0.0
    %1084 = vmatprep.subr.mxu0 0.0
    %1085 = vmatpush2.xpose.msra.mxu0 0.0
    %1086 = vmatprep.subr.mxu0 0.0
    %1087 = vmatpush2.xpose.msra.mxu0 0.0
    %1088 = vmatprep.subr.mxu0 0.0
    %1089 = vmatpush2.xpose.msra.mxu0 0.0
    %1090 = vmatprep.subr.mxu0 0.0
    %1091 = vmatpush2.xpose.msra.mxu0 0.0
    %1092 = vmatprep.subr.mxu0 0.0
    %1093 = vmatpush2.xpose.msra.mxu0 0.0
    %1094 = vmatprep.subr.mxu0 0.0
    %1095 = vmatpush2.xpose.msra.mxu0 0.0
    %1096 = vmatprep.subr.mxu0 0.0
    %1097 = vmatpush2.xpose.msra.mxu0 0.0
    %1098 = vmatprep.subr.mxu0 0.0
    %1099 = vmatpush2.xpose.msra.mxu0 0.0
    %1100 = vmatprep.subr.mxu0 0.0
    %1101 = vmatpush2.xpose.msra.mxu0 0.0
    %1102 = vmatprep.mubr.f32.mxu0 0.0
    %v1103 = vand.u32 %v104, 4294901760
    %1104 = vmatmul.mubr.f32.gmra.mxu0 %v1103
    %v1105 = vpop.f32.mrf.mxu0
    %v1106 = vadd.f32 %v1015, %v1105
    %v1107 = vpop.f32.mrf.mxu0
    %1108 = vmatprep.mubr.f32.mxu0 0.0
    %v1109 = vand.u32 %v107, 4294901760
    %1110 = vmatmul.mubr.f32.gmra.mxu0 %v1109
    %v1111 = vpop.f32.mrf.mxu0
    %v1112 = vadd.f32 %v1023, %v1111
    %v1113 = vpop.f32.mrf.mxu0
    %1114 = vdwg.mxu0
    %1115 = vmatprep.subr.mxu0 0.0
    %1116 = vmatpush1.xpose.msra.mxu0 0.0
    %1117 = vmatprep.subr.mxu0 0.0
    %1118 = vmatpush1.xpose.msra.mxu0 0.0
    %1119 = vmatprep.subr.mxu0 0.0
    %1120 = vmatpush1.xpose.msra.mxu0 0.0
    %1121 = vmatprep.subr.mxu0 0.0
    %1122 = vmatpush1.xpose.msra.mxu0 0.0
    %1123 = vmatprep.subr.mxu0 0.0
    %1124 = vmatpush1.xpose.msra.mxu0 0.0
    %1125 = vmatprep.subr.mxu0 0.0
    %1126 = vmatpush1.xpose.msra.mxu0 0.0
    %1127 = vmatprep.subr.mxu0 0.0
    %1128 = vmatpush1.xpose.msra.mxu0 0.0
    %1129 = vmatprep.subr.mxu0 0.0
    %1130 = vmatpush1.xpose.msra.mxu0 0.0
    %1131 = vmatprep.subr.mxu0 0.0
    %1132 = vmatpush1.xpose.msra.mxu0 0.0
    %1133 = vmatprep.subr.mxu0 0.0
    %1134 = vmatpush1.xpose.msra.mxu0 0.0
    %1135 = vmatprep.subr.mxu0 0.0
    %1136 = vmatpush1.xpose.msra.mxu0 0.0
    %1137 = vmatprep.subr.mxu0 0.0
    %1138 = vmatpush1.xpose.msra.mxu0 0.0
    %1139 = vmatprep.subr.mxu0 0.0
    %v1140 = vand.u32 %v666, 4294901760
    %1141 = vmatpush1.xpose.msra.mxu0 %v1140
    %1142 = vmatprep.subr.mxu0 0.0
    %v1143 = vand.u32 %v663, 4294901760
    %1144 = vmatpush1.xpose.msra.mxu0 %v1143
    %1145 = vmatprep.subr.mxu0 0.0
    %v1146 = vand.u32 %v660, 4294901760
    %1147 = vmatpush1.xpose.msra.mxu0 %v1146
    %1148 = vmatprep.subr.mxu0 0.0
    %v1149 = vand.u32 %v657, 4294901760
    %1150 = vmatpush1.xpose.msra.mxu0 %v1149
    %1151 = vmatprep.subr.mxu0 0.0
    %1152 = vmatpush2.xpose.msra.mxu0 0.0
    %1153 = vmatprep.subr.mxu0 0.0
    %1154 = vmatpush2.xpose.msra.mxu0 0.0
    %1155 = vmatprep.subr.mxu0 0.0
    %1156 = vmatpush2.xpose.msra.mxu0 0.0
    %1157 = vmatprep.subr.mxu0 0.0
    %1158 = vmatpush2.xpose.msra.mxu0 0.0
    %1159 = vmatprep.subr.mxu0 0.0
    %1160 = vmatpush2.xpose.msra.mxu0 0.0
    %1161 = vmatprep.subr.mxu0 0.0
    %1162 = vmatpush2.xpose.msra.mxu0 0.0
    %1163 = vmatprep.subr.mxu0 0.0
    %1164 = vmatpush2.xpose.msra.mxu0 0.0
    %1165 = vmatprep.subr.mxu0 0.0
    %1166 = vmatpush2.xpose.msra.mxu0 0.0
    %1167 = vmatprep.subr.mxu0 0.0
    %1168 = vmatpush2.xpose.msra.mxu0 0.0
    %1169 = vmatprep.subr.mxu0 0.0
    %1170 = vmatpush2.xpose.msra.mxu0 0.0
    %1171 = vmatprep.subr.mxu0 0.0
    %1172 = vmatpush2.xpose.msra.mxu0 0.0
    %1173 = vmatprep.subr.mxu0 0.0
    %1174 = vmatpush2.xpose.msra.mxu0 0.0
    %1175 = vmatprep.subr.mxu0 0.0
    %1176 = vmatpush2.xpose.msra.mxu0 0.0
    %1177 = vmatprep.subr.mxu0 0.0
    %1178 = vmatpush2.xpose.msra.mxu0 0.0
    %1179 = vmatprep.subr.mxu0 0.0
    %1180 = vmatpush2.xpose.msra.mxu0 0.0
    %1181 = vmatprep.subr.mxu0 0.0
    %1182 = vmatpush2.xpose.msra.mxu0 0.0
    %1183 = vmatprep.mubr.f32.mxu0 0.0
    %v1184 = vand.u32 %v104, 4294901760
    %1185 = vmatmul.mubr.f32.gmra.mxu0 %v1184
    %v1186 = vpop.f32.mrf.mxu0
    %v1187 = vadd.f32 %v1106, %v1186
    %v1188 = vpop.f32.mrf.mxu0
    %1189 = vmatprep.mubr.f32.mxu0 0.0
    %v1190 = vand.u32 %v107, 4294901760
    %1191 = vmatmul.mubr.f32.gmra.mxu0 %v1190
    %v1192 = vpop.f32.mrf.mxu0
    %v1193 = vadd.f32 %v1112, %v1192
    %v1194 = vpop.f32.mrf.mxu0
    %1195 = vdwg.mxu0
    %v1196 = vld [vmem:[%s6] sm:$0x1]
    %v1198 = vlaneseq
    %v1199 = vshrl.u32 %v1198, 7
    %v1200 = vsub.s32 0, %v1199
    %v1201 = vrot.slane %v1196, %v1200
    %v1204 = vsel %vm102, %v91, 0
    %v1207 = vsel %vm102, %v92, 0
    %v1210 = vsel %vm102, %v93, 0
    %v1213 = vsel %vm102, %v94, 0
    %1215 = vmatprep.subr.mxu0 0.0
    %1216 = vmatpush1.xpose.msra.mxu0 0.0
    %1217 = vmatprep.subr.mxu0 0.0
    %1218 = vmatpush1.xpose.msra.mxu0 0.0
    %1219 = vmatprep.subr.mxu0 0.0
    %1220 = vmatpush1.xpose.msra.mxu0 0.0
    %1221 = vmatprep.subr.mxu0 0.0
    %1222 = vmatpush1.xpose.msra.mxu0 0.0
    %1223 = vmatprep.subr.mxu0 0.0
    %1224 = vmatpush1.xpose.msra.mxu0 0.0
    %1225 = vmatprep.subr.mxu0 0.0
    %1226 = vmatpush1.xpose.msra.mxu0 0.0
    %1227 = vmatprep.subr.mxu0 0.0
    %1228 = vmatpush1.xpose.msra.mxu0 0.0
    %1229 = vmatprep.subr.mxu0 0.0
    %1230 = vmatpush1.xpose.msra.mxu0 0.0
    %1231 = vmatprep.subr.mxu0 0.0
    %1232 = vmatpush1.xpose.msra.mxu0 0.0
    %1233 = vmatprep.subr.mxu0 0.0
    %1234 = vmatpush1.xpose.msra.mxu0 0.0
    %1235 = vmatprep.subr.mxu0 0.0
    %1236 = vmatpush1.xpose.msra.mxu0 0.0
    %1237 = vmatprep.subr.mxu0 0.0
    %1238 = vmatpush1.xpose.msra.mxu0 0.0
    %1239 = vmatprep.subr.mxu0 0.0
    %v1240 = vand.u32 %v1213, 4294901760
    %1241 = vmatpush1.xpose.msra.mxu0 %v1240
    %1242 = vmatprep.subr.mxu0 0.0
    %v1243 = vand.u32 %v1210, 4294901760
    %1244 = vmatpush1.xpose.msra.mxu0 %v1243
    %1245 = vmatprep.subr.mxu0 0.0
    %v1246 = vand.u32 %v1207, 4294901760
    %1247 = vmatpush1.xpose.msra.mxu0 %v1246
    %1248 = vmatprep.subr.mxu0 0.0
    %v1249 = vand.u32 %v1204, 4294901760
    %1250 = vmatpush1.xpose.msra.mxu0 %v1249
    %1251 = vmatprep.subr.mxu0 0.0
    %1252 = vmatpush2.xpose.msra.mxu0 0.0
    %1253 = vmatprep.subr.mxu0 0.0
    %1254 = vmatpush2.xpose.msra.mxu0 0.0
    %1255 = vmatprep.subr.mxu0 0.0
    %1256 = vmatpush2.xpose.msra.mxu0 0.0
    %1257 = vmatprep.subr.mxu0 0.0
    %1258 = vmatpush2.xpose.msra.mxu0 0.0
    %1259 = vmatprep.subr.mxu0 0.0
    %1260 = vmatpush2.xpose.msra.mxu0 0.0
    %1261 = vmatprep.subr.mxu0 0.0
    %1262 = vmatpush2.xpose.msra.mxu0 0.0
    %1263 = vmatprep.subr.mxu0 0.0
    %1264 = vmatpush2.xpose.msra.mxu0 0.0
    %1265 = vmatprep.subr.mxu0 0.0
    %1266 = vmatpush2.xpose.msra.mxu0 0.0
    %1267 = vmatprep.subr.mxu0 0.0
    %1268 = vmatpush2.xpose.msra.mxu0 0.0
    %1269 = vmatprep.subr.mxu0 0.0
    %1270 = vmatpush2.xpose.msra.mxu0 0.0
    %1271 = vmatprep.subr.mxu0 0.0
    %1272 = vmatpush2.xpose.msra.mxu0 0.0
    %1273 = vmatprep.subr.mxu0 0.0
    %1274 = vmatpush2.xpose.msra.mxu0 0.0
    %1275 = vmatprep.subr.mxu0 0.0
    %1276 = vmatpush2.xpose.msra.mxu0 0.0
    %1277 = vmatprep.subr.mxu0 0.0
    %1278 = vmatpush2.xpose.msra.mxu0 0.0
    %1279 = vmatprep.subr.mxu0 0.0
    %1280 = vmatpush2.xpose.msra.mxu0 0.0
    %1281 = vmatprep.subr.mxu0 0.0
    %1282 = vmatpush2.xpose.msra.mxu0 0.0
    %1283 = vmatprep.mubr.f32.mxu0 0.0
    %v1284 = vand.u32 %v104, 4294901760
    %v1285 = vsub.f32 %v104, %v1284
    %v1286 = vand.u32 %v1285, 4294901760
    %v1287 = vsub.f32 %v1285, %v1286
    %v1288 = vand.u32 %v1287, 4294901760
    %1289 = vmatmul.mubr.f32.gmra.mxu0 %v1288
    %v1290 = vpop.f32.mrf.mxu0
    %v1291 = vadd.f32 %v1201, %v1290
    %v1292 = vpop.f32.mrf.mxu0
    %1293 = vmatprep.mubr.f32.mxu0 0.0
    %v1294 = vand.u32 %v107, 4294901760
    %v1295 = vsub.f32 %v107, %v1294
    %v1296 = vand.u32 %v1295, 4294901760
    %v1297 = vsub.f32 %v1295, %v1296
    %v1298 = vand.u32 %v1297, 4294901760
    %1299 = vmatmul.mubr.f32.gmra.mxu0 %v1298
    %v1300 = vpop.f32.mrf.mxu0
    %v1301 = vadd.f32 %v1201, %v1300
    %v1302 = vpop.f32.mrf.mxu0
    %1303 = vdwg.mxu0
    %1304 = vmatprep.subr.mxu0 0.0
    %1305 = vmatpush1.xpose.msra.mxu0 0.0
    %1306 = vmatprep.subr.mxu0 0.0
    %1307 = vmatpush1.xpose.msra.mxu0 0.0
    %1308 = vmatprep.subr.mxu0 0.0
    %1309 = vmatpush1.xpose.msra.mxu0 0.0
    %1310 = vmatprep.subr.mxu0 0.0
    %1311 = vmatpush1.xpose.msra.mxu0 0.0
    %1312 = vmatprep.subr.mxu0 0.0
    %1313 = vmatpush1.xpose.msra.mxu0 0.0
    %1314 = vmatprep.subr.mxu0 0.0
    %1315 = vmatpush1.xpose.msra.mxu0 0.0
    %1316 = vmatprep.subr.mxu0 0.0
    %1317 = vmatpush1.xpose.msra.mxu0 0.0
    %1318 = vmatprep.subr.mxu0 0.0
    %1319 = vmatpush1.xpose.msra.mxu0 0.0
    %1320 = vmatprep.subr.mxu0 0.0
    %1321 = vmatpush1.xpose.msra.mxu0 0.0
    %1322 = vmatprep.subr.mxu0 0.0
    %1323 = vmatpush1.xpose.msra.mxu0 0.0
    %1324 = vmatprep.subr.mxu0 0.0
    %1325 = vmatpush1.xpose.msra.mxu0 0.0
    %1326 = vmatprep.subr.mxu0 0.0
    %1327 = vmatpush1.xpose.msra.mxu0 0.0
    %1328 = vmatprep.subr.mxu0 0.0
    %v1329 = vand.u32 %v1213, 4294901760
    %v1330 = vsub.f32 %v1213, %v1329
    %v1331 = vand.u32 %v1330, 4294901760
    %v1332 = vsub.f32 %v1330, %v1331
    %v1333 = vand.u32 %v1332, 4294901760
    %1334 = vmatpush1.xpose.msra.mxu0 %v1333
    %1335 = vmatprep.subr.mxu0 0.0
    %v1336 = vand.u32 %v1210, 4294901760
    %v1337 = vsub.f32 %v1210, %v1336
    %v1338 = vand.u32 %v1337, 4294901760
    %v1339 = vsub.f32 %v1337, %v1338
    %v1340 = vand.u32 %v1339, 4294901760
    %1341 = vmatpush1.xpose.msra.mxu0 %v1340
    %1342 = vmatprep.subr.mxu0 0.0
    %v1343 = vand.u32 %v1207, 4294901760
    %v1344 = vsub.f32 %v1207, %v1343
    %v1345 = vand.u32 %v1344, 4294901760
    %v1346 = vsub.f32 %v1344, %v1345
    %v1347 = vand.u32 %v1346, 4294901760
    %1348 = vmatpush1.xpose.msra.mxu0 %v1347
    %1349 = vmatprep.subr.mxu0 0.0
    %v1350 = vand.u32 %v1204, 4294901760
    %v1351 = vsub.f32 %v1204, %v1350
    %v1352 = vand.u32 %v1351, 4294901760
    %v1353 = vsub.f32 %v1351, %v1352
    %v1354 = vand.u32 %v1353, 4294901760
    %1355 = vmatpush1.xpose.msra.mxu0 %v1354
    %1356 = vmatprep.subr.mxu0 0.0
    %1357 = vmatpush2.xpose.msra.mxu0 0.0
    %1358 = vmatprep.subr.mxu0 0.0
    %1359 = vmatpush2.xpose.msra.mxu0 0.0
    %1360 = vmatprep.subr.mxu0 0.0
    %1361 = vmatpush2.xpose.msra.mxu0 0.0
    %1362 = vmatprep.subr.mxu0 0.0
    %1363 = vmatpush2.xpose.msra.mxu0 0.0
    %1364 = vmatprep.subr.mxu0 0.0
    %1365 = vmatpush2.xpose.msra.mxu0 0.0
    %1366 = vmatprep.subr.mxu0 0.0
    %1367 = vmatpush2.xpose.msra.mxu0 0.0
    %1368 = vmatprep.subr.mxu0 0.0
    %1369 = vmatpush2.xpose.msra.mxu0 0.0
    %1370 = vmatprep.subr.mxu0 0.0
    %1371 = vmatpush2.xpose.msra.mxu0 0.0
    %1372 = vmatprep.subr.mxu0 0.0
    %1373 = vmatpush2.xpose.msra.mxu0 0.0
    %1374 = vmatprep.subr.mxu0 0.0
    %1375 = vmatpush2.xpose.msra.mxu0 0.0
    %1376 = vmatprep.subr.mxu0 0.0
    %1377 = vmatpush2.xpose.msra.mxu0 0.0
    %1378 = vmatprep.subr.mxu0 0.0
    %1379 = vmatpush2.xpose.msra.mxu0 0.0
    %1380 = vmatprep.subr.mxu0 0.0
    %1381 = vmatpush2.xpose.msra.mxu0 0.0
    %1382 = vmatprep.subr.mxu0 0.0
    %1383 = vmatpush2.xpose.msra.mxu0 0.0
    %1384 = vmatprep.subr.mxu0 0.0
    %1385 = vmatpush2.xpose.msra.mxu0 0.0
    %1386 = vmatprep.subr.mxu0 0.0
    %1387 = vmatpush2.xpose.msra.mxu0 0.0
    %1388 = vmatprep.mubr.f32.mxu0 0.0
    %v1389 = vand.u32 %v104, 4294901760
    %1390 = vmatmul.mubr.f32.gmra.mxu0 %v1389
    %v1391 = vpop.f32.mrf.mxu0
    %v1392 = vadd.f32 %v1291, %v1391
    %v1393 = vpop.f32.mrf.mxu0
    %1394 = vmatprep.mubr.f32.mxu0 0.0
    %v1395 = vand.u32 %v107, 4294901760
    %1396 = vmatmul.mubr.f32.gmra.mxu0 %v1395
    %v1397 = vpop.f32.mrf.mxu0
    %v1398 = vadd.f32 %v1301, %v1397
    %v1399 = vpop.f32.mrf.mxu0
    %1400 = vdwg.mxu0
    %1401 = vmatprep.subr.mxu0 0.0
    %1402 = vmatpush1.xpose.msra.mxu0 0.0
    %1403 = vmatprep.subr.mxu0 0.0
    %1404 = vmatpush1.xpose.msra.mxu0 0.0
    %1405 = vmatprep.subr.mxu0 0.0
    %1406 = vmatpush1.xpose.msra.mxu0 0.0
    %1407 = vmatprep.subr.mxu0 0.0
    %1408 = vmatpush1.xpose.msra.mxu0 0.0
    %1409 = vmatprep.subr.mxu0 0.0
    %1410 = vmatpush1.xpose.msra.mxu0 0.0
    %1411 = vmatprep.subr.mxu0 0.0
    %1412 = vmatpush1.xpose.msra.mxu0 0.0
    %1413 = vmatprep.subr.mxu0 0.0
    %1414 = vmatpush1.xpose.msra.mxu0 0.0
    %1415 = vmatprep.subr.mxu0 0.0
    %1416 = vmatpush1.xpose.msra.mxu0 0.0
    %1417 = vmatprep.subr.mxu0 0.0
    %1418 = vmatpush1.xpose.msra.mxu0 0.0
    %1419 = vmatprep.subr.mxu0 0.0
    %1420 = vmatpush1.xpose.msra.mxu0 0.0
    %1421 = vmatprep.subr.mxu0 0.0
    %1422 = vmatpush1.xpose.msra.mxu0 0.0
    %1423 = vmatprep.subr.mxu0 0.0
    %1424 = vmatpush1.xpose.msra.mxu0 0.0
    %1425 = vmatprep.subr.mxu0 0.0
    %v1426 = vand.u32 %v1213, 4294901760
    %v1427 = vsub.f32 %v1213, %v1426
    %1428 = vmatpush1.xpose.msra.mxu0 %v1427
    %1429 = vmatprep.subr.mxu0 0.0
    %v1430 = vand.u32 %v1210, 4294901760
    %v1431 = vsub.f32 %v1210, %v1430
    %1432 = vmatpush1.xpose.msra.mxu0 %v1431
    %1433 = vmatprep.subr.mxu0 0.0
    %v1434 = vand.u32 %v1207, 4294901760
    %v1435 = vsub.f32 %v1207, %v1434
    %1436 = vmatpush1.xpose.msra.mxu0 %v1435
    %1437 = vmatprep.subr.mxu0 0.0
    %v1438 = vand.u32 %v1204, 4294901760
    %v1439 = vsub.f32 %v1204, %v1438
    %1440 = vmatpush1.xpose.msra.mxu0 %v1439
    %1441 = vmatprep.subr.mxu0 0.0
    %1442 = vmatpush2.xpose.msra.mxu0 0.0
    %1443 = vmatprep.subr.mxu0 0.0
    %1444 = vmatpush2.xpose.msra.mxu0 0.0
    %1445 = vmatprep.subr.mxu0 0.0
    %1446 = vmatpush2.xpose.msra.mxu0 0.0
    %1447 = vmatprep.subr.mxu0 0.0
    %1448 = vmatpush2.xpose.msra.mxu0 0.0
    %1449 = vmatprep.subr.mxu0 0.0
    %1450 = vmatpush2.xpose.msra.mxu0 0.0
    %1451 = vmatprep.subr.mxu0 0.0
    %1452 = vmatpush2.xpose.msra.mxu0 0.0
    %1453 = vmatprep.subr.mxu0 0.0
    %1454 = vmatpush2.xpose.msra.mxu0 0.0
    %1455 = vmatprep.subr.mxu0 0.0
    %1456 = vmatpush2.xpose.msra.mxu0 0.0
    %1457 = vmatprep.subr.mxu0 0.0
    %1458 = vmatpush2.xpose.msra.mxu0 0.0
    %1459 = vmatprep.subr.mxu0 0.0
    %1460 = vmatpush2.xpose.msra.mxu0 0.0
    %1461 = vmatprep.subr.mxu0 0.0
    %1462 = vmatpush2.xpose.msra.mxu0 0.0
    %1463 = vmatprep.subr.mxu0 0.0
    %1464 = vmatpush2.xpose.msra.mxu0 0.0
    %1465 = vmatprep.subr.mxu0 0.0
    %1466 = vmatpush2.xpose.msra.mxu0 0.0
    %1467 = vmatprep.subr.mxu0 0.0
    %1468 = vmatpush2.xpose.msra.mxu0 0.0
    %1469 = vmatprep.subr.mxu0 0.0
    %1470 = vmatpush2.xpose.msra.mxu0 0.0
    %1471 = vmatprep.subr.mxu0 0.0
    %1472 = vmatpush2.xpose.msra.mxu0 0.0
    %1473 = vmatprep.mubr.f32.mxu0 0.0
    %v1474 = vand.u32 %v104, 4294901760
    %v1475 = vsub.f32 %v104, %v1474
    %1476 = vmatmul.mubr.f32.gmra.mxu0 %v1475
    %v1477 = vpop.f32.mrf.mxu0
    %v1478 = vadd.f32 %v1392, %v1477
    %v1479 = vpop.f32.mrf.mxu0
    %1480 = vmatprep.mubr.f32.mxu0 0.0
    %v1481 = vand.u32 %v107, 4294901760
    %v1482 = vsub.f32 %v107, %v1481
    %1483 = vmatmul.mubr.f32.gmra.mxu0 %v1482
    %v1484 = vpop.f32.mrf.mxu0
    %v1485 = vadd.f32 %v1398, %v1484
    %v1486 = vpop.f32.mrf.mxu0
    %1487 = vdwg.mxu0
    %1488 = vmatprep.subr.mxu0 0.0
    %1489 = vmatpush1.xpose.msra.mxu0 0.0
    %1490 = vmatprep.subr.mxu0 0.0
    %1491 = vmatpush1.xpose.msra.mxu0 0.0
    %1492 = vmatprep.subr.mxu0 0.0
    %1493 = vmatpush1.xpose.msra.mxu0 0.0
    %1494 = vmatprep.subr.mxu0 0.0
    %1495 = vmatpush1.xpose.msra.mxu0 0.0
    %1496 = vmatprep.subr.mxu0 0.0
    %1497 = vmatpush1.xpose.msra.mxu0 0.0
    %1498 = vmatprep.subr.mxu0 0.0
    %1499 = vmatpush1.xpose.msra.mxu0 0.0
    %1500 = vmatprep.subr.mxu0 0.0
    %1501 = vmatpush1.xpose.msra.mxu0 0.0
    %1502 = vmatprep.subr.mxu0 0.0
    %1503 = vmatpush1.xpose.msra.mxu0 0.0
    %1504 = vmatprep.subr.mxu0 0.0
    %1505 = vmatpush1.xpose.msra.mxu0 0.0
    %1506 = vmatprep.subr.mxu0 0.0
    %1507 = vmatpush1.xpose.msra.mxu0 0.0
    %1508 = vmatprep.subr.mxu0 0.0
    %1509 = vmatpush1.xpose.msra.mxu0 0.0
    %1510 = vmatprep.subr.mxu0 0.0
    %1511 = vmatpush1.xpose.msra.mxu0 0.0
    %1512 = vmatprep.subr.mxu0 0.0
    %v1513 = vand.u32 %v1213, 4294901760
    %1514 = vmatpush1.xpose.msra.mxu0 %v1513
    %1515 = vmatprep.subr.mxu0 0.0
    %v1516 = vand.u32 %v1210, 4294901760
    %1517 = vmatpush1.xpose.msra.mxu0 %v1516
    %1518 = vmatprep.subr.mxu0 0.0
    %v1519 = vand.u32 %v1207, 4294901760
    %1520 = vmatpush1.xpose.msra.mxu0 %v1519
    %1521 = vmatprep.subr.mxu0 0.0
    %v1522 = vand.u32 %v1204, 4294901760
    %1523 = vmatpush1.xpose.msra.mxu0 %v1522
    %1524 = vmatprep.subr.mxu0 0.0
    %1525 = vmatpush2.xpose.msra.mxu0 0.0
    %1526 = vmatprep.subr.mxu0 0.0
    %1527 = vmatpush2.xpose.msra.mxu0 0.0
    %1528 = vmatprep.subr.mxu0 0.0
    %1529 = vmatpush2.xpose.msra.mxu0 0.0
    %1530 = vmatprep.subr.mxu0 0.0
    %1531 = vmatpush2.xpose.msra.mxu0 0.0
    %1532 = vmatprep.subr.mxu0 0.0
    %1533 = vmatpush2.xpose.msra.mxu0 0.0
    %1534 = vmatprep.subr.mxu0 0.0
    %1535 = vmatpush2.xpose.msra.mxu0 0.0
    %1536 = vmatprep.subr.mxu0 0.0
    %1537 = vmatpush2.xpose.msra.mxu0 0.0
    %1538 = vmatprep.subr.mxu0 0.0
    %1539 = vmatpush2.xpose.msra.mxu0 0.0
    %1540 = vmatprep.subr.mxu0 0.0
    %1541 = vmatpush2.xpose.msra.mxu0 0.0
    %1542 = vmatprep.subr.mxu0 0.0
    %1543 = vmatpush2.xpose.msra.mxu0 0.0
    %1544 = vmatprep.subr.mxu0 0.0
    %1545 = vmatpush2.xpose.msra.mxu0 0.0
    %1546 = vmatprep.subr.mxu0 0.0
    %1547 = vmatpush2.xpose.msra.mxu0 0.0
    %1548 = vmatprep.subr.mxu0 0.0
    %1549 = vmatpush2.xpose.msra.mxu0 0.0
    %1550 = vmatprep.subr.mxu0 0.0
    %1551 = vmatpush2.xpose.msra.mxu0 0.0
    %1552 = vmatprep.subr.mxu0 0.0
    %1553 = vmatpush2.xpose.msra.mxu0 0.0
    %1554 = vmatprep.subr.mxu0 0.0
    %1555 = vmatpush2.xpose.msra.mxu0 0.0
    %1556 = vmatprep.mubr.f32.mxu0 0.0
    %v1557 = vand.u32 %v104, 4294901760
    %v1558 = vsub.f32 %v104, %v1557
    %v1559 = vand.u32 %v1558, 4294901760
    %1560 = vmatmul.mubr.f32.gmra.mxu0 %v1559
    %v1561 = vpop.f32.mrf.mxu0
    %v1562 = vadd.f32 %v1478, %v1561
    %v1563 = vpop.f32.mrf.mxu0
    %1564 = vmatprep.mubr.f32.mxu0 0.0
    %v1565 = vand.u32 %v107, 4294901760
    %v1566 = vsub.f32 %v107, %v1565
    %v1567 = vand.u32 %v1566, 4294901760
    %1568 = vmatmul.mubr.f32.gmra.mxu0 %v1567
    %v1569 = vpop.f32.mrf.mxu0
    %v1570 = vadd.f32 %v1485, %v1569
    %v1571 = vpop.f32.mrf.mxu0
    %1572 = vdwg.mxu0
    %1573 = vmatprep.subr.mxu0 0.0
    %1574 = vmatpush1.xpose.msra.mxu0 0.0
    %1575 = vmatprep.subr.mxu0 0.0
    %1576 = vmatpush1.xpose.msra.mxu0 0.0
    %1577 = vmatprep.subr.mxu0 0.0
    %1578 = vmatpush1.xpose.msra.mxu0 0.0
    %1579 = vmatprep.subr.mxu0 0.0
    %1580 = vmatpush1.xpose.msra.mxu0 0.0
    %1581 = vmatprep.subr.mxu0 0.0
    %1582 = vmatpush1.xpose.msra.mxu0 0.0
    %1583 = vmatprep.subr.mxu0 0.0
    %1584 = vmatpush1.xpose.msra.mxu0 0.0
    %1585 = vmatprep.subr.mxu0 0.0
    %1586 = vmatpush1.xpose.msra.mxu0 0.0
    %1587 = vmatprep.subr.mxu0 0.0
    %1588 = vmatpush1.xpose.msra.mxu0 0.0
    %1589 = vmatprep.subr.mxu0 0.0
    %1590 = vmatpush1.xpose.msra.mxu0 0.0
    %1591 = vmatprep.subr.mxu0 0.0
    %1592 = vmatpush1.xpose.msra.mxu0 0.0
    %1593 = vmatprep.subr.mxu0 0.0
    %1594 = vmatpush1.xpose.msra.mxu0 0.0
    %1595 = vmatprep.subr.mxu0 0.0
    %1596 = vmatpush1.xpose.msra.mxu0 0.0
    %1597 = vmatprep.subr.mxu0 0.0
    %v1598 = vand.u32 %v1213, 4294901760
    %v1599 = vsub.f32 %v1213, %v1598
    %v1600 = vand.u32 %v1599, 4294901760
    %1601 = vmatpush1.xpose.msra.mxu0 %v1600
    %1602 = vmatprep.subr.mxu0 0.0
    %v1603 = vand.u32 %v1210, 4294901760
    %v1604 = vsub.f32 %v1210, %v1603
    %v1605 = vand.u32 %v1604, 4294901760
    %1606 = vmatpush1.xpose.msra.mxu0 %v1605
    %1607 = vmatprep.subr.mxu0 0.0
    %v1608 = vand.u32 %v1207, 4294901760
    %v1609 = vsub.f32 %v1207, %v1608
    %v1610 = vand.u32 %v1609, 4294901760
    %1611 = vmatpush1.xpose.msra.mxu0 %v1610
    %1612 = vmatprep.subr.mxu0 0.0
    %v1613 = vand.u32 %v1204, 4294901760
    %v1614 = vsub.f32 %v1204, %v1613
    %v1615 = vand.u32 %v1614, 4294901760
    %1616 = vmatpush1.xpose.msra.mxu0 %v1615
    %1617 = vmatprep.subr.mxu0 0.0
    %1618 = vmatpush2.xpose.msra.mxu0 0.0
    %1619 = vmatprep.subr.mxu0 0.0
    %1620 = vmatpush2.xpose.msra.mxu0 0.0
    %1621 = vmatprep.subr.mxu0 0.0
    %1622 = vmatpush2.xpose.msra.mxu0 0.0
    %1623 = vmatprep.subr.mxu0 0.0
    %1624 = vmatpush2.xpose.msra.mxu0 0.0
    %1625 = vmatprep.subr.mxu0 0.0
    %1626 = vmatpush2.xpose.msra.mxu0 0.0
    %1627 = vmatprep.subr.mxu0 0.0
    %1628 = vmatpush2.xpose.msra.mxu0 0.0
    %1629 = vmatprep.subr.mxu0 0.0
    %1630 = vmatpush2.xpose.msra.mxu0 0.0
    %1631 = vmatprep.subr.mxu0 0.0
    %1632 = vmatpush2.xpose.msra.mxu0 0.0
    %1633 = vmatprep.subr.mxu0 0.0
    %1634 = vmatpush2.xpose.msra.mxu0 0.0
    %1635 = vmatprep.subr.mxu0 0.0
    %1636 = vmatpush2.xpose.msra.mxu0 0.0
    %1637 = vmatprep.subr.mxu0 0.0
    %1638 = vmatpush2.xpose.msra.mxu0 0.0
    %1639 = vmatprep.subr.mxu0 0.0
    %1640 = vmatpush2.xpose.msra.mxu0 0.0
    %1641 = vmatprep.subr.mxu0 0.0
    %1642 = vmatpush2.xpose.msra.mxu0 0.0
    %1643 = vmatprep.subr.mxu0 0.0
    %1644 = vmatpush2.xpose.msra.mxu0 0.0
    %1645 = vmatprep.subr.mxu0 0.0
    %1646 = vmatpush2.xpose.msra.mxu0 0.0
    %1647 = vmatprep.subr.mxu0 0.0
    %1648 = vmatpush2.xpose.msra.mxu0 0.0
    %1649 = vmatprep.mubr.f32.mxu0 0.0
    %v1650 = vand.u32 %v104, 4294901760
    %1651 = vmatmul.mubr.f32.gmra.mxu0 %v1650
    %v1652 = vpop.f32.mrf.mxu0
    %v1653 = vadd.f32 %v1562, %v1652
    %v1654 = vpop.f32.mrf.mxu0
    %1655 = vmatprep.mubr.f32.mxu0 0.0
    %v1656 = vand.u32 %v107, 4294901760
    %1657 = vmatmul.mubr.f32.gmra.mxu0 %v1656
    %v1658 = vpop.f32.mrf.mxu0
    %v1659 = vadd.f32 %v1570, %v1658
    %v1660 = vpop.f32.mrf.mxu0
    %1661 = vdwg.mxu0
    %1662 = vmatprep.subr.mxu0 0.0
    %1663 = vmatpush1.xpose.msra.mxu0 0.0
    %1664 = vmatprep.subr.mxu0 0.0
    %1665 = vmatpush1.xpose.msra.mxu0 0.0
    %1666 = vmatprep.subr.mxu0 0.0
    %1667 = vmatpush1.xpose.msra.mxu0 0.0
    %1668 = vmatprep.subr.mxu0 0.0
    %1669 = vmatpush1.xpose.msra.mxu0 0.0
    %1670 = vmatprep.subr.mxu0 0.0
    %1671 = vmatpush1.xpose.msra.mxu0 0.0
    %1672 = vmatprep.subr.mxu0 0.0
    %1673 = vmatpush1.xpose.msra.mxu0 0.0
    %1674 = vmatprep.subr.mxu0 0.0
    %1675 = vmatpush1.xpose.msra.mxu0 0.0
    %1676 = vmatprep.subr.mxu0 0.0
    %1677 = vmatpush1.xpose.msra.mxu0 0.0
    %1678 = vmatprep.subr.mxu0 0.0
    %1679 = vmatpush1.xpose.msra.mxu0 0.0
    %1680 = vmatprep.subr.mxu0 0.0
    %1681 = vmatpush1.xpose.msra.mxu0 0.0
    %1682 = vmatprep.subr.mxu0 0.0
    %1683 = vmatpush1.xpose.msra.mxu0 0.0
    %1684 = vmatprep.subr.mxu0 0.0
    %1685 = vmatpush1.xpose.msra.mxu0 0.0
    %1686 = vmatprep.subr.mxu0 0.0
    %v1687 = vand.u32 %v1213, 4294901760
    %1688 = vmatpush1.xpose.msra.mxu0 %v1687
    %1689 = vmatprep.subr.mxu0 0.0
    %v1690 = vand.u32 %v1210, 4294901760
    %1691 = vmatpush1.xpose.msra.mxu0 %v1690
    %1692 = vmatprep.subr.mxu0 0.0
    %v1693 = vand.u32 %v1207, 4294901760
    %1694 = vmatpush1.xpose.msra.mxu0 %v1693
    %1695 = vmatprep.subr.mxu0 0.0
    %v1696 = vand.u32 %v1204, 4294901760
    %1697 = vmatpush1.xpose.msra.mxu0 %v1696
    %1698 = vmatprep.subr.mxu0 0.0
    %1699 = vmatpush2.xpose.msra.mxu0 0.0
    %1700 = vmatprep.subr.mxu0 0.0
    %1701 = vmatpush2.xpose.msra.mxu0 0.0
    %1702 = vmatprep.subr.mxu0 0.0
    %1703 = vmatpush2.xpose.msra.mxu0 0.0
    %1704 = vmatprep.subr.mxu0 0.0
    %1705 = vmatpush2.xpose.msra.mxu0 0.0
    %1706 = vmatprep.subr.mxu0 0.0
    %1707 = vmatpush2.xpose.msra.mxu0 0.0
    %1708 = vmatprep.subr.mxu0 0.0
    %1709 = vmatpush2.xpose.msra.mxu0 0.0
    %1710 = vmatprep.subr.mxu0 0.0
    %1711 = vmatpush2.xpose.msra.mxu0 0.0
    %1712 = vmatprep.subr.mxu0 0.0
    %1713 = vmatpush2.xpose.msra.mxu0 0.0
    %1714 = vmatprep.subr.mxu0 0.0
    %1715 = vmatpush2.xpose.msra.mxu0 0.0
    %1716 = vmatprep.subr.mxu0 0.0
    %1717 = vmatpush2.xpose.msra.mxu0 0.0
    %1718 = vmatprep.subr.mxu0 0.0
    %1719 = vmatpush2.xpose.msra.mxu0 0.0
    %1720 = vmatprep.subr.mxu0 0.0
    %1721 = vmatpush2.xpose.msra.mxu0 0.0
    %1722 = vmatprep.subr.mxu0 0.0
    %1723 = vmatpush2.xpose.msra.mxu0 0.0
    %1724 = vmatprep.subr.mxu0 0.0
    %1725 = vmatpush2.xpose.msra.mxu0 0.0
    %1726 = vmatprep.subr.mxu0 0.0
    %1727 = vmatpush2.xpose.msra.mxu0 0.0
    %1728 = vmatprep.subr.mxu0 0.0
    %1729 = vmatpush2.xpose.msra.mxu0 0.0
    %1730 = vmatprep.mubr.f32.mxu0 0.0
    %v1731 = vand.u32 %v104, 4294901760
    %1732 = vmatmul.mubr.f32.gmra.mxu0 %v1731
    %v1733 = vpop.f32.mrf.mxu0
    %v1734 = vadd.f32 %v1653, %v1733
    %v1735 = vpop.f32.mrf.mxu0
    %1736 = vmatprep.mubr.f32.mxu0 0.0
    %v1737 = vand.u32 %v107, 4294901760
    %1738 = vmatmul.mubr.f32.gmra.mxu0 %v1737
    %v1739 = vpop.f32.mrf.mxu0
    %v1740 = vadd.f32 %v1659, %v1739
    %v1741 = vpop.f32.mrf.mxu0
    %1742 = vdwg.mxu0
    %1743 = vst.msk [vmem:[%s7] sm:$0xff] %vm102, %v640
    %1744 = vst.msk [vmem:[%s7 + $0x8] sm:$0xff] %vm102, %v646
    %1747 = vrot.lane.b32.xlu0 %v1187, 32
    %v1748 = vpop.permute.xlu0 %1747
    %1749 = vrot.lane.b32.xlu0 %v1193, 32
    %v1750 = vpop.permute.xlu0 %1749
    %vm1753 = vcmask 523520
    %1754 = vst.msk [vmem:[%s7] sm:$0xff] %vm1753, %v1748
    %1755 = vst.msk [vmem:[%s7 + $0x8] sm:$0xff] %vm1753, %v1750
    %1758 = vrot.lane.b32.xlu0 %v1734, 64
    %v1759 = vpop.permute.xlu0 %1758
    %1760 = vrot.lane.b32.xlu0 %v1740, 64
    %v1761 = vpop.permute.xlu0 %1760
    %vm1764 = vcmask 785920
    %1765 = vst.msk [vmem:[%s7] sm:$0xff] %vm1764, %v1759
    %1766 = vst.msk [vmem:[%s7 + $0x8] sm:$0xff] %vm1764, %v1761
    // Predicated region
    $region46: #{bert_image_self_attention.2} parent=1 // pred_check
      _
    $region47: #{bert_image_self_attention.2} parent=1 // pred_check_branch
      %1768 = sbr.rel (0) target = $region49
    $region48: #{bert_image_self_attention.2} parent=1 // pred_region
      _
    $region49: #{bert_image_self_attention.2} parent=1 // pred_fallthru
      _
    // Predicated region
    $region50: #{bert_image_self_attention.2} parent=1 // pred_check
      _
    $region51: #{bert_image_self_attention.2} parent=1 // pred_check_branch
      %1770 = sbr.rel (0) target = $region53
    $region52: #{bert_image_self_attention.2} parent=1 // pred_region
      _
    $region53: #{bert_image_self_attention.2} parent=1 // pred_fallthru
      _
    %1771 = vsyncpa [#allocation3], 1
    %1772 = vsyncpa [#allocation5], 1
    %1773 = vsyncpa [#allocation8], 1

// kernel: bert_image_self_attention.3
$region0: #{bert_image_self_attention.3}
  #allocation0 [shape = 'u32[]', space=smem, size = 0x4, offset = 0x4, fixed_abs, tag = 'smem constant byte address 0x4 - core index']
  #allocation1 [shape = 'u32[144,128]{1,0:T(1,128)}', space=vmem, size = 0x12000, scoped, tag = 'internal scratch']
  %s0 = inlined_call_operand.vmem [shape: f32[2,8,96], index: 0, kind: input, shape index: {}]
  %s1 = inlined_call_operand.vmem [shape: f32[2,1,8], index: 1, kind: input, shape index: {}]
  %s2 = inlined_call_operand.hbm [shape: f32[2,8,32], index: 2, kind: output, shape index: {}]
  %s3 = sld [smem:[#allocation0]]
  $region41: #{bert_image_self_attention.3} parent=0
    _
  %s5 = ssub.s32 1, %s3
  %s6 = scalar_select 0, %s5, %s3
  $region1: #{bert_image_self_attention.3} parent=0
    #allocation2 [shape = 'u8[8192]{0}', space=vmem, size = 0x2000, scoped, tag = 'output window, operand 0']
    #allocation3 [shape = 's32[2]{0}', space=sflag, size = 0x8, scoped, tag = 'scoped memory for bert_image_self_attention.3']
    %7 = vsyncpa [#allocation3], 0
    %s8 = scalar_lea.sflag [#allocation3], 1
    %9 = vsyncpa %s8, 0
    loop: start=0, step=1, limit=4
    $region2: #{bert_image_self_attention.3} parent=1 // loop_pre_header
      _
    $region3: #{bert_image_self_attention.3} parent=1 // loop_header
      %s11 = sphi 0, %s15
      %p12 = scmp.ge.s32.totalorder %s11, 4
      %s21 = sphi 0, %s23
      %s24 = sphi 0, %s21
      %s25 = sphi 0, %s24
      %s41 = sphi 0, %s25
      %s47 = sphi 0, %s49
      %s50 = sphi 0, %s47
      %s51 = sphi 0, %s50
      %s67 = sphi 0, %s51
      %s73 = sphi 0, %s75
      %s76 = sphi 0, %s73
      %s77 = sphi 0, %s76
      %s93 = sphi 0, %s77
    $region4: #{bert_image_self_attention.3} parent=1 // loop_header_branch
      %14 = sbr.rel (%p12) target = $region8
    $region5: #{bert_image_self_attention.3} parent=1 // loop_body
      %s16 = ssub.s32 %s11, 1
      %s17 = ssub.s32 %s11, 2
      %s18 = sadd.s32 %s11, 1
      %s19 = ssub.s32 %s11, %s18
      %p20 = scmp.eq.s32.totalorder %s19, 0
      %s22 = sadd.s32 %s21, 1
      %s23 = scalar_select %p20, %s21, %s22
      %p26 = pneg %p20
      %p27 = scmp.eq.s32.totalorder %s11, 1
      %p28 = por %p26, %p27
      %p29 = scmp.ne.s32.totalorder %s21, %s24
      %p30 = scmp.eq.s32.totalorder %s11, 0
      %p31 = por %p29, %p30
      %p32 = scmp.ne.s32.totalorder %s21, %s24
      %p33 = scmp.eq.s32.totalorder %s16, 1
      %p34 = por %p32, %p33
      %p35 = scmp.ne.s32.totalorder %s24, %s25
      %p36 = scmp.eq.s32.totalorder %s16, 0
      %p37 = por %p35, %p36
      %p38 = scmp.ne.s32.totalorder %s24, %s25
      %p39 = scmp.eq.s32.totalorder %s17, 1
      %p40 = por %p38, %p39
      %p42 = scmp.ne.s32.totalorder %s25, %s41
      %p43 = scmp.eq.s32.totalorder %s17, 0
      %p44 = por %p42, %p43
      %s45 = ssub.s32 %s11, %s18
      %p46 = scmp.eq.s32.totalorder %s45, 0
      %s48 = sadd.s32 %s47, 1
      %s49 = scalar_select %p46, %s47, %s48
      %p52 = pneg %p46
      %p53 = scmp.eq.s32.totalorder %s11, 1
      %p54 = por %p52, %p53
      %p55 = scmp.ne.s32.totalorder %s47, %s50
      %p56 = scmp.eq.s32.totalorder %s11, 0
      %p57 = por %p55, %p56
      %p58 = scmp.ne.s32.totalorder %s47, %s50
      %p59 = scmp.eq.s32.totalorder %s16, 1
      %p60 = por %p58, %p59
      %p61 = scmp.ne.s32.totalorder %s50, %s51
      %p62 = scmp.eq.s32.totalorder %s16, 0
      %p63 = por %p61, %p62
      %p64 = scmp.ne.s32.totalorder %s50, %s51
      %p65 = scmp.eq.s32.totalorder %s17, 1
      %p66 = por %p64, %p65
      %p68 = scmp.ne.s32.totalorder %s51, %s67
      %p69 = scmp.eq.s32.totalorder %s17, 0
      %p70 = por %p68, %p69
      %s71 = ssub.s32 %s11, %s18
      %p72 = scmp.eq.s32.totalorder %s71, 0
      %s74 = sadd.s32 %s73, 1
      %s75 = scalar_select %p72, %s73, %s74
      %p78 = pneg %p72
      %p79 = scmp.eq.s32.totalorder %s11, 1
      %p80 = por %p78, %p79
      %p81 = scmp.ne.s32.totalorder %s73, %s76
      %p82 = scmp.eq.s32.totalorder %s11, 0
      %p83 = por %p81, %p82
      %p84 = scmp.ne.s32.totalorder %s73, %s76
      %p85 = scmp.eq.s32.totalorder %s16, 1
      %p86 = por %p84, %p85
      %p87 = scmp.ne.s32.totalorder %s76, %s77
      %p88 = scmp.eq.s32.totalorder %s16, 0
      %p89 = por %p87, %p88
      %p90 = scmp.ne.s32.totalorder %s76, %s77
      %p91 = scmp.eq.s32.totalorder %s17, 1
      %p92 = por %p90, %p91
      %p94 = scmp.ne.s32.totalorder %s77, %s93
      %p95 = scmp.eq.s32.totalorder %s17, 0
      %p96 = por %p94, %p95
      %p97 = scmp.le.s32.totalorder 1, %s11
      %p98 = scmp.lt.s32.totalorder %s11, 3
      %p99 = pnand %p97, %p98
      %p100 = pneg %p99
      // Predicated region
      $region9: #{bert_image_self_attention.3} parent=5 // pred_check
        _
      $region10: #{bert_image_self_attention.3} parent=5 // pred_check_branch
        %102 = sbr.rel (%p99) target = $region12
      $region11: #{bert_image_self_attention.3} parent=5 // pred_region
        %s103 = ssub.s32 %s11, 1
      $region12: #{bert_image_self_attention.3} parent=5 // pred_fallthru
        _
      %p104 = scmp.lt.s32.totalorder %s11, 2
      // Predicated region
      $region13: #{bert_image_self_attention.3} parent=5 // pred_check
        %p105 = pneg %p104
      $region14: #{bert_image_self_attention.3} parent=5 // pred_check_branch
        %107 = sbr.rel (%p105) target = $region16
      $region15: #{bert_image_self_attention.3} parent=5 // pred_region
        // Predicated region
        $region17: #{bert_image_self_attention.3} parent=15 // pred_check
          %p108 = pneg %p31
        $region18: #{bert_image_self_attention.3} parent=15 // pred_check_branch
          %110 = sbr.rel (%p108) target = $region20
        $region19: #{bert_image_self_attention.3} parent=15 // pred_region
          %p111 = scmp.lt.s32.totalorder %s11, 1
          %s112 = scalar_select %p111, %s11, 1
          %s113 = smul.addr %s112, 8
          %s114 = scalar_lea.vmem %s0, %s113
        $region20: #{bert_image_self_attention.3} parent=15 // pred_fallthru
          _
        // Predicated region
        $region21: #{bert_image_self_attention.3} parent=15 // pred_check
          %p115 = pneg %p57
        $region22: #{bert_image_self_attention.3} parent=15 // pred_check_branch
          %117 = sbr.rel (%p115) target = $region24
        $region23: #{bert_image_self_attention.3} parent=15 // pred_region
          %p118 = scmp.lt.s32.totalorder %s11, 1
          %s119 = scalar_select %p118, %s11, 1
          %s120 = scalar_lea.vmem %s1, %s119
        $region24: #{bert_image_self_attention.3} parent=15 // pred_fallthru
          _
      $region16: #{bert_image_self_attention.3} parent=5 // pred_fallthru
        _
      %p121 = scmp.le.s32.totalorder 1, %s11
      %p122 = scmp.lt.s32.totalorder %s11, 3
      %p123 = pnand %p121, %p122
      %p124 = pneg %p123
      // Predicated region
      $region25: #{bert_image_self_attention.3} parent=5 // pred_check
        _
      $region26: #{bert_image_self_attention.3} parent=5 // pred_check_branch
        %126 = sbr.rel (%p123) target = $region28
      $region27: #{bert_image_self_attention.3} parent=5 // pred_region
        %s127 = ssub.s32 %s11, 1
        %p128 = scmp.lt.s32.totalorder %s16, 1
        %s129 = scalar_select %p128, %s16, 1
        %s130 = smul.addr %s129, 8
        %s131 = scalar_lea.vmem %s0, %s130
        %p132 = pneg %p37
        %p133 = pneg %p34
        %p134 = scmp.lt.s32.totalorder %s16, 1
        %s135 = scalar_select %p134, %s16, 1
        %s136 = scalar_lea.vmem %s1, %s135
        %p137 = pneg %p63
        %p138 = pneg %p60
        %p139 = pneg %p89
        %p140 = pneg %p86
        %s141 = sand.u32 %s76, 1
        %s142 = scalar_lea.sflag [#allocation3], %s141
        %s143 = sand.u32 %s76, 1
        %s144 = smul.addr %s143, 8
        %s145 = scalar_lea.vmem [#allocation2], %s144
        %p146 = scmp.lt.s32.totalorder %s16, 1
        %s147 = scalar_select %p146, %s16, 1
        %s148 = smul.addr %s147, 8
        %s149 = scalar_lea.vmem %s0, %s148
        %p150 = scmp.lt.s32.totalorder %s16, 1
        %s151 = scalar_select %p150, %s16, 1
        %s152 = scalar_lea.vmem %s1, %s151
        %v153 = vld [vmem:[%s149] sm:$0xff]
        %v154 = vld [vmem:[%s152] sm:$0x1]
        %156 = vrot.lane.b32.xlu0 %v153, 96
        %v157 = vpop.permute.xlu0 %156
        %vm158 = vcmask 64512
        %v159 = vsel %vm158, %v153, 0
        %v161 = vsel %vm158, %v157, 0
        %163 = vmatprep.subr.mxu0 0.0
        %164 = vmatpush1.xpose.msra.mxu0 0.0
        %165 = vmatprep.subr.mxu0 0.0
        %166 = vmatpush1.xpose.msra.mxu0 0.0
        %167 = vmatprep.subr.mxu0 0.0
        %168 = vmatpush1.xpose.msra.mxu0 0.0
        %169 = vmatprep.subr.mxu0 0.0
        %170 = vmatpush1.xpose.msra.mxu0 0.0
        %171 = vmatprep.subr.mxu0 0.0
        %172 = vmatpush1.xpose.msra.mxu0 0.0
        %173 = vmatprep.subr.mxu0 0.0
        %174 = vmatpush1.xpose.msra.mxu0 0.0
        %175 = vmatprep.subr.mxu0 0.0
        %176 = vmatpush1.xpose.msra.mxu0 0.0
        %177 = vmatprep.subr.mxu0 0.0
        %178 = vmatpush1.xpose.msra.mxu0 0.0
        %179 = vmatprep.subr.mxu0 0.0
        %180 = vmatpush1.xpose.msra.mxu0 0.0
        %181 = vmatprep.subr.mxu0 0.0
        %182 = vmatpush1.xpose.msra.mxu0 0.0
        %183 = vmatprep.subr.mxu0 0.0
        %184 = vmatpush1.xpose.msra.mxu0 0.0
        %185 = vmatprep.subr.mxu0 0.0
        %186 = vmatpush1.xpose.msra.mxu0 0.0
        %187 = vmatprep.subr.mxu0 0.0
        %188 = vmatpush1.xpose.msra.mxu0 0.0
        %189 = vmatprep.subr.mxu0 0.0
        %190 = vmatpush1.xpose.msra.mxu0 0.0
        %191 = vmatprep.subr.mxu0 0.0
        %192 = vmatpush1.xpose.msra.mxu0 0.0
        %193 = vmatprep.subr.mxu0 0.0
        %v194 = vand.u32 %v161, 4294901760
        %195 = vmatpush1.xpose.msra.mxu0 %v194
        %196 = vmatprep.subr.mxu0 0.0
        %197 = vmatpush2.xpose.msra.mxu0 0.0
        %198 = vmatprep.subr.mxu0 0.0
        %199 = vmatpush2.xpose.msra.mxu0 0.0
        %200 = vmatprep.subr.mxu0 0.0
        %201 = vmatpush2.xpose.msra.mxu0 0.0
        %202 = vmatprep.subr.mxu0 0.0
        %203 = vmatpush2.xpose.msra.mxu0 0.0
        %204 = vmatprep.subr.mxu0 0.0
        %205 = vmatpush2.xpose.msra.mxu0 0.0
        %206 = vmatprep.subr.mxu0 0.0
        %207 = vmatpush2.xpose.msra.mxu0 0.0
        %208 = vmatprep.subr.mxu0 0.0
        %209 = vmatpush2.xpose.msra.mxu0 0.0
        %210 = vmatprep.subr.mxu0 0.0
        %211 = vmatpush2.xpose.msra.mxu0 0.0
        %212 = vmatprep.subr.mxu0 0.0
        %213 = vmatpush2.xpose.msra.mxu0 0.0
        %214 = vmatprep.subr.mxu0 0.0
        %215 = vmatpush2.xpose.msra.mxu0 0.0
        %216 = vmatprep.subr.mxu0 0.0
        %217 = vmatpush2.xpose.msra.mxu0 0.0
        %218 = vmatprep.subr.mxu0 0.0
        %219 = vmatpush2.xpose.msra.mxu0 0.0
        %220 = vmatprep.subr.mxu0 0.0
        %221 = vmatpush2.xpose.msra.mxu0 0.0
        %222 = vmatprep.subr.mxu0 0.0
        %223 = vmatpush2.xpose.msra.mxu0 0.0
        %224 = vmatprep.subr.mxu0 0.0
        %225 = vmatpush2.xpose.msra.mxu0 0.0
        %226 = vmatprep.subr.mxu0 0.0
        %227 = vmatpush2.xpose.msra.mxu0 0.0
        %228 = vmatprep.mubr.f32.mxu0 0.0
        %v229 = vand.u32 %v159, 4294901760
        %v230 = vsub.f32 %v159, %v229
        %v231 = vand.u32 %v230, 4294901760
        %v232 = vsub.f32 %v230, %v231
        %v233 = vand.u32 %v232, 4294901760
        %234 = vmatmul.mubr.f32.gmra.mxu0 %v233
        %v235 = vpop.f32.mrf.mxu0
        %v236 = vadd.f32 0.0, %v235
        %v237 = vpop.f32.mrf.mxu0
        %238 = vdwg.mxu0
        %239 = vmatprep.subr.mxu0 0.0
        %240 = vmatpush1.xpose.msra.mxu0 0.0
        %241 = vmatprep.subr.mxu0 0.0
        %242 = vmatpush1.xpose.msra.mxu0 0.0
        %243 = vmatprep.subr.mxu0 0.0
        %244 = vmatpush1.xpose.msra.mxu0 0.0
        %245 = vmatprep.subr.mxu0 0.0
        %246 = vmatpush1.xpose.msra.mxu0 0.0
        %247 = vmatprep.subr.mxu0 0.0
        %248 = vmatpush1.xpose.msra.mxu0 0.0
        %249 = vmatprep.subr.mxu0 0.0
        %250 = vmatpush1.xpose.msra.mxu0 0.0
        %251 = vmatprep.subr.mxu0 0.0
        %252 = vmatpush1.xpose.msra.mxu0 0.0
        %253 = vmatprep.subr.mxu0 0.0
        %254 = vmatpush1.xpose.msra.mxu0 0.0
        %255 = vmatprep.subr.mxu0 0.0
        %256 = vmatpush1.xpose.msra.mxu0 0.0
        %257 = vmatprep.subr.mxu0 0.0
        %258 = vmatpush1.xpose.msra.mxu0 0.0
        %259 = vmatprep.subr.mxu0 0.0
        %260 = vmatpush1.xpose.msra.mxu0 0.0
        %261 = vmatprep.subr.mxu0 0.0
        %262 = vmatpush1.xpose.msra.mxu0 0.0
        %263 = vmatprep.subr.mxu0 0.0
        %264 = vmatpush1.xpose.msra.mxu0 0.0
        %265 = vmatprep.subr.mxu0 0.0
        %266 = vmatpush1.xpose.msra.mxu0 0.0
        %267 = vmatprep.subr.mxu0 0.0
        %268 = vmatpush1.xpose.msra.mxu0 0.0
        %269 = vmatprep.subr.mxu0 0.0
        %v270 = vand.u32 %v161, 4294901760
        %v271 = vsub.f32 %v161, %v270
        %v272 = vand.u32 %v271, 4294901760
        %v273 = vsub.f32 %v271, %v272
        %v274 = vand.u32 %v273, 4294901760
        %275 = vmatpush1.xpose.msra.mxu0 %v274
        %276 = vmatprep.subr.mxu0 0.0
        %277 = vmatpush2.xpose.msra.mxu0 0.0
        %278 = vmatprep.subr.mxu0 0.0
        %279 = vmatpush2.xpose.msra.mxu0 0.0
        %280 = vmatprep.subr.mxu0 0.0
        %281 = vmatpush2.xpose.msra.mxu0 0.0
        %282 = vmatprep.subr.mxu0 0.0
        %283 = vmatpush2.xpose.msra.mxu0 0.0
        %284 = vmatprep.subr.mxu0 0.0
        %285 = vmatpush2.xpose.msra.mxu0 0.0
        %286 = vmatprep.subr.mxu0 0.0
        %287 = vmatpush2.xpose.msra.mxu0 0.0
        %288 = vmatprep.subr.mxu0 0.0
        %289 = vmatpush2.xpose.msra.mxu0 0.0
        %290 = vmatprep.subr.mxu0 0.0
        %291 = vmatpush2.xpose.msra.mxu0 0.0
        %292 = vmatprep.subr.mxu0 0.0
        %293 = vmatpush2.xpose.msra.mxu0 0.0
        %294 = vmatprep.subr.mxu0 0.0
        %295 = vmatpush2.xpose.msra.mxu0 0.0
        %296 = vmatprep.subr.mxu0 0.0
        %297 = vmatpush2.xpose.msra.mxu0 0.0
        %298 = vmatprep.subr.mxu0 0.0
        %299 = vmatpush2.xpose.msra.mxu0 0.0
        %300 = vmatprep.subr.mxu0 0.0
        %301 = vmatpush2.xpose.msra.mxu0 0.0
        %302 = vmatprep.subr.mxu0 0.0
        %303 = vmatpush2.xpose.msra.mxu0 0.0
        %304 = vmatprep.subr.mxu0 0.0
        %305 = vmatpush2.xpose.msra.mxu0 0.0
        %306 = vmatprep.subr.mxu0 0.0
        %307 = vmatpush2.xpose.msra.mxu0 0.0
        %308 = vmatprep.mubr.f32.mxu0 0.0
        %v309 = vand.u32 %v159, 4294901760
        %310 = vmatmul.mubr.f32.gmra.mxu0 %v309
        %v311 = vpop.f32.mrf.mxu0
        %v312 = vadd.f32 %v236, %v311
        %v313 = vpop.f32.mrf.mxu0
        %314 = vdwg.mxu0
        %315 = vmatprep.subr.mxu0 0.0
        %316 = vmatpush1.xpose.msra.mxu0 0.0
        %317 = vmatprep.subr.mxu0 0.0
        %318 = vmatpush1.xpose.msra.mxu0 0.0
        %319 = vmatprep.subr.mxu0 0.0
        %320 = vmatpush1.xpose.msra.mxu0 0.0
        %321 = vmatprep.subr.mxu0 0.0
        %322 = vmatpush1.xpose.msra.mxu0 0.0
        %323 = vmatprep.subr.mxu0 0.0
        %324 = vmatpush1.xpose.msra.mxu0 0.0
        %325 = vmatprep.subr.mxu0 0.0
        %326 = vmatpush1.xpose.msra.mxu0 0.0
        %327 = vmatprep.subr.mxu0 0.0
        %328 = vmatpush1.xpose.msra.mxu0 0.0
        %329 = vmatprep.subr.mxu0 0.0
        %330 = vmatpush1.xpose.msra.mxu0 0.0
        %331 = vmatprep.subr.mxu0 0.0
        %332 = vmatpush1.xpose.msra.mxu0 0.0
        %333 = vmatprep.subr.mxu0 0.0
        %334 = vmatpush1.xpose.msra.mxu0 0.0
        %335 = vmatprep.subr.mxu0 0.0
        %336 = vmatpush1.xpose.msra.mxu0 0.0
        %337 = vmatprep.subr.mxu0 0.0
        %338 = vmatpush1.xpose.msra.mxu0 0.0
        %339 = vmatprep.subr.mxu0 0.0
        %340 = vmatpush1.xpose.msra.mxu0 0.0
        %341 = vmatprep.subr.mxu0 0.0
        %342 = vmatpush1.xpose.msra.mxu0 0.0
        %343 = vmatprep.subr.mxu0 0.0
        %344 = vmatpush1.xpose.msra.mxu0 0.0
        %345 = vmatprep.subr.mxu0 0.0
        %v346 = vand.u32 %v161, 4294901760
        %v347 = vsub.f32 %v161, %v346
        %348 = vmatpush1.xpose.msra.mxu0 %v347
        %349 = vmatprep.subr.mxu0 0.0
        %350 = vmatpush2.xpose.msra.mxu0 0.0
        %351 = vmatprep.subr.mxu0 0.0
        %352 = vmatpush2.xpose.msra.mxu0 0.0
        %353 = vmatprep.subr.mxu0 0.0
        %354 = vmatpush2.xpose.msra.mxu0 0.0
        %355 = vmatprep.subr.mxu0 0.0
        %356 = vmatpush2.xpose.msra.mxu0 0.0
        %357 = vmatprep.subr.mxu0 0.0
        %358 = vmatpush2.xpose.msra.mxu0 0.0
        %359 = vmatprep.subr.mxu0 0.0
        %360 = vmatpush2.xpose.msra.mxu0 0.0
        %361 = vmatprep.subr.mxu0 0.0
        %362 = vmatpush2.xpose.msra.mxu0 0.0
        %363 = vmatprep.subr.mxu0 0.0
        %364 = vmatpush2.xpose.msra.mxu0 0.0
        %365 = vmatprep.subr.mxu0 0.0
        %366 = vmatpush2.xpose.msra.mxu0 0.0
        %367 = vmatprep.subr.mxu0 0.0
        %368 = vmatpush2.xpose.msra.mxu0 0.0
        %369 = vmatprep.subr.mxu0 0.0
        %370 = vmatpush2.xpose.msra.mxu0 0.0
        %371 = vmatprep.subr.mxu0 0.0
        %372 = vmatpush2.xpose.msra.mxu0 0.0
        %373 = vmatprep.subr.mxu0 0.0
        %374 = vmatpush2.xpose.msra.mxu0 0.0
        %375 = vmatprep.subr.mxu0 0.0
        %376 = vmatpush2.xpose.msra.mxu0 0.0
        %377 = vmatprep.subr.mxu0 0.0
        %378 = vmatpush2.xpose.msra.mxu0 0.0
        %379 = vmatprep.subr.mxu0 0.0
        %380 = vmatpush2.xpose.msra.mxu0 0.0
        %381 = vmatprep.mubr.f32.mxu0 0.0
        %v382 = vand.u32 %v159, 4294901760
        %v383 = vsub.f32 %v159, %v382
        %384 = vmatmul.mubr.f32.gmra.mxu0 %v383
        %v385 = vpop.f32.mrf.mxu0
        %v386 = vadd.f32 %v312, %v385
        %v387 = vpop.f32.mrf.mxu0
        %388 = vdwg.mxu0
        %389 = vmatprep.subr.mxu0 0.0
        %390 = vmatpush1.xpose.msra.mxu0 0.0
        %391 = vmatprep.subr.mxu0 0.0
        %392 = vmatpush1.xpose.msra.mxu0 0.0
        %393 = vmatprep.subr.mxu0 0.0
        %394 = vmatpush1.xpose.msra.mxu0 0.0
        %395 = vmatprep.subr.mxu0 0.0
        %396 = vmatpush1.xpose.msra.mxu0 0.0
        %397 = vmatprep.subr.mxu0 0.0
        %398 = vmatpush1.xpose.msra.mxu0 0.0
        %399 = vmatprep.subr.mxu0 0.0
        %400 = vmatpush1.xpose.msra.mxu0 0.0
        %401 = vmatprep.subr.mxu0 0.0
        %402 = vmatpush1.xpose.msra.mxu0 0.0
        %403 = vmatprep.subr.mxu0 0.0
        %404 = vmatpush1.xpose.msra.mxu0 0.0
        %405 = vmatprep.subr.mxu0 0.0
        %406 = vmatpush1.xpose.msra.mxu0 0.0
        %407 = vmatprep.subr.mxu0 0.0
        %408 = vmatpush1.xpose.msra.mxu0 0.0
        %409 = vmatprep.subr.mxu0 0.0
        %410 = vmatpush1.xpose.msra.mxu0 0.0
        %411 = vmatprep.subr.mxu0 0.0
        %412 = vmatpush1.xpose.msra.mxu0 0.0
        %413 = vmatprep.subr.mxu0 0.0
        %414 = vmatpush1.xpose.msra.mxu0 0.0
        %415 = vmatprep.subr.mxu0 0.0
        %416 = vmatpush1.xpose.msra.mxu0 0.0
        %417 = vmatprep.subr.mxu0 0.0
        %418 = vmatpush1.xpose.msra.mxu0 0.0
        %419 = vmatprep.subr.mxu0 0.0
        %v420 = vand.u32 %v161, 4294901760
        %421 = vmatpush1.xpose.msra.mxu0 %v420
        %422 = vmatprep.subr.mxu0 0.0
        %423 = vmatpush2.xpose.msra.mxu0 0.0
        %424 = vmatprep.subr.mxu0 0.0
        %425 = vmatpush2.xpose.msra.mxu0 0.0
        %426 = vmatprep.subr.mxu0 0.0
        %427 = vmatpush2.xpose.msra.mxu0 0.0
        %428 = vmatprep.subr.mxu0 0.0
        %429 = vmatpush2.xpose.msra.mxu0 0.0
        %430 = vmatprep.subr.mxu0 0.0
        %431 = vmatpush2.xpose.msra.mxu0 0.0
        %432 = vmatprep.subr.mxu0 0.0
        %433 = vmatpush2.xpose.msra.mxu0 0.0
        %434 = vmatprep.subr.mxu0 0.0
        %435 = vmatpush2.xpose.msra.mxu0 0.0
        %436 = vmatprep.subr.mxu0 0.0
        %437 = vmatpush2.xpose.msra.mxu0 0.0
        %438 = vmatprep.subr.mxu0 0.0
        %439 = vmatpush2.xpose.msra.mxu0 0.0
        %440 = vmatprep.subr.mxu0 0.0
        %441 = vmatpush2.xpose.msra.mxu0 0.0
        %442 = vmatprep.subr.mxu0 0.0
        %443 = vmatpush2.xpose.msra.mxu0 0.0
        %444 = vmatprep.subr.mxu0 0.0
        %445 = vmatpush2.xpose.msra.mxu0 0.0
        %446 = vmatprep.subr.mxu0 0.0
        %447 = vmatpush2.xpose.msra.mxu0 0.0
        %448 = vmatprep.subr.mxu0 0.0
        %449 = vmatpush2.xpose.msra.mxu0 0.0
        %450 = vmatprep.subr.mxu0 0.0
        %451 = vmatpush2.xpose.msra.mxu0 0.0
        %452 = vmatprep.subr.mxu0 0.0
        %453 = vmatpush2.xpose.msra.mxu0 0.0
        %454 = vmatprep.mubr.f32.mxu0 0.0
        %v455 = vand.u32 %v159, 4294901760
        %v456 = vsub.f32 %v159, %v455
        %v457 = vand.u32 %v456, 4294901760
        %458 = vmatmul.mubr.f32.gmra.mxu0 %v457
        %v459 = vpop.f32.mrf.mxu0
        %v460 = vadd.f32 %v386, %v459
        %v461 = vpop.f32.mrf.mxu0
        %462 = vdwg.mxu0
        %463 = vmatprep.subr.mxu0 0.0
        %464 = vmatpush1.xpose.msra.mxu0 0.0
        %465 = vmatprep.subr.mxu0 0.0
        %466 = vmatpush1.xpose.msra.mxu0 0.0
        %467 = vmatprep.subr.mxu0 0.0
        %468 = vmatpush1.xpose.msra.mxu0 0.0
        %469 = vmatprep.subr.mxu0 0.0
        %470 = vmatpush1.xpose.msra.mxu0 0.0
        %471 = vmatprep.subr.mxu0 0.0
        %472 = vmatpush1.xpose.msra.mxu0 0.0
        %473 = vmatprep.subr.mxu0 0.0
        %474 = vmatpush1.xpose.msra.mxu0 0.0
        %475 = vmatprep.subr.mxu0 0.0
        %476 = vmatpush1.xpose.msra.mxu0 0.0
        %477 = vmatprep.subr.mxu0 0.0
        %478 = vmatpush1.xpose.msra.mxu0 0.0
        %479 = vmatprep.subr.mxu0 0.0
        %480 = vmatpush1.xpose.msra.mxu0 0.0
        %481 = vmatprep.subr.mxu0 0.0
        %482 = vmatpush1.xpose.msra.mxu0 0.0
        %483 = vmatprep.subr.mxu0 0.0
        %484 = vmatpush1.xpose.msra.mxu0 0.0
        %485 = vmatprep.subr.mxu0 0.0
        %486 = vmatpush1.xpose.msra.mxu0 0.0
        %487 = vmatprep.subr.mxu0 0.0
        %488 = vmatpush1.xpose.msra.mxu0 0.0
        %489 = vmatprep.subr.mxu0 0.0
        %490 = vmatpush1.xpose.msra.mxu0 0.0
        %491 = vmatprep.subr.mxu0 0.0
        %492 = vmatpush1.xpose.msra.mxu0 0.0
        %493 = vmatprep.subr.mxu0 0.0
        %v494 = vand.u32 %v161, 4294901760
        %v495 = vsub.f32 %v161, %v494
        %v496 = vand.u32 %v495, 4294901760
        %497 = vmatpush1.xpose.msra.mxu0 %v496
        %498 = vmatprep.subr.mxu0 0.0
        %499 = vmatpush2.xpose.msra.mxu0 0.0
        %500 = vmatprep.subr.mxu0 0.0
        %501 = vmatpush2.xpose.msra.mxu0 0.0
        %502 = vmatprep.subr.mxu0 0.0
        %503 = vmatpush2.xpose.msra.mxu0 0.0
        %504 = vmatprep.subr.mxu0 0.0
        %505 = vmatpush2.xpose.msra.mxu0 0.0
        %506 = vmatprep.subr.mxu0 0.0
        %507 = vmatpush2.xpose.msra.mxu0 0.0
        %508 = vmatprep.subr.mxu0 0.0
        %509 = vmatpush2.xpose.msra.mxu0 0.0
        %510 = vmatprep.subr.mxu0 0.0
        %511 = vmatpush2.xpose.msra.mxu0 0.0
        %512 = vmatprep.subr.mxu0 0.0
        %513 = vmatpush2.xpose.msra.mxu0 0.0
        %514 = vmatprep.subr.mxu0 0.0
        %515 = vmatpush2.xpose.msra.mxu0 0.0
        %516 = vmatprep.subr.mxu0 0.0
        %517 = vmatpush2.xpose.msra.mxu0 0.0
        %518 = vmatprep.subr.mxu0 0.0
        %519 = vmatpush2.xpose.msra.mxu0 0.0
        %520 = vmatprep.subr.mxu0 0.0
        %521 = vmatpush2.xpose.msra.mxu0 0.0
        %522 = vmatprep.subr.mxu0 0.0
        %523 = vmatpush2.xpose.msra.mxu0 0.0
        %524 = vmatprep.subr.mxu0 0.0
        %525 = vmatpush2.xpose.msra.mxu0 0.0
        %526 = vmatprep.subr.mxu0 0.0
        %527 = vmatpush2.xpose.msra.mxu0 0.0
        %528 = vmatprep.subr.mxu0 0.0
        %529 = vmatpush2.xpose.msra.mxu0 0.0
        %530 = vmatprep.mubr.f32.mxu0 0.0
        %v531 = vand.u32 %v159, 4294901760
        %532 = vmatmul.mubr.f32.gmra.mxu0 %v531
        %v533 = vpop.f32.mrf.mxu0
        %v534 = vadd.f32 %v460, %v533
        %v535 = vpop.f32.mrf.mxu0
        %536 = vdwg.mxu0
        %537 = vmatprep.subr.mxu0 0.0
        %538 = vmatpush1.xpose.msra.mxu0 0.0
        %539 = vmatprep.subr.mxu0 0.0
        %540 = vmatpush1.xpose.msra.mxu0 0.0
        %541 = vmatprep.subr.mxu0 0.0
        %542 = vmatpush1.xpose.msra.mxu0 0.0
        %543 = vmatprep.subr.mxu0 0.0
        %544 = vmatpush1.xpose.msra.mxu0 0.0
        %545 = vmatprep.subr.mxu0 0.0
        %546 = vmatpush1.xpose.msra.mxu0 0.0
        %547 = vmatprep.subr.mxu0 0.0
        %548 = vmatpush1.xpose.msra.mxu0 0.0
        %549 = vmatprep.subr.mxu0 0.0
        %550 = vmatpush1.xpose.msra.mxu0 0.0
        %551 = vmatprep.subr.mxu0 0.0
        %552 = vmatpush1.xpose.msra.mxu0 0.0
        %553 = vmatprep.subr.mxu0 0.0
        %554 = vmatpush1.xpose.msra.mxu0 0.0
        %555 = vmatprep.subr.mxu0 0.0
        %556 = vmatpush1.xpose.msra.mxu0 0.0
        %557 = vmatprep.subr.mxu0 0.0
        %558 = vmatpush1.xpose.msra.mxu0 0.0
        %559 = vmatprep.subr.mxu0 0.0
        %560 = vmatpush1.xpose.msra.mxu0 0.0
        %561 = vmatprep.subr.mxu0 0.0
        %562 = vmatpush1.xpose.msra.mxu0 0.0
        %563 = vmatprep.subr.mxu0 0.0
        %564 = vmatpush1.xpose.msra.mxu0 0.0
        %565 = vmatprep.subr.mxu0 0.0
        %566 = vmatpush1.xpose.msra.mxu0 0.0
        %567 = vmatprep.subr.mxu0 0.0
        %v568 = vand.u32 %v161, 4294901760
        %569 = vmatpush1.xpose.msra.mxu0 %v568
        %570 = vmatprep.subr.mxu0 0.0
        %571 = vmatpush2.xpose.msra.mxu0 0.0
        %572 = vmatprep.subr.mxu0 0.0
        %573 = vmatpush2.xpose.msra.mxu0 0.0
        %574 = vmatprep.subr.mxu0 0.0
        %575 = vmatpush2.xpose.msra.mxu0 0.0
        %576 = vmatprep.subr.mxu0 0.0
        %577 = vmatpush2.xpose.msra.mxu0 0.0
        %578 = vmatprep.subr.mxu0 0.0
        %579 = vmatpush2.xpose.msra.mxu0 0.0
        %580 = vmatprep.subr.mxu0 0.0
        %581 = vmatpush2.xpose.msra.mxu0 0.0
        %582 = vmatprep.subr.mxu0 0.0
        %583 = vmatpush2.xpose.msra.mxu0 0.0
        %584 = vmatprep.subr.mxu0 0.0
        %585 = vmatpush2.xpose.msra.mxu0 0.0
        %586 = vmatprep.subr.mxu0 0.0
        %587 = vmatpush2.xpose.msra.mxu0 0.0
        %588 = vmatprep.subr.mxu0 0.0
        %589 = vmatpush2.xpose.msra.mxu0 0.0
        %590 = vmatprep.subr.mxu0 0.0
        %591 = vmatpush2.xpose.msra.mxu0 0.0
        %592 = vmatprep.subr.mxu0 0.0
        %593 = vmatpush2.xpose.msra.mxu0 0.0
        %594 = vmatprep.subr.mxu0 0.0
        %595 = vmatpush2.xpose.msra.mxu0 0.0
        %596 = vmatprep.subr.mxu0 0.0
        %597 = vmatpush2.xpose.msra.mxu0 0.0
        %598 = vmatprep.subr.mxu0 0.0
        %599 = vmatpush2.xpose.msra.mxu0 0.0
        %600 = vmatprep.subr.mxu0 0.0
        %601 = vmatpush2.xpose.msra.mxu0 0.0
        %602 = vmatprep.mubr.f32.mxu0 0.0
        %v603 = vand.u32 %v159, 4294901760
        %604 = vmatmul.mubr.f32.gmra.mxu0 %v603
        %v605 = vpop.f32.mrf.mxu0
        %v606 = vadd.f32 %v534, %v605
        %v607 = vpop.f32.mrf.mxu0
        %608 = vdwg.mxu0
        %v609 = vmul.f32 %v606, 0.35355338
        %v611 = vlaneseq
        %v612 = vshrl.u32 %v611, 7
        %v613 = vsub.s32 0, %v612
        %v614 = vrot.slane %v154, %v613
        %v616 = vadd.f32 %v609, %v614
        %v617 = vsel %vm158, %v616, -inf
        %618 = vmax.xlane.f32.xlu0 %v617
        %v619 = vpop.xlane.xlu0 %618
        %v620 = vsub.f32 %v616, %v619
        %v621 = vmul.f32 %v620, 1.442695
        %v622 = vpow.pop %v621
        %v623 = vsel %vm158, %v622, 0.0
        %624 = vadd.xlane.f32.xlu0 %v623
        %v625 = vpop.xlane.xlu0 %624
        %v626 = vrcp.pop %v625
        %v627 = vmul.f32 %v622, %v626
        %628 = vrot.lane.b32.xlu0 %v153, 64
        %v629 = vpop.permute.xlu0 %628
        %v632 = vsel %vm158, %v627, 0
        %634 = vmatprep.subr.mxu0 0.0
        %635 = vmatpush1.msra.mxu0 0.0
        %636 = vmatprep.subr.mxu0 0.0
        %637 = vmatpush1.msra.mxu0 0.0
        %638 = vmatprep.subr.mxu0 0.0
        %639 = vmatpush1.msra.mxu0 0.0
        %640 = vmatprep.subr.mxu0 0.0
        %641 = vmatpush1.msra.mxu0 0.0
        %642 = vmatprep.subr.mxu0 0.0
        %643 = vmatpush1.msra.mxu0 0.0
        %644 = vmatprep.subr.mxu0 0.0
        %645 = vmatpush1.msra.mxu0 0.0
        %646 = vmatprep.subr.mxu0 0.0
        %647 = vmatpush1.msra.mxu0 0.0
        %648 = vmatprep.subr.mxu0 0.0
        %649 = vmatpush1.msra.mxu0 0.0
        %650 = vmatprep.subr.mxu0 0.0
        %651 = vmatpush1.msra.mxu0 0.0
        %652 = vmatprep.subr.mxu0 0.0
        %653 = vmatpush1.msra.mxu0 0.0
        %654 = vmatprep.subr.mxu0 0.0
        %655 = vmatpush1.msra.mxu0 0.0
        %656 = vmatprep.subr.mxu0 0.0
        %657 = vmatpush1.msra.mxu0 0.0
        %658 = vmatprep.subr.mxu0 0.0
        %659 = vmatpush1.msra.mxu0 0.0
        %660 = vmatprep.subr.mxu0 0.0
        %661 = vmatpush1.msra.mxu0 0.0
        %662 = vmatprep.subr.mxu0 0.0
        %663 = vmatpush1.msra.mxu0 0.0
        %664 = vmatprep.subr.mxu0 0.0
        %v665 = vand.u32 %v629, 4294901760
        %666 = vmatpush1.msra.mxu0 %v665
        %667 = vmatprep.subr.mxu0 0.0
        %668 = vmatpush2.msra.mxu0 0.0
        %669 = vmatprep.subr.mxu0 0.0
        %670 = vmatpush2.msra.mxu0 0.0
        %671 = vmatprep.subr.mxu0 0.0
        %672 = vmatpush2.msra.mxu0 0.0
        %673 = vmatprep.subr.mxu0 0.0
        %674 = vmatpush2.msra.mxu0 0.0
        %675 = vmatprep.subr.mxu0 0.0
        %676 = vmatpush2.msra.mxu0 0.0
        %677 = vmatprep.subr.mxu0 0.0
        %678 = vmatpush2.msra.mxu0 0.0
        %679 = vmatprep.subr.mxu0 0.0
        %680 = vmatpush2.msra.mxu0 0.0
        %681 = vmatprep.subr.mxu0 0.0
        %682 = vmatpush2.msra.mxu0 0.0
        %683 = vmatprep.subr.mxu0 0.0
        %684 = vmatpush2.msra.mxu0 0.0
        %685 = vmatprep.subr.mxu0 0.0
        %686 = vmatpush2.msra.mxu0 0.0
        %687 = vmatprep.subr.mxu0 0.0
        %688 = vmatpush2.msra.mxu0 0.0
        %689 = vmatprep.subr.mxu0 0.0
        %690 = vmatpush2.msra.mxu0 0.0
        %691 = vmatprep.subr.mxu0 0.0
        %692 = vmatpush2.msra.mxu0 0.0
        %693 = vmatprep.subr.mxu0 0.0
        %694 = vmatpush2.msra.mxu0 0.0
        %695 = vmatprep.subr.mxu0 0.0
        %696 = vmatpush2.msra.mxu0 0.0
        %697 = vmatprep.subr.mxu0 0.0
        %698 = vmatpush2.msra.mxu0 0.0
        %699 = vmatprep.mubr.f32.mxu0 0.0
        %v700 = vand.u32 %v632, 4294901760
        %v701 = vsub.f32 %v632, %v700
        %v702 = vand.u32 %v701, 4294901760
        %v703 = vsub.f32 %v701, %v702
        %v704 = vand.u32 %v703, 4294901760
        %705 = vmatmul.mubr.f32.gmra.mxu0 %v704
        %v706 = vpop.f32.mrf.mxu0
        %v707 = vadd.f32 0.0, %v706
        %v708 = vpop.f32.mrf.mxu0
        %709 = vdwg.mxu0
        %710 = vmatprep.subr.mxu0 0.0
        %711 = vmatpush1.msra.mxu0 0.0
        %712 = vmatprep.subr.mxu0 0.0
        %713 = vmatpush1.msra.mxu0 0.0
        %714 = vmatprep.subr.mxu0 0.0
        %715 = vmatpush1.msra.mxu0 0.0
        %716 = vmatprep.subr.mxu0 0.0
        %717 = vmatpush1.msra.mxu0 0.0
        %718 = vmatprep.subr.mxu0 0.0
        %719 = vmatpush1.msra.mxu0 0.0
        %720 = vmatprep.subr.mxu0 0.0
        %721 = vmatpush1.msra.mxu0 0.0
        %722 = vmatprep.subr.mxu0 0.0
        %723 = vmatpush1.msra.mxu0 0.0
        %724 = vmatprep.subr.mxu0 0.0
        %725 = vmatpush1.msra.mxu0 0.0
        %726 = vmatprep.subr.mxu0 0.0
        %727 = vmatpush1.msra.mxu0 0.0
        %728 = vmatprep.subr.mxu0 0.0
        %729 = vmatpush1.msra.mxu0 0.0
        %730 = vmatprep.subr.mxu0 0.0
        %731 = vmatpush1.msra.mxu0 0.0
        %732 = vmatprep.subr.mxu0 0.0
        %733 = vmatpush1.msra.mxu0 0.0
        %734 = vmatprep.subr.mxu0 0.0
        %735 = vmatpush1.msra.mxu0 0.0
        %736 = vmatprep.subr.mxu0 0.0
        %737 = vmatpush1.msra.mxu0 0.0
        %738 = vmatprep.subr.mxu0 0.0
        %739 = vmatpush1.msra.mxu0 0.0
        %740 = vmatprep.subr.mxu0 0.0
        %v741 = vand.u32 %v629, 4294901760
        %v742 = vsub.f32 %v629, %v741
        %v743 = vand.u32 %v742, 4294901760
        %v744 = vsub.f32 %v742, %v743
        %v745 = vand.u32 %v744, 4294901760
        %746 = vmatpush1.msra.mxu0 %v745
        %747 = vmatprep.subr.mxu0 0.0
        %748 = vmatpush2.msra.mxu0 0.0
        %749 = vmatprep.subr.mxu0 0.0
        %750 = vmatpush2.msra.mxu0 0.0
        %751 = vmatprep.subr.mxu0 0.0
        %752 = vmatpush2.msra.mxu0 0.0
        %753 = vmatprep.subr.mxu0 0.0
        %754 = vmatpush2.msra.mxu0 0.0
        %755 = vmatprep.subr.mxu0 0.0
        %756 = vmatpush2.msra.mxu0 0.0
        %757 = vmatprep.subr.mxu0 0.0
        %758 = vmatpush2.msra.mxu0 0.0
        %759 = vmatprep.subr.mxu0 0.0
        %760 = vmatpush2.msra.mxu0 0.0
        %761 = vmatprep.subr.mxu0 0.0
        %762 = vmatpush2.msra.mxu0 0.0
        %763 = vmatprep.subr.mxu0 0.0
        %764 = vmatpush2.msra.mxu0 0.0
        %765 = vmatprep.subr.mxu0 0.0
        %766 = vmatpush2.msra.mxu0 0.0
        %767 = vmatprep.subr.mxu0 0.0
        %768 = vmatpush2.msra.mxu0 0.0
        %769 = vmatprep.subr.mxu0 0.0
        %770 = vmatpush2.msra.mxu0 0.0
        %771 = vmatprep.subr.mxu0 0.0
        %772 = vmatpush2.msra.mxu0 0.0
        %773 = vmatprep.subr.mxu0 0.0
        %774 = vmatpush2.msra.mxu0 0.0
        %775 = vmatprep.subr.mxu0 0.0
        %776 = vmatpush2.msra.mxu0 0.0
        %777 = vmatprep.subr.mxu0 0.0
        %778 = vmatpush2.msra.mxu0 0.0
        %779 = vmatprep.mubr.f32.mxu0 0.0
        %v780 = vand.u32 %v632, 4294901760
        %781 = vmatmul.mubr.f32.gmra.mxu0 %v780
        %v782 = vpop.f32.mrf.mxu0
        %v783 = vadd.f32 %v707, %v782
        %v784 = vpop.f32.mrf.mxu0
        %785 = vdwg.mxu0
        %786 = vmatprep.subr.mxu0 0.0
        %787 = vmatpush1.msra.mxu0 0.0
        %788 = vmatprep.subr.mxu0 0.0
        %789 = vmatpush1.msra.mxu0 0.0
        %790 = vmatprep.subr.mxu0 0.0
        %791 = vmatpush1.msra.mxu0 0.0
        %792 = vmatprep.subr.mxu0 0.0
        %793 = vmatpush1.msra.mxu0 0.0
        %794 = vmatprep.subr.mxu0 0.0
        %795 = vmatpush1.msra.mxu0 0.0
        %796 = vmatprep.subr.mxu0 0.0
        %797 = vmatpush1.msra.mxu0 0.0
        %798 = vmatprep.subr.mxu0 0.0
        %799 = vmatpush1.msra.mxu0 0.0
        %800 = vmatprep.subr.mxu0 0.0
        %801 = vmatpush1.msra.mxu0 0.0
        %802 = vmatprep.subr.mxu0 0.0
        %803 = vmatpush1.msra.mxu0 0.0
        %804 = vmatprep.subr.mxu0 0.0
        %805 = vmatpush1.msra.mxu0 0.0
        %806 = vmatprep.subr.mxu0 0.0
        %807 = vmatpush1.msra.mxu0 0.0
        %808 = vmatprep.subr.mxu0 0.0
        %809 = vmatpush1.msra.mxu0 0.0
        %810 = vmatprep.subr.mxu0 0.0
        %811 = vmatpush1.msra.mxu0 0.0
        %812 = vmatprep.subr.mxu0 0.0
        %813 = vmatpush1.msra.mxu0 0.0
        %814 = vmatprep.subr.mxu0 0.0
        %815 = vmatpush1.msra.mxu0 0.0
        %816 = vmatprep.subr.mxu0 0.0
        %v817 = vand.u32 %v629, 4294901760
        %v818 = vsub.f32 %v629, %v817
        %819 = vmatpush1.msra.mxu0 %v818
        %820 = vmatprep.subr.mxu0 0.0
        %821 = vmatpush2.msra.mxu0 0.0
        %822 = vmatprep.subr.mxu0 0.0
        %823 = vmatpush2.msra.mxu0 0.0
        %824 = vmatprep.subr.mxu0 0.0
        %825 = vmatpush2.msra.mxu0 0.0
        %826 = vmatprep.subr.mxu0 0.0
        %827 = vmatpush2.msra.mxu0 0.0
        %828 = vmatprep.subr.mxu0 0.0
        %829 = vmatpush2.msra.mxu0 0.0
        %830 = vmatprep.subr.mxu0 0.0
        %831 = vmatpush2.msra.mxu0 0.0
        %832 = vmatprep.subr.mxu0 0.0
        %833 = vmatpush2.msra.mxu0 0.0
        %834 = vmatprep.subr.mxu0 0.0
        %835 = vmatpush2.msra.mxu0 0.0
        %836 = vmatprep.subr.mxu0 0.0
        %837 = vmatpush2.msra.mxu0 0.0
        %838 = vmatprep.subr.mxu0 0.0
        %839 = vmatpush2.msra.mxu0 0.0
        %840 = vmatprep.subr.mxu0 0.0
        %841 = vmatpush2.msra.mxu0 0.0
        %842 = vmatprep.subr.mxu0 0.0
        %843 = vmatpush2.msra.mxu0 0.0
        %844 = vmatprep.subr.mxu0 0.0
        %845 = vmatpush2.msra.mxu0 0.0
        %846 = vmatprep.subr.mxu0 0.0
        %847 = vmatpush2.msra.mxu0 0.0
        %848 = vmatprep.subr.mxu0 0.0
        %849 = vmatpush2.msra.mxu0 0.0
        %850 = vmatprep.subr.mxu0 0.0
        %851 = vmatpush2.msra.mxu0 0.0
        %852 = vmatprep.mubr.f32.mxu0 0.0
        %v853 = vand.u32 %v632, 4294901760
        %v854 = vsub.f32 %v632, %v853
        %855 = vmatmul.mubr.f32.gmra.mxu0 %v854
        %v856 = vpop.f32.mrf.mxu0
        %v857 = vadd.f32 %v783, %v856
        %v858 = vpop.f32.mrf.mxu0
        %859 = vdwg.mxu0
        %860 = vmatprep.subr.mxu0 0.0
        %861 = vmatpush1.msra.mxu0 0.0
        %862 = vmatprep.subr.mxu0 0.0
        %863 = vmatpush1.msra.mxu0 0.0
        %864 = vmatprep.subr.mxu0 0.0
        %865 = vmatpush1.msra.mxu0 0.0
        %866 = vmatprep.subr.mxu0 0.0
        %867 = vmatpush1.msra.mxu0 0.0
        %868 = vmatprep.subr.mxu0 0.0
        %869 = vmatpush1.msra.mxu0 0.0
        %870 = vmatprep.subr.mxu0 0.0
        %871 = vmatpush1.msra.mxu0 0.0
        %872 = vmatprep.subr.mxu0 0.0
        %873 = vmatpush1.msra.mxu0 0.0
        %874 = vmatprep.subr.mxu0 0.0
        %875 = vmatpush1.msra.mxu0 0.0
        %876 = vmatprep.subr.mxu0 0.0
        %877 = vmatpush1.msra.mxu0 0.0
        %878 = vmatprep.subr.mxu0 0.0
        %879 = vmatpush1.msra.mxu0 0.0
        %880 = vmatprep.subr.mxu0 0.0
        %881 = vmatpush1.msra.mxu0 0.0
        %882 = vmatprep.subr.mxu0 0.0
        %883 = vmatpush1.msra.mxu0 0.0
        %884 = vmatprep.subr.mxu0 0.0
        %885 = vmatpush1.msra.mxu0 0.0
        %886 = vmatprep.subr.mxu0 0.0
        %887 = vmatpush1.msra.mxu0 0.0
        %888 = vmatprep.subr.mxu0 0.0
        %889 = vmatpush1.msra.mxu0 0.0
        %890 = vmatprep.subr.mxu0 0.0
        %v891 = vand.u32 %v629, 4294901760
        %892 = vmatpush1.msra.mxu0 %v891
        %893 = vmatprep.subr.mxu0 0.0
        %894 = vmatpush2.msra.mxu0 0.0
        %895 = vmatprep.subr.mxu0 0.0
        %896 = vmatpush2.msra.mxu0 0.0
        %897 = vmatprep.subr.mxu0 0.0
        %898 = vmatpush2.msra.mxu0 0.0
        %899 = vmatprep.subr.mxu0 0.0
        %900 = vmatpush2.msra.mxu0 0.0
        %901 = vmatprep.subr.mxu0 0.0
        %902 = vmatpush2.msra.mxu0 0.0
        %903 = vmatprep.subr.mxu0 0.0
        %904 = vmatpush2.msra.mxu0 0.0
        %905 = vmatprep.subr.mxu0 0.0
        %906 = vmatpush2.msra.mxu0 0.0
        %907 = vmatprep.subr.mxu0 0.0
        %908 = vmatpush2.msra.mxu0 0.0
        %909 = vmatprep.subr.mxu0 0.0
        %910 = vmatpush2.msra.mxu0 0.0
        %911 = vmatprep.subr.mxu0 0.0
        %912 = vmatpush2.msra.mxu0 0.0
        %913 = vmatprep.subr.mxu0 0.0
        %914 = vmatpush2.msra.mxu0 0.0
        %915 = vmatprep.subr.mxu0 0.0
        %916 = vmatpush2.msra.mxu0 0.0
        %917 = vmatprep.subr.mxu0 0.0
        %918 = vmatpush2.msra.mxu0 0.0
        %919 = vmatprep.subr.mxu0 0.0
        %920 = vmatpush2.msra.mxu0 0.0
        %921 = vmatprep.subr.mxu0 0.0
        %922 = vmatpush2.msra.mxu0 0.0
        %923 = vmatprep.subr.mxu0 0.0
        %924 = vmatpush2.msra.mxu0 0.0
        %925 = vmatprep.mubr.f32.mxu0 0.0
        %v926 = vand.u32 %v632, 4294901760
        %v927 = vsub.f32 %v632, %v926
        %v928 = vand.u32 %v927, 4294901760
        %929 = vmatmul.mubr.f32.gmra.mxu0 %v928
        %v930 = vpop.f32.mrf.mxu0
        %v931 = vadd.f32 %v857, %v930
        %v932 = vpop.f32.mrf.mxu0
        %933 = vdwg.mxu0
        %934 = vmatprep.subr.mxu0 0.0
        %935 = vmatpush1.msra.mxu0 0.0
        %936 = vmatprep.subr.mxu0 0.0
        %937 = vmatpush1.msra.mxu0 0.0
        %938 = vmatprep.subr.mxu0 0.0
        %939 = vmatpush1.msra.mxu0 0.0
        %940 = vmatprep.subr.mxu0 0.0
        %941 = vmatpush1.msra.mxu0 0.0
        %942 = vmatprep.subr.mxu0 0.0
        %943 = vmatpush1.msra.mxu0 0.0
        %944 = vmatprep.subr.mxu0 0.0
        %945 = vmatpush1.msra.mxu0 0.0
        %946 = vmatprep.subr.mxu0 0.0
        %947 = vmatpush1.msra.mxu0 0.0
        %948 = vmatprep.subr.mxu0 0.0
        %949 = vmatpush1.msra.mxu0 0.0
        %950 = vmatprep.subr.mxu0 0.0
        %951 = vmatpush1.msra.mxu0 0.0
        %952 = vmatprep.subr.mxu0 0.0
        %953 = vmatpush1.msra.mxu0 0.0
        %954 = vmatprep.subr.mxu0 0.0
        %955 = vmatpush1.msra.mxu0 0.0
        %956 = vmatprep.subr.mxu0 0.0
        %957 = vmatpush1.msra.mxu0 0.0
        %958 = vmatprep.subr.mxu0 0.0
        %959 = vmatpush1.msra.mxu0 0.0
        %960 = vmatprep.subr.mxu0 0.0
        %961 = vmatpush1.msra.mxu0 0.0
        %962 = vmatprep.subr.mxu0 0.0
        %963 = vmatpush1.msra.mxu0 0.0
        %964 = vmatprep.subr.mxu0 0.0
        %v965 = vand.u32 %v629, 4294901760
        %v966 = vsub.f32 %v629, %v965
        %v967 = vand.u32 %v966, 4294901760
        %968 = vmatpush1.msra.mxu0 %v967
        %969 = vmatprep.subr.mxu0 0.0
        %970 = vmatpush2.msra.mxu0 0.0
        %971 = vmatprep.subr.mxu0 0.0
        %972 = vmatpush2.msra.mxu0 0.0
        %973 = vmatprep.subr.mxu0 0.0
        %974 = vmatpush2.msra.mxu0 0.0
        %975 = vmatprep.subr.mxu0 0.0
        %976 = vmatpush2.msra.mxu0 0.0
        %977 = vmatprep.subr.mxu0 0.0
        %978 = vmatpush2.msra.mxu0 0.0
        %979 = vmatprep.subr.mxu0 0.0
        %980 = vmatpush2.msra.mxu0 0.0
        %981 = vmatprep.subr.mxu0 0.0
        %982 = vmatpush2.msra.mxu0 0.0
        %983 = vmatprep.subr.mxu0 0.0
        %984 = vmatpush2.msra.mxu0 0.0
        %985 = vmatprep.subr.mxu0 0.0
        %986 = vmatpush2.msra.mxu0 0.0
        %987 = vmatprep.subr.mxu0 0.0
        %988 = vmatpush2.msra.mxu0 0.0
        %989 = vmatprep.subr.mxu0 0.0
        %990 = vmatpush2.msra.mxu0 0.0
        %991 = vmatprep.subr.mxu0 0.0
        %992 = vmatpush2.msra.mxu0 0.0
        %993 = vmatprep.subr.mxu0 0.0
        %994 = vmatpush2.msra.mxu0 0.0
        %995 = vmatprep.subr.mxu0 0.0
        %996 = vmatpush2.msra.mxu0 0.0
        %997 = vmatprep.subr.mxu0 0.0
        %998 = vmatpush2.msra.mxu0 0.0
        %999 = vmatprep.subr.mxu0 0.0
        %1000 = vmatpush2.msra.mxu0 0.0
        %1001 = vmatprep.mubr.f32.mxu0 0.0
        %v1002 = vand.u32 %v632, 4294901760
        %1003 = vmatmul.mubr.f32.gmra.mxu0 %v1002
        %v1004 = vpop.f32.mrf.mxu0
        %v1005 = vadd.f32 %v931, %v1004
        %v1006 = vpop.f32.mrf.mxu0
        %1007 = vdwg.mxu0
        %1008 = vmatprep.subr.mxu0 0.0
        %1009 = vmatpush1.msra.mxu0 0.0
        %1010 = vmatprep.subr.mxu0 0.0
        %1011 = vmatpush1.msra.mxu0 0.0
        %1012 = vmatprep.subr.mxu0 0.0
        %1013 = vmatpush1.msra.mxu0 0.0
        %1014 = vmatprep.subr.mxu0 0.0
        %1015 = vmatpush1.msra.mxu0 0.0
        %1016 = vmatprep.subr.mxu0 0.0
        %1017 = vmatpush1.msra.mxu0 0.0
        %1018 = vmatprep.subr.mxu0 0.0
        %1019 = vmatpush1.msra.mxu0 0.0
        %1020 = vmatprep.subr.mxu0 0.0
        %1021 = vmatpush1.msra.mxu0 0.0
        %1022 = vmatprep.subr.mxu0 0.0
        %1023 = vmatpush1.msra.mxu0 0.0
        %1024 = vmatprep.subr.mxu0 0.0
        %1025 = vmatpush1.msra.mxu0 0.0
        %1026 = vmatprep.subr.mxu0 0.0
        %1027 = vmatpush1.msra.mxu0 0.0
        %1028 = vmatprep.subr.mxu0 0.0
        %1029 = vmatpush1.msra.mxu0 0.0
        %1030 = vmatprep.subr.mxu0 0.0
        %1031 = vmatpush1.msra.mxu0 0.0
        %1032 = vmatprep.subr.mxu0 0.0
        %1033 = vmatpush1.msra.mxu0 0.0
        %1034 = vmatprep.subr.mxu0 0.0
        %1035 = vmatpush1.msra.mxu0 0.0
        %1036 = vmatprep.subr.mxu0 0.0
        %1037 = vmatpush1.msra.mxu0 0.0
        %1038 = vmatprep.subr.mxu0 0.0
        %v1039 = vand.u32 %v629, 4294901760
        %1040 = vmatpush1.msra.mxu0 %v1039
        %1041 = vmatprep.subr.mxu0 0.0
        %1042 = vmatpush2.msra.mxu0 0.0
        %1043 = vmatprep.subr.mxu0 0.0
        %1044 = vmatpush2.msra.mxu0 0.0
        %1045 = vmatprep.subr.mxu0 0.0
        %1046 = vmatpush2.msra.mxu0 0.0
        %1047 = vmatprep.subr.mxu0 0.0
        %1048 = vmatpush2.msra.mxu0 0.0
        %1049 = vmatprep.subr.mxu0 0.0
        %1050 = vmatpush2.msra.mxu0 0.0
        %1051 = vmatprep.subr.mxu0 0.0
        %1052 = vmatpush2.msra.mxu0 0.0
        %1053 = vmatprep.subr.mxu0 0.0
        %1054 = vmatpush2.msra.mxu0 0.0
        %1055 = vmatprep.subr.mxu0 0.0
        %1056 = vmatpush2.msra.mxu0 0.0
        %1057 = vmatprep.subr.mxu0 0.0
        %1058 = vmatpush2.msra.mxu0 0.0
        %1059 = vmatprep.subr.mxu0 0.0
        %1060 = vmatpush2.msra.mxu0 0.0
        %1061 = vmatprep.subr.mxu0 0.0
        %1062 = vmatpush2.msra.mxu0 0.0
        %1063 = vmatprep.subr.mxu0 0.0
        %1064 = vmatpush2.msra.mxu0 0.0
        %1065 = vmatprep.subr.mxu0 0.0
        %1066 = vmatpush2.msra.mxu0 0.0
        %1067 = vmatprep.subr.mxu0 0.0
        %1068 = vmatpush2.msra.mxu0 0.0
        %1069 = vmatprep.subr.mxu0 0.0
        %1070 = vmatpush2.msra.mxu0 0.0
        %1071 = vmatprep.subr.mxu0 0.0
        %1072 = vmatpush2.msra.mxu0 0.0
        %1073 = vmatprep.mubr.f32.mxu0 0.0
        %v1074 = vand.u32 %v632, 4294901760
        %1075 = vmatmul.mubr.f32.gmra.mxu0 %v1074
        %v1076 = vpop.f32.mrf.mxu0
        %v1077 = vadd.f32 %v1005, %v1076
        %v1078 = vpop.f32.mrf.mxu0
        %1079 = vdwg.mxu0
        %1080 = vrot.lane.b32.xlu0 %v153, 120
        %v1081 = vpop.permute.xlu0 %1080
        %1082 = vrot.lane.b32.xlu0 %v153, 88
        %v1083 = vpop.permute.xlu0 %1082
        %v1084 = vsel %vm158, %v1081, 0
        %v1086 = vsel %vm158, %v1083, 0
        %1088 = vmatprep.subr.mxu0 0.0
        %1089 = vmatpush1.xpose.msra.mxu0 0.0
        %1090 = vmatprep.subr.mxu0 0.0
        %1091 = vmatpush1.xpose.msra.mxu0 0.0
        %1092 = vmatprep.subr.mxu0 0.0
        %1093 = vmatpush1.xpose.msra.mxu0 0.0
        %1094 = vmatprep.subr.mxu0 0.0
        %1095 = vmatpush1.xpose.msra.mxu0 0.0
        %1096 = vmatprep.subr.mxu0 0.0
        %1097 = vmatpush1.xpose.msra.mxu0 0.0
        %1098 = vmatprep.subr.mxu0 0.0
        %1099 = vmatpush1.xpose.msra.mxu0 0.0
        %1100 = vmatprep.subr.mxu0 0.0
        %1101 = vmatpush1.xpose.msra.mxu0 0.0
        %1102 = vmatprep.subr.mxu0 0.0
        %1103 = vmatpush1.xpose.msra.mxu0 0.0
        %1104 = vmatprep.subr.mxu0 0.0
        %1105 = vmatpush1.xpose.msra.mxu0 0.0
        %1106 = vmatprep.subr.mxu0 0.0
        %1107 = vmatpush1.xpose.msra.mxu0 0.0
        %1108 = vmatprep.subr.mxu0 0.0
        %1109 = vmatpush1.xpose.msra.mxu0 0.0
        %1110 = vmatprep.subr.mxu0 0.0
        %1111 = vmatpush1.xpose.msra.mxu0 0.0
        %1112 = vmatprep.subr.mxu0 0.0
        %1113 = vmatpush1.xpose.msra.mxu0 0.0
        %1114 = vmatprep.subr.mxu0 0.0
        %1115 = vmatpush1.xpose.msra.mxu0 0.0
        %1116 = vmatprep.subr.mxu0 0.0
        %1117 = vmatpush1.xpose.msra.mxu0 0.0
        %1118 = vmatprep.subr.mxu0 0.0
        %v1119 = vand.u32 %v1086, 4294901760
        %1120 = vmatpush1.xpose.msra.mxu0 %v1119
        %1121 = vmatprep.subr.mxu0 0.0
        %1122 = vmatpush2.xpose.msra.mxu0 0.0
        %1123 = vmatprep.subr.mxu0 0.0
        %1124 = vmatpush2.xpose.msra.mxu0 0.0
        %1125 = vmatprep.subr.mxu0 0.0
        %1126 = vmatpush2.xpose.msra.mxu0 0.0
        %1127 = vmatprep.subr.mxu0 0.0
        %1128 = vmatpush2.xpose.msra.mxu0 0.0
        %1129 = vmatprep.subr.mxu0 0.0
        %1130 = vmatpush2.xpose.msra.mxu0 0.0
        %1131 = vmatprep.subr.mxu0 0.0
        %1132 = vmatpush2.xpose.msra.mxu0 0.0
        %1133 = vmatprep.subr.mxu0 0.0
        %1134 = vmatpush2.xpose.msra.mxu0 0.0
        %1135 = vmatprep.subr.mxu0 0.0
        %1136 = vmatpush2.xpose.msra.mxu0 0.0
        %1137 = vmatprep.subr.mxu0 0.0
        %1138 = vmatpush2.xpose.msra.mxu0 0.0
        %1139 = vmatprep.subr.mxu0 0.0
        %1140 = vmatpush2.xpose.msra.mxu0 0.0
        %1141 = vmatprep.subr.mxu0 0.0
        %1142 = vmatpush2.xpose.msra.mxu0 0.0
        %1143 = vmatprep.subr.mxu0 0.0
        %1144 = vmatpush2.xpose.msra.mxu0 0.0
        %1145 = vmatprep.subr.mxu0 0.0
        %1146 = vmatpush2.xpose.msra.mxu0 0.0
        %1147 = vmatprep.subr.mxu0 0.0
        %1148 = vmatpush2.xpose.msra.mxu0 0.0
        %1149 = vmatprep.subr.mxu0 0.0
        %1150 = vmatpush2.xpose.msra.mxu0 0.0
        %1151 = vmatprep.subr.mxu0 0.0
        %1152 = vmatpush2.xpose.msra.mxu0 0.0
        %1153 = vmatprep.mubr.f32.mxu0 0.0
        %v1154 = vand.u32 %v1084, 4294901760
        %v1155 = vsub.f32 %v1084, %v1154
        %v1156 = vand.u32 %v1155, 4294901760
        %v1157 = vsub.f32 %v1155, %v1156
        %v1158 = vand.u32 %v1157, 4294901760
        %1159 = vmatmul.mubr.f32.gmra.mxu0 %v1158
        %v1160 = vpop.f32.mrf.mxu0
        %v1161 = vadd.f32 0.0, %v1160
        %v1162 = vpop.f32.mrf.mxu0
        %1163 = vdwg.mxu0
        %1164 = vmatprep.subr.mxu0 0.0
        %1165 = vmatpush1.xpose.msra.mxu0 0.0
        %1166 = vmatprep.subr.mxu0 0.0
        %1167 = vmatpush1.xpose.msra.mxu0 0.0
        %1168 = vmatprep.subr.mxu0 0.0
        %1169 = vmatpush1.xpose.msra.mxu0 0.0
        %1170 = vmatprep.subr.mxu0 0.0
        %1171 = vmatpush1.xpose.msra.mxu0 0.0
        %1172 = vmatprep.subr.mxu0 0.0
        %1173 = vmatpush1.xpose.msra.mxu0 0.0
        %1174 = vmatprep.subr.mxu0 0.0
        %1175 = vmatpush1.xpose.msra.mxu0 0.0
        %1176 = vmatprep.subr.mxu0 0.0
        %1177 = vmatpush1.xpose.msra.mxu0 0.0
        %1178 = vmatprep.subr.mxu0 0.0
        %1179 = vmatpush1.xpose.msra.mxu0 0.0
        %1180 = vmatprep.subr.mxu0 0.0
        %1181 = vmatpush1.xpose.msra.mxu0 0.0
        %1182 = vmatprep.subr.mxu0 0.0
        %1183 = vmatpush1.xpose.msra.mxu0 0.0
        %1184 = vmatprep.subr.mxu0 0.0
        %1185 = vmatpush1.xpose.msra.mxu0 0.0
        %1186 = vmatprep.subr.mxu0 0.0
        %1187 = vmatpush1.xpose.msra.mxu0 0.0
        %1188 = vmatprep.subr.mxu0 0.0
        %1189 = vmatpush1.xpose.msra.mxu0 0.0
        %1190 = vmatprep.subr.mxu0 0.0
        %1191 = vmatpush1.xpose.msra.mxu0 0.0
        %1192 = vmatprep.subr.mxu0 0.0
        %1193 = vmatpush1.xpose.msra.mxu0 0.0
        %1194 = vmatprep.subr.mxu0 0.0
        %v1195 = vand.u32 %v1086, 4294901760
        %v1196 = vsub.f32 %v1086, %v1195
        %v1197 = vand.u32 %v1196, 4294901760
        %v1198 = vsub.f32 %v1196, %v1197
        %v1199 = vand.u32 %v1198, 4294901760
        %1200 = vmatpush1.xpose.msra.mxu0 %v1199
        %1201 = vmatprep.subr.mxu0 0.0
        %1202 = vmatpush2.xpose.msra.mxu0 0.0
        %1203 = vmatprep.subr.mxu0 0.0
        %1204 = vmatpush2.xpose.msra.mxu0 0.0
        %1205 = vmatprep.subr.mxu0 0.0
        %1206 = vmatpush2.xpose.msra.mxu0 0.0
        %1207 = vmatprep.subr.mxu0 0.0
        %1208 = vmatpush2.xpose.msra.mxu0 0.0
        %1209 = vmatprep.subr.mxu0 0.0
        %1210 = vmatpush2.xpose.msra.mxu0 0.0
        %1211 = vmatprep.subr.mxu0 0.0
        %1212 = vmatpush2.xpose.msra.mxu0 0.0
        %1213 = vmatprep.subr.mxu0 0.0
        %1214 = vmatpush2.xpose.msra.mxu0 0.0
        %1215 = vmatprep.subr.mxu0 0.0
        %1216 = vmatpush2.xpose.msra.mxu0 0.0
        %1217 = vmatprep.subr.mxu0 0.0
        %1218 = vmatpush2.xpose.msra.mxu0 0.0
        %1219 = vmatprep.subr.mxu0 0.0
        %1220 = vmatpush2.xpose.msra.mxu0 0.0
        %1221 = vmatprep.subr.mxu0 0.0
        %1222 = vmatpush2.xpose.msra.mxu0 0.0
        %1223 = vmatprep.subr.mxu0 0.0
        %1224 = vmatpush2.xpose.msra.mxu0 0.0
        %1225 = vmatprep.subr.mxu0 0.0
        %1226 = vmatpush2.xpose.msra.mxu0 0.0
        %1227 = vmatprep.subr.mxu0 0.0
        %1228 = vmatpush2.xpose.msra.mxu0 0.0
        %1229 = vmatprep.subr.mxu0 0.0
        %1230 = vmatpush2.xpose.msra.mxu0 0.0
        %1231 = vmatprep.subr.mxu0 0.0
        %1232 = vmatpush2.xpose.msra.mxu0 0.0
        %1233 = vmatprep.mubr.f32.mxu0 0.0
        %v1234 = vand.u32 %v1084, 4294901760
        %1235 = vmatmul.mubr.f32.gmra.mxu0 %v1234
        %v1236 = vpop.f32.mrf.mxu0
        %v1237 = vadd.f32 %v1161, %v1236
        %v1238 = vpop.f32.mrf.mxu0
        %1239 = vdwg.mxu0
        %1240 = vmatprep.subr.mxu0 0.0
        %1241 = vmatpush1.xpose.msra.mxu0 0.0
        %1242 = vmatprep.subr.mxu0 0.0
        %1243 = vmatpush1.xpose.msra.mxu0 0.0
        %1244 = vmatprep.subr.mxu0 0.0
        %1245 = vmatpush1.xpose.msra.mxu0 0.0
        %1246 = vmatprep.subr.mxu0 0.0
        %1247 = vmatpush1.xpose.msra.mxu0 0.0
        %1248 = vmatprep.subr.mxu0 0.0
        %1249 = vmatpush1.xpose.msra.mxu0 0.0
        %1250 = vmatprep.subr.mxu0 0.0
        %1251 = vmatpush1.xpose.msra.mxu0 0.0
        %1252 = vmatprep.subr.mxu0 0.0
        %1253 = vmatpush1.xpose.msra.mxu0 0.0
        %1254 = vmatprep.subr.mxu0 0.0
        %1255 = vmatpush1.xpose.msra.mxu0 0.0
        %1256 = vmatprep.subr.mxu0 0.0
        %1257 = vmatpush1.xpose.msra.mxu0 0.0
        %1258 = vmatprep.subr.mxu0 0.0
        %1259 = vmatpush1.xpose.msra.mxu0 0.0
        %1260 = vmatprep.subr.mxu0 0.0
        %1261 = vmatpush1.xpose.msra.mxu0 0.0
        %1262 = vmatprep.subr.mxu0 0.0
        %1263 = vmatpush1.xpose.msra.mxu0 0.0
        %1264 = vmatprep.subr.mxu0 0.0
        %1265 = vmatpush1.xpose.msra.mxu0 0.0
        %1266 = vmatprep.subr.mxu0 0.0
        %1267 = vmatpush1.xpose.msra.mxu0 0.0
        %1268 = vmatprep.subr.mxu0 0.0
        %1269 = vmatpush1.xpose.msra.mxu0 0.0
        %1270 = vmatprep.subr.mxu0 0.0
        %v1271 = vand.u32 %v1086, 4294901760
        %v1272 = vsub.f32 %v1086, %v1271
        %1273 = vmatpush1.xpose.msra.mxu0 %v1272
        %1274 = vmatprep.subr.mxu0 0.0
        %1275 = vmatpush2.xpose.msra.mxu0 0.0
        %1276 = vmatprep.subr.mxu0 0.0
        %1277 = vmatpush2.xpose.msra.mxu0 0.0
        %1278 = vmatprep.subr.mxu0 0.0
        %1279 = vmatpush2.xpose.msra.mxu0 0.0
        %1280 = vmatprep.subr.mxu0 0.0
        %1281 = vmatpush2.xpose.msra.mxu0 0.0
        %1282 = vmatprep.subr.mxu0 0.0
        %1283 = vmatpush2.xpose.msra.mxu0 0.0
        %1284 = vmatprep.subr.mxu0 0.0
        %1285 = vmatpush2.xpose.msra.mxu0 0.0
        %1286 = vmatprep.subr.mxu0 0.0
        %1287 = vmatpush2.xpose.msra.mxu0 0.0
        %1288 = vmatprep.subr.mxu0 0.0
        %1289 = vmatpush2.xpose.msra.mxu0 0.0
        %1290 = vmatprep.subr.mxu0 0.0
        %1291 = vmatpush2.xpose.msra.mxu0 0.0
        %1292 = vmatprep.subr.mxu0 0.0
        %1293 = vmatpush2.xpose.msra.mxu0 0.0
        %1294 = vmatprep.subr.mxu0 0.0
        %1295 = vmatpush2.xpose.msra.mxu0 0.0
        %1296 = vmatprep.subr.mxu0 0.0
        %1297 = vmatpush2.xpose.msra.mxu0 0.0
        %1298 = vmatprep.subr.mxu0 0.0
        %1299 = vmatpush2.xpose.msra.mxu0 0.0
        %1300 = vmatprep.subr.mxu0 0.0
        %1301 = vmatpush2.xpose.msra.mxu0 0.0
        %1302 = vmatprep.subr.mxu0 0.0
        %1303 = vmatpush2.xpose.msra.mxu0 0.0
        %1304 = vmatprep.subr.mxu0 0.0
        %1305 = vmatpush2.xpose.msra.mxu0 0.0
        %1306 = vmatprep.mubr.f32.mxu0 0.0
        %v1307 = vand.u32 %v1084, 4294901760
        %v1308 = vsub.f32 %v1084, %v1307
        %1309 = vmatmul.mubr.f32.gmra.mxu0 %v1308
        %v1310 = vpop.f32.mrf.mxu0
        %v1311 = vadd.f32 %v1237, %v1310
        %v1312 = vpop.f32.mrf.mxu0
        %1313 = vdwg.mxu0
        %1314 = vmatprep.subr.mxu0 0.0
        %1315 = vmatpush1.xpose.msra.mxu0 0.0
        %1316 = vmatprep.subr.mxu0 0.0
        %1317 = vmatpush1.xpose.msra.mxu0 0.0
        %1318 = vmatprep.subr.mxu0 0.0
        %1319 = vmatpush1.xpose.msra.mxu0 0.0
        %1320 = vmatprep.subr.mxu0 0.0
        %1321 = vmatpush1.xpose.msra.mxu0 0.0
        %1322 = vmatprep.subr.mxu0 0.0
        %1323 = vmatpush1.xpose.msra.mxu0 0.0
        %1324 = vmatprep.subr.mxu0 0.0
        %1325 = vmatpush1.xpose.msra.mxu0 0.0
        %1326 = vmatprep.subr.mxu0 0.0
        %1327 = vmatpush1.xpose.msra.mxu0 0.0
        %1328 = vmatprep.subr.mxu0 0.0
        %1329 = vmatpush1.xpose.msra.mxu0 0.0
        %1330 = vmatprep.subr.mxu0 0.0
        %1331 = vmatpush1.xpose.msra.mxu0 0.0
        %1332 = vmatprep.subr.mxu0 0.0
        %1333 = vmatpush1.xpose.msra.mxu0 0.0
        %1334 = vmatprep.subr.mxu0 0.0
        %1335 = vmatpush1.xpose.msra.mxu0 0.0
        %1336 = vmatprep.subr.mxu0 0.0
        %1337 = vmatpush1.xpose.msra.mxu0 0.0
        %1338 = vmatprep.subr.mxu0 0.0
        %1339 = vmatpush1.xpose.msra.mxu0 0.0
        %1340 = vmatprep.subr.mxu0 0.0
        %1341 = vmatpush1.xpose.msra.mxu0 0.0
        %1342 = vmatprep.subr.mxu0 0.0
        %1343 = vmatpush1.xpose.msra.mxu0 0.0
        %1344 = vmatprep.subr.mxu0 0.0
        %v1345 = vand.u32 %v1086, 4294901760
        %1346 = vmatpush1.xpose.msra.mxu0 %v1345
        %1347 = vmatprep.subr.mxu0 0.0
        %1348 = vmatpush2.xpose.msra.mxu0 0.0
        %1349 = vmatprep.subr.mxu0 0.0
        %1350 = vmatpush2.xpose.msra.mxu0 0.0
        %1351 = vmatprep.subr.mxu0 0.0
        %1352 = vmatpush2.xpose.msra.mxu0 0.0
        %1353 = vmatprep.subr.mxu0 0.0
        %1354 = vmatpush2.xpose.msra.mxu0 0.0
        %1355 = vmatprep.subr.mxu0 0.0
        %1356 = vmatpush2.xpose.msra.mxu0 0.0
        %1357 = vmatprep.subr.mxu0 0.0
        %1358 = vmatpush2.xpose.msra.mxu0 0.0
        %1359 = vmatprep.subr.mxu0 0.0
        %1360 = vmatpush2.xpose.msra.mxu0 0.0
        %1361 = vmatprep.subr.mxu0 0.0
        %1362 = vmatpush2.xpose.msra.mxu0 0.0
        %1363 = vmatprep.subr.mxu0 0.0
        %1364 = vmatpush2.xpose.msra.mxu0 0.0
        %1365 = vmatprep.subr.mxu0 0.0
        %1366 = vmatpush2.xpose.msra.mxu0 0.0
        %1367 = vmatprep.subr.mxu0 0.0
        %1368 = vmatpush2.xpose.msra.mxu0 0.0
        %1369 = vmatprep.subr.mxu0 0.0
        %1370 = vmatpush2.xpose.msra.mxu0 0.0
        %1371 = vmatprep.subr.mxu0 0.0
        %1372 = vmatpush2.xpose.msra.mxu0 0.0
        %1373 = vmatprep.subr.mxu0 0.0
        %1374 = vmatpush2.xpose.msra.mxu0 0.0
        %1375 = vmatprep.subr.mxu0 0.0
        %1376 = vmatpush2.xpose.msra.mxu0 0.0
        %1377 = vmatprep.subr.mxu0 0.0
        %1378 = vmatpush2.xpose.msra.mxu0 0.0
        %1379 = vmatprep.mubr.f32.mxu0 0.0
        %v1380 = vand.u32 %v1084, 4294901760
        %v1381 = vsub.f32 %v1084, %v1380
        %v1382 = vand.u32 %v1381, 4294901760
        %1383 = vmatmul.mubr.f32.gmra.mxu0 %v1382
        %v1384 = vpop.f32.mrf.mxu0
        %v1385 = vadd.f32 %v1311, %v1384
        %v1386 = vpop.f32.mrf.mxu0
        %1387 = vdwg.mxu0
        %1388 = vmatprep.subr.mxu0 0.0
        %1389 = vmatpush1.xpose.msra.mxu0 0.0
        %1390 = vmatprep.subr.mxu0 0.0
        %1391 = vmatpush1.xpose.msra.mxu0 0.0
        %1392 = vmatprep.subr.mxu0 0.0
        %1393 = vmatpush1.xpose.msra.mxu0 0.0
        %1394 = vmatprep.subr.mxu0 0.0
        %1395 = vmatpush1.xpose.msra.mxu0 0.0
        %1396 = vmatprep.subr.mxu0 0.0
        %1397 = vmatpush1.xpose.msra.mxu0 0.0
        %1398 = vmatprep.subr.mxu0 0.0
        %1399 = vmatpush1.xpose.msra.mxu0 0.0
        %1400 = vmatprep.subr.mxu0 0.0
        %1401 = vmatpush1.xpose.msra.mxu0 0.0
        %1402 = vmatprep.subr.mxu0 0.0
        %1403 = vmatpush1.xpose.msra.mxu0 0.0
        %1404 = vmatprep.subr.mxu0 0.0
        %1405 = vmatpush1.xpose.msra.mxu0 0.0
        %1406 = vmatprep.subr.mxu0 0.0
        %1407 = vmatpush1.xpose.msra.mxu0 0.0
        %1408 = vmatprep.subr.mxu0 0.0
        %1409 = vmatpush1.xpose.msra.mxu0 0.0
        %1410 = vmatprep.subr.mxu0 0.0
        %1411 = vmatpush1.xpose.msra.mxu0 0.0
        %1412 = vmatprep.subr.mxu0 0.0
        %1413 = vmatpush1.xpose.msra.mxu0 0.0
        %1414 = vmatprep.subr.mxu0 0.0
        %1415 = vmatpush1.xpose.msra.mxu0 0.0
        %1416 = vmatprep.subr.mxu0 0.0
        %1417 = vmatpush1.xpose.msra.mxu0 0.0
        %1418 = vmatprep.subr.mxu0 0.0
        %v1419 = vand.u32 %v1086, 4294901760
        %v1420 = vsub.f32 %v1086, %v1419
        %v1421 = vand.u32 %v1420, 4294901760
        %1422 = vmatpush1.xpose.msra.mxu0 %v1421
        %1423 = vmatprep.subr.mxu0 0.0
        %1424 = vmatpush2.xpose.msra.mxu0 0.0
        %1425 = vmatprep.subr.mxu0 0.0
        %1426 = vmatpush2.xpose.msra.mxu0 0.0
        %1427 = vmatprep.subr.mxu0 0.0
        %1428 = vmatpush2.xpose.msra.mxu0 0.0
        %1429 = vmatprep.subr.mxu0 0.0
        %1430 = vmatpush2.xpose.msra.mxu0 0.0
        %1431 = vmatprep.subr.mxu0 0.0
        %1432 = vmatpush2.xpose.msra.mxu0 0.0
        %1433 = vmatprep.subr.mxu0 0.0
        %1434 = vmatpush2.xpose.msra.mxu0 0.0
        %1435 = vmatprep.subr.mxu0 0.0
        %1436 = vmatpush2.xpose.msra.mxu0 0.0
        %1437 = vmatprep.subr.mxu0 0.0
        %1438 = vmatpush2.xpose.msra.mxu0 0.0
        %1439 = vmatprep.subr.mxu0 0.0
        %1440 = vmatpush2.xpose.msra.mxu0 0.0
        %1441 = vmatprep.subr.mxu0 0.0
        %1442 = vmatpush2.xpose.msra.mxu0 0.0
        %1443 = vmatprep.subr.mxu0 0.0
        %1444 = vmatpush2.xpose.msra.mxu0 0.0
        %1445 = vmatprep.subr.mxu0 0.0
        %1446 = vmatpush2.xpose.msra.mxu0 0.0
        %1447 = vmatprep.subr.mxu0 0.0
        %1448 = vmatpush2.xpose.msra.mxu0 0.0
        %1449 = vmatprep.subr.mxu0 0.0
        %1450 = vmatpush2.xpose.msra.mxu0 0.0
        %1451 = vmatprep.subr.mxu0 0.0
        %1452 = vmatpush2.xpose.msra.mxu0 0.0
        %1453 = vmatprep.subr.mxu0 0.0
        %1454 = vmatpush2.xpose.msra.mxu0 0.0
        %1455 = vmatprep.mubr.f32.mxu0 0.0
        %v1456 = vand.u32 %v1084, 4294901760
        %1457 = vmatmul.mubr.f32.gmra.mxu0 %v1456
        %v1458 = vpop.f32.mrf.mxu0
        %v1459 = vadd.f32 %v1385, %v1458
        %v1460 = vpop.f32.mrf.mxu0
        %1461 = vdwg.mxu0
        %1462 = vmatprep.subr.mxu0 0.0
        %1463 = vmatpush1.xpose.msra.mxu0 0.0
        %1464 = vmatprep.subr.mxu0 0.0
        %1465 = vmatpush1.xpose.msra.mxu0 0.0
        %1466 = vmatprep.subr.mxu0 0.0
        %1467 = vmatpush1.xpose.msra.mxu0 0.0
        %1468 = vmatprep.subr.mxu0 0.0
        %1469 = vmatpush1.xpose.msra.mxu0 0.0
        %1470 = vmatprep.subr.mxu0 0.0
        %1471 = vmatpush1.xpose.msra.mxu0 0.0
        %1472 = vmatprep.subr.mxu0 0.0
        %1473 = vmatpush1.xpose.msra.mxu0 0.0
        %1474 = vmatprep.subr.mxu0 0.0
        %1475 = vmatpush1.xpose.msra.mxu0 0.0
        %1476 = vmatprep.subr.mxu0 0.0
        %1477 = vmatpush1.xpose.msra.mxu0 0.0
        %1478 = vmatprep.subr.mxu0 0.0
        %1479 = vmatpush1.xpose.msra.mxu0 0.0
        %1480 = vmatprep.subr.mxu0 0.0
        %1481 = vmatpush1.xpose.msra.mxu0 0.0
        %1482 = vmatprep.subr.mxu0 0.0
        %1483 = vmatpush1.xpose.msra.mxu0 0.0
        %1484 = vmatprep.subr.mxu0 0.0
        %1485 = vmatpush1.xpose.msra.mxu0 0.0
        %1486 = vmatprep.subr.mxu0 0.0
        %1487 = vmatpush1.xpose.msra.mxu0 0.0
        %1488 = vmatprep.subr.mxu0 0.0
        %1489 = vmatpush1.xpose.msra.mxu0 0.0
        %1490 = vmatprep.subr.mxu0 0.0
        %1491 = vmatpush1.xpose.msra.mxu0 0.0
        %1492 = vmatprep.subr.mxu0 0.0
        %v1493 = vand.u32 %v1086, 4294901760
        %1494 = vmatpush1.xpose.msra.mxu0 %v1493
        %1495 = vmatprep.subr.mxu0 0.0
        %1496 = vmatpush2.xpose.msra.mxu0 0.0
        %1497 = vmatprep.subr.mxu0 0.0
        %1498 = vmatpush2.xpose.msra.mxu0 0.0
        %1499 = vmatprep.subr.mxu0 0.0
        %1500 = vmatpush2.xpose.msra.mxu0 0.0
        %1501 = vmatprep.subr.mxu0 0.0
        %1502 = vmatpush2.xpose.msra.mxu0 0.0
        %1503 = vmatprep.subr.mxu0 0.0
        %1504 = vmatpush2.xpose.msra.mxu0 0.0
        %1505 = vmatprep.subr.mxu0 0.0
        %1506 = vmatpush2.xpose.msra.mxu0 0.0
        %1507 = vmatprep.subr.mxu0 0.0
        %1508 = vmatpush2.xpose.msra.mxu0 0.0
        %1509 = vmatprep.subr.mxu0 0.0
        %1510 = vmatpush2.xpose.msra.mxu0 0.0
        %1511 = vmatprep.subr.mxu0 0.0
        %1512 = vmatpush2.xpose.msra.mxu0 0.0
        %1513 = vmatprep.subr.mxu0 0.0
        %1514 = vmatpush2.xpose.msra.mxu0 0.0
        %1515 = vmatprep.subr.mxu0 0.0
        %1516 = vmatpush2.xpose.msra.mxu0 0.0
        %1517 = vmatprep.subr.mxu0 0.0
        %1518 = vmatpush2.xpose.msra.mxu0 0.0
        %1519 = vmatprep.subr.mxu0 0.0
        %1520 = vmatpush2.xpose.msra.mxu0 0.0
        %1521 = vmatprep.subr.mxu0 0.0
        %1522 = vmatpush2.xpose.msra.mxu0 0.0
        %1523 = vmatprep.subr.mxu0 0.0
        %1524 = vmatpush2.xpose.msra.mxu0 0.0
        %1525 = vmatprep.subr.mxu0 0.0
        %1526 = vmatpush2.xpose.msra.mxu0 0.0
        %1527 = vmatprep.mubr.f32.mxu0 0.0
        %v1528 = vand.u32 %v1084, 4294901760
        %1529 = vmatmul.mubr.f32.gmra.mxu0 %v1528
        %v1530 = vpop.f32.mrf.mxu0
        %v1531 = vadd.f32 %v1459, %v1530
        %v1532 = vpop.f32.mrf.mxu0
        %1533 = vdwg.mxu0
        %v1534 = vmul.f32 %v1531, 0.35355338
        %v1535 = vadd.f32 %v1534, %v614
        %v1536 = vsel %vm158, %v1535, -inf
        %1537 = vmax.xlane.f32.xlu0 %v1536
        %v1538 = vpop.xlane.xlu0 %1537
        %v1539 = vsub.f32 %v1535, %v1538
        %v1540 = vmul.f32 %v1539, 1.442695
        %v1541 = vpow.pop %v1540
        %v1542 = vsel %vm158, %v1541, 0.0
        %1543 = vadd.xlane.f32.xlu0 %v1542
        %v1544 = vpop.xlane.xlu0 %1543
        %v1545 = vrcp.pop %v1544
        %v1546 = vmul.f32 %v1541, %v1545
        %1547 = vrot.lane.b32.xlu0 %v153, 56
        %v1548 = vpop.permute.xlu0 %1547
        %v1551 = vsel %vm158, %v1546, 0
        %1553 = vmatprep.subr.mxu0 0.0
        %1554 = vmatpush1.msra.mxu0 0.0
        %1555 = vmatprep.subr.mxu0 0.0
        %1556 = vmatpush1.msra.mxu0 0.0
        %1557 = vmatprep.subr.mxu0 0.0
        %1558 = vmatpush1.msra.mxu0 0.0
        %1559 = vmatprep.subr.mxu0 0.0
        %1560 = vmatpush1.msra.mxu0 0.0
        %1561 = vmatprep.subr.mxu0 0.0
        %1562 = vmatpush1.msra.mxu0 0.0
        %1563 = vmatprep.subr.mxu0 0.0
        %1564 = vmatpush1.msra.mxu0 0.0
        %1565 = vmatprep.subr.mxu0 0.0
        %1566 = vmatpush1.msra.mxu0 0.0
        %1567 = vmatprep.subr.mxu0 0.0
        %1568 = vmatpush1.msra.mxu0 0.0
        %1569 = vmatprep.subr.mxu0 0.0
        %1570 = vmatpush1.msra.mxu0 0.0
        %1571 = vmatprep.subr.mxu0 0.0
        %1572 = vmatpush1.msra.mxu0 0.0
        %1573 = vmatprep.subr.mxu0 0.0
        %1574 = vmatpush1.msra.mxu0 0.0
        %1575 = vmatprep.subr.mxu0 0.0
        %1576 = vmatpush1.msra.mxu0 0.0
        %1577 = vmatprep.subr.mxu0 0.0
        %1578 = vmatpush1.msra.mxu0 0.0
        %1579 = vmatprep.subr.mxu0 0.0
        %1580 = vmatpush1.msra.mxu0 0.0
        %1581 = vmatprep.subr.mxu0 0.0
        %1582 = vmatpush1.msra.mxu0 0.0
        %1583 = vmatprep.subr.mxu0 0.0
        %v1584 = vand.u32 %v1548, 4294901760
        %1585 = vmatpush1.msra.mxu0 %v1584
        %1586 = vmatprep.subr.mxu0 0.0
        %1587 = vmatpush2.msra.mxu0 0.0
        %1588 = vmatprep.subr.mxu0 0.0
        %1589 = vmatpush2.msra.mxu0 0.0
        %1590 = vmatprep.subr.mxu0 0.0
        %1591 = vmatpush2.msra.mxu0 0.0
        %1592 = vmatprep.subr.mxu0 0.0
        %1593 = vmatpush2.msra.mxu0 0.0
        %1594 = vmatprep.subr.mxu0 0.0
        %1595 = vmatpush2.msra.mxu0 0.0
        %1596 = vmatprep.subr.mxu0 0.0
        %1597 = vmatpush2.msra.mxu0 0.0
        %1598 = vmatprep.subr.mxu0 0.0
        %1599 = vmatpush2.msra.mxu0 0.0
        %1600 = vmatprep.subr.mxu0 0.0
        %1601 = vmatpush2.msra.mxu0 0.0
        %1602 = vmatprep.subr.mxu0 0.0
        %1603 = vmatpush2.msra.mxu0 0.0
        %1604 = vmatprep.subr.mxu0 0.0
        %1605 = vmatpush2.msra.mxu0 0.0
        %1606 = vmatprep.subr.mxu0 0.0
        %1607 = vmatpush2.msra.mxu0 0.0
        %1608 = vmatprep.subr.mxu0 0.0
        %1609 = vmatpush2.msra.mxu0 0.0
        %1610 = vmatprep.subr.mxu0 0.0
        %1611 = vmatpush2.msra.mxu0 0.0
        %1612 = vmatprep.subr.mxu0 0.0
        %1613 = vmatpush2.msra.mxu0 0.0
        %1614 = vmatprep.subr.mxu0 0.0
        %1615 = vmatpush2.msra.mxu0 0.0
        %1616 = vmatprep.subr.mxu0 0.0
        %1617 = vmatpush2.msra.mxu0 0.0
        %1618 = vmatprep.mubr.f32.mxu0 0.0
        %v1619 = vand.u32 %v1551, 4294901760
        %v1620 = vsub.f32 %v1551, %v1619
        %v1621 = vand.u32 %v1620, 4294901760
        %v1622 = vsub.f32 %v1620, %v1621
        %v1623 = vand.u32 %v1622, 4294901760
        %1624 = vmatmul.mubr.f32.gmra.mxu0 %v1623
        %v1625 = vpop.f32.mrf.mxu0
        %v1626 = vadd.f32 0.0, %v1625
        %v1627 = vpop.f32.mrf.mxu0
        %1628 = vdwg.mxu0
        %1629 = vmatprep.subr.mxu0 0.0
        %1630 = vmatpush1.msra.mxu0 0.0
        %1631 = vmatprep.subr.mxu0 0.0
        %1632 = vmatpush1.msra.mxu0 0.0
        %1633 = vmatprep.subr.mxu0 0.0
        %1634 = vmatpush1.msra.mxu0 0.0
        %1635 = vmatprep.subr.mxu0 0.0
        %1636 = vmatpush1.msra.mxu0 0.0
        %1637 = vmatprep.subr.mxu0 0.0
        %1638 = vmatpush1.msra.mxu0 0.0
        %1639 = vmatprep.subr.mxu0 0.0
        %1640 = vmatpush1.msra.mxu0 0.0
        %1641 = vmatprep.subr.mxu0 0.0
        %1642 = vmatpush1.msra.mxu0 0.0
        %1643 = vmatprep.subr.mxu0 0.0
        %1644 = vmatpush1.msra.mxu0 0.0
        %1645 = vmatprep.subr.mxu0 0.0
        %1646 = vmatpush1.msra.mxu0 0.0
        %1647 = vmatprep.subr.mxu0 0.0
        %1648 = vmatpush1.msra.mxu0 0.0
        %1649 = vmatprep.subr.mxu0 0.0
        %1650 = vmatpush1.msra.mxu0 0.0
        %1651 = vmatprep.subr.mxu0 0.0
        %1652 = vmatpush1.msra.mxu0 0.0
        %1653 = vmatprep.subr.mxu0 0.0
        %1654 = vmatpush1.msra.mxu0 0.0
        %1655 = vmatprep.subr.mxu0 0.0
        %1656 = vmatpush1.msra.mxu0 0.0
        %1657 = vmatprep.subr.mxu0 0.0
        %1658 = vmatpush1.msra.mxu0 0.0
        %1659 = vmatprep.subr.mxu0 0.0
        %v1660 = vand.u32 %v1548, 4294901760
        %v1661 = vsub.f32 %v1548, %v1660
        %v1662 = vand.u32 %v1661, 4294901760
        %v1663 = vsub.f32 %v1661, %v1662
        %v1664 = vand.u32 %v1663, 4294901760
        %1665 = vmatpush1.msra.mxu0 %v1664
        %1666 = vmatprep.subr.mxu0 0.0
        %1667 = vmatpush2.msra.mxu0 0.0
        %1668 = vmatprep.subr.mxu0 0.0
        %1669 = vmatpush2.msra.mxu0 0.0
        %1670 = vmatprep.subr.mxu0 0.0
        %1671 = vmatpush2.msra.mxu0 0.0
        %1672 = vmatprep.subr.mxu0 0.0
        %1673 = vmatpush2.msra.mxu0 0.0
        %1674 = vmatprep.subr.mxu0 0.0
        %1675 = vmatpush2.msra.mxu0 0.0
        %1676 = vmatprep.subr.mxu0 0.0
        %1677 = vmatpush2.msra.mxu0 0.0
        %1678 = vmatprep.subr.mxu0 0.0
        %1679 = vmatpush2.msra.mxu0 0.0
        %1680 = vmatprep.subr.mxu0 0.0
        %1681 = vmatpush2.msra.mxu0 0.0
        %1682 = vmatprep.subr.mxu0 0.0
        %1683 = vmatpush2.msra.mxu0 0.0
        %1684 = vmatprep.subr.mxu0 0.0
        %1685 = vmatpush2.msra.mxu0 0.0
        %1686 = vmatprep.subr.mxu0 0.0
        %1687 = vmatpush2.msra.mxu0 0.0
        %1688 = vmatprep.subr.mxu0 0.0
        %1689 = vmatpush2.msra.mxu0 0.0
        %1690 = vmatprep.subr.mxu0 0.0
        %1691 = vmatpush2.msra.mxu0 0.0
        %1692 = vmatprep.subr.mxu0 0.0
        %1693 = vmatpush2.msra.mxu0 0.0
        %1694 = vmatprep.subr.mxu0 0.0
        %1695 = vmatpush2.msra.mxu0 0.0
        %1696 = vmatprep.subr.mxu0 0.0
        %1697 = vmatpush2.msra.mxu0 0.0
        %1698 = vmatprep.mubr.f32.mxu0 0.0
        %v1699 = vand.u32 %v1551, 4294901760
        %1700 = vmatmul.mubr.f32.gmra.mxu0 %v1699
        %v1701 = vpop.f32.mrf.mxu0
        %v1702 = vadd.f32 %v1626, %v1701
        %v1703 = vpop.f32.mrf.mxu0
        %1704 = vdwg.mxu0
        %1705 = vmatprep.subr.mxu0 0.0
        %1706 = vmatpush1.msra.mxu0 0.0
        %1707 = vmatprep.subr.mxu0 0.0
        %1708 = vmatpush1.msra.mxu0 0.0
        %1709 = vmatprep.subr.mxu0 0.0
        %1710 = vmatpush1.msra.mxu0 0.0
        %1711 = vmatprep.subr.mxu0 0.0
        %1712 = vmatpush1.msra.mxu0 0.0
        %1713 = vmatprep.subr.mxu0 0.0
        %1714 = vmatpush1.msra.mxu0 0.0
        %1715 = vmatprep.subr.mxu0 0.0
        %1716 = vmatpush1.msra.mxu0 0.0
        %1717 = vmatprep.subr.mxu0 0.0
        %1718 = vmatpush1.msra.mxu0 0.0
        %1719 = vmatprep.subr.mxu0 0.0
        %1720 = vmatpush1.msra.mxu0 0.0
        %1721 = vmatprep.subr.mxu0 0.0
        %1722 = vmatpush1.msra.mxu0 0.0
        %1723 = vmatprep.subr.mxu0 0.0
        %1724 = vmatpush1.msra.mxu0 0.0
        %1725 = vmatprep.subr.mxu0 0.0
        %1726 = vmatpush1.msra.mxu0 0.0
        %1727 = vmatprep.subr.mxu0 0.0
        %1728 = vmatpush1.msra.mxu0 0.0
        %1729 = vmatprep.subr.mxu0 0.0
        %1730 = vmatpush1.msra.mxu0 0.0
        %1731 = vmatprep.subr.mxu0 0.0
        %1732 = vmatpush1.msra.mxu0 0.0
        %1733 = vmatprep.subr.mxu0 0.0
        %1734 = vmatpush1.msra.mxu0 0.0
        %1735 = vmatprep.subr.mxu0 0.0
        %v1736 = vand.u32 %v1548, 4294901760
        %v1737 = vsub.f32 %v1548, %v1736
        %1738 = vmatpush1.msra.mxu0 %v1737
        %1739 = vmatprep.subr.mxu0 0.0
        %1740 = vmatpush2.msra.mxu0 0.0
        %1741 = vmatprep.subr.mxu0 0.0
        %1742 = vmatpush2.msra.mxu0 0.0
        %1743 = vmatprep.subr.mxu0 0.0
        %1744 = vmatpush2.msra.mxu0 0.0
        %1745 = vmatprep.subr.mxu0 0.0
        %1746 = vmatpush2.msra.mxu0 0.0
        %1747 = vmatprep.subr.mxu0 0.0
        %1748 = vmatpush2.msra.mxu0 0.0
        %1749 = vmatprep.subr.mxu0 0.0
        %1750 = vmatpush2.msra.mxu0 0.0
        %1751 = vmatprep.subr.mxu0 0.0
        %1752 = vmatpush2.msra.mxu0 0.0
        %1753 = vmatprep.subr.mxu0 0.0
        %1754 = vmatpush2.msra.mxu0 0.0
        %1755 = vmatprep.subr.mxu0 0.0
        %1756 = vmatpush2.msra.mxu0 0.0
        %1757 = vmatprep.subr.mxu0 0.0
        %1758 = vmatpush2.msra.mxu0 0.0
        %1759 = vmatprep.subr.mxu0 0.0
        %1760 = vmatpush2.msra.mxu0 0.0
        %1761 = vmatprep.subr.mxu0 0.0
        %1762 = vmatpush2.msra.mxu0 0.0
        %1763 = vmatprep.subr.mxu0 0.0
        %1764 = vmatpush2.msra.mxu0 0.0
        %1765 = vmatprep.subr.mxu0 0.0
        %1766 = vmatpush2.msra.mxu0 0.0
        %1767 = vmatprep.subr.mxu0 0.0
        %1768 = vmatpush2.msra.mxu0 0.0
        %1769 = vmatprep.subr.mxu0 0.0
        %1770 = vmatpush2.msra.mxu0 0.0
        %1771 = vmatprep.mubr.f32.mxu0 0.0
        %v1772 = vand.u32 %v1551, 4294901760
        %v1773 = vsub.f32 %v1551, %v1772
        %1774 = vmatmul.mubr.f32.gmra.mxu0 %v1773
        %v1775 = vpop.f32.mrf.mxu0
        %v1776 = vadd.f32 %v1702, %v1775
        %v1777 = vpop.f32.mrf.mxu0
        %1778 = vdwg.mxu0
        %1779 = vmatprep.subr.mxu0 0.0
        %1780 = vmatpush1.msra.mxu0 0.0
        %1781 = vmatprep.subr.mxu0 0.0
        %1782 = vmatpush1.msra.mxu0 0.0
        %1783 = vmatprep.subr.mxu0 0.0
        %1784 = vmatpush1.msra.mxu0 0.0
        %1785 = vmatprep.subr.mxu0 0.0
        %1786 = vmatpush1.msra.mxu0 0.0
        %1787 = vmatprep.subr.mxu0 0.0
        %1788 = vmatpush1.msra.mxu0 0.0
        %1789 = vmatprep.subr.mxu0 0.0
        %1790 = vmatpush1.msra.mxu0 0.0
        %1791 = vmatprep.subr.mxu0 0.0
        %1792 = vmatpush1.msra.mxu0 0.0
        %1793 = vmatprep.subr.mxu0 0.0
        %1794 = vmatpush1.msra.mxu0 0.0
        %1795 = vmatprep.subr.mxu0 0.0
        %1796 = vmatpush1.msra.mxu0 0.0
        %1797 = vmatprep.subr.mxu0 0.0
        %1798 = vmatpush1.msra.mxu0 0.0
        %1799 = vmatprep.subr.mxu0 0.0
        %1800 = vmatpush1.msra.mxu0 0.0
        %1801 = vmatprep.subr.mxu0 0.0
        %1802 = vmatpush1.msra.mxu0 0.0
        %1803 = vmatprep.subr.mxu0 0.0
        %1804 = vmatpush1.msra.mxu0 0.0
        %1805 = vmatprep.subr.mxu0 0.0
        %1806 = vmatpush1.msra.mxu0 0.0
        %1807 = vmatprep.subr.mxu0 0.0
        %1808 = vmatpush1.msra.mxu0 0.0
        %1809 = vmatprep.subr.mxu0 0.0
        %v1810 = vand.u32 %v1548, 4294901760
        %1811 = vmatpush1.msra.mxu0 %v1810
        %1812 = vmatprep.subr.mxu0 0.0
        %1813 = vmatpush2.msra.mxu0 0.0
        %1814 = vmatprep.subr.mxu0 0.0
        %1815 = vmatpush2.msra.mxu0 0.0
        %1816 = vmatprep.subr.mxu0 0.0
        %1817 = vmatpush2.msra.mxu0 0.0
        %1818 = vmatprep.subr.mxu0 0.0
        %1819 = vmatpush2.msra.mxu0 0.0
        %1820 = vmatprep.subr.mxu0 0.0
        %1821 = vmatpush2.msra.mxu0 0.0
        %1822 = vmatprep.subr.mxu0 0.0
        %1823 = vmatpush2.msra.mxu0 0.0
        %1824 = vmatprep.subr.mxu0 0.0
        %1825 = vmatpush2.msra.mxu0 0.0
        %1826 = vmatprep.subr.mxu0 0.0
        %1827 = vmatpush2.msra.mxu0 0.0
        %1828 = vmatprep.subr.mxu0 0.0
        %1829 = vmatpush2.msra.mxu0 0.0
        %1830 = vmatprep.subr.mxu0 0.0
        %1831 = vmatpush2.msra.mxu0 0.0
        %1832 = vmatprep.subr.mxu0 0.0
        %1833 = vmatpush2.msra.mxu0 0.0
        %1834 = vmatprep.subr.mxu0 0.0
        %1835 = vmatpush2.msra.mxu0 0.0
        %1836 = vmatprep.subr.mxu0 0.0
        %1837 = vmatpush2.msra.mxu0 0.0
        %1838 = vmatprep.subr.mxu0 0.0
        %1839 = vmatpush2.msra.mxu0 0.0
        %1840 = vmatprep.subr.mxu0 0.0
        %1841 = vmatpush2.msra.mxu0 0.0
        %1842 = vmatprep.subr.mxu0 0.0
        %1843 = vmatpush2.msra.mxu0 0.0
        %1844 = vmatprep.mubr.f32.mxu0 0.0
        %v1845 = vand.u32 %v1551, 4294901760
        %v1846 = vsub.f32 %v1551, %v1845
        %v1847 = vand.u32 %v1846, 4294901760
        %1848 = vmatmul.mubr.f32.gmra.mxu0 %v1847
        %v1849 = vpop.f32.mrf.mxu0
        %v1850 = vadd.f32 %v1776, %v1849
        %v1851 = vpop.f32.mrf.mxu0
        %1852 = vdwg.mxu0
        %1853 = vmatprep.subr.mxu0 0.0
        %1854 = vmatpush1.msra.mxu0 0.0
        %1855 = vmatprep.subr.mxu0 0.0
        %1856 = vmatpush1.msra.mxu0 0.0
        %1857 = vmatprep.subr.mxu0 0.0
        %1858 = vmatpush1.msra.mxu0 0.0
        %1859 = vmatprep.subr.mxu0 0.0
        %1860 = vmatpush1.msra.mxu0 0.0
        %1861 = vmatprep.subr.mxu0 0.0
        %1862 = vmatpush1.msra.mxu0 0.0
        %1863 = vmatprep.subr.mxu0 0.0
        %1864 = vmatpush1.msra.mxu0 0.0
        %1865 = vmatprep.subr.mxu0 0.0
        %1866 = vmatpush1.msra.mxu0 0.0
        %1867 = vmatprep.subr.mxu0 0.0
        %1868 = vmatpush1.msra.mxu0 0.0
        %1869 = vmatprep.subr.mxu0 0.0
        %1870 = vmatpush1.msra.mxu0 0.0
        %1871 = vmatprep.subr.mxu0 0.0
        %1872 = vmatpush1.msra.mxu0 0.0
        %1873 = vmatprep.subr.mxu0 0.0
        %1874 = vmatpush1.msra.mxu0 0.0
        %1875 = vmatprep.subr.mxu0 0.0
        %1876 = vmatpush1.msra.mxu0 0.0
        %1877 = vmatprep.subr.mxu0 0.0
        %1878 = vmatpush1.msra.mxu0 0.0
        %1879 = vmatprep.subr.mxu0 0.0
        %1880 = vmatpush1.msra.mxu0 0.0
        %1881 = vmatprep.subr.mxu0 0.0
        %1882 = vmatpush1.msra.mxu0 0.0
        %1883 = vmatprep.subr.mxu0 0.0
        %v1884 = vand.u32 %v1548, 4294901760
        %v1885 = vsub.f32 %v1548, %v1884
        %v1886 = vand.u32 %v1885, 4294901760
        %1887 = vmatpush1.msra.mxu0 %v1886
        %1888 = vmatprep.subr.mxu0 0.0
        %1889 = vmatpush2.msra.mxu0 0.0
        %1890 = vmatprep.subr.mxu0 0.0
        %1891 = vmatpush2.msra.mxu0 0.0
        %1892 = vmatprep.subr.mxu0 0.0
        %1893 = vmatpush2.msra.mxu0 0.0
        %1894 = vmatprep.subr.mxu0 0.0
        %1895 = vmatpush2.msra.mxu0 0.0
        %1896 = vmatprep.subr.mxu0 0.0
        %1897 = vmatpush2.msra.mxu0 0.0
        %1898 = vmatprep.subr.mxu0 0.0
        %1899 = vmatpush2.msra.mxu0 0.0
        %1900 = vmatprep.subr.mxu0 0.0
        %1901 = vmatpush2.msra.mxu0 0.0
        %1902 = vmatprep.subr.mxu0 0.0
        %1903 = vmatpush2.msra.mxu0 0.0
        %1904 = vmatprep.subr.mxu0 0.0
        %1905 = vmatpush2.msra.mxu0 0.0
        %1906 = vmatprep.subr.mxu0 0.0
        %1907 = vmatpush2.msra.mxu0 0.0
        %1908 = vmatprep.subr.mxu0 0.0
        %1909 = vmatpush2.msra.mxu0 0.0
        %1910 = vmatprep.subr.mxu0 0.0
        %1911 = vmatpush2.msra.mxu0 0.0
        %1912 = vmatprep.subr.mxu0 0.0
        %1913 = vmatpush2.msra.mxu0 0.0
        %1914 = vmatprep.subr.mxu0 0.0
        %1915 = vmatpush2.msra.mxu0 0.0
        %1916 = vmatprep.subr.mxu0 0.0
        %1917 = vmatpush2.msra.mxu0 0.0
        %1918 = vmatprep.subr.mxu0 0.0
        %1919 = vmatpush2.msra.mxu0 0.0
        %1920 = vmatprep.mubr.f32.mxu0 0.0
        %v1921 = vand.u32 %v1551, 4294901760
        %1922 = vmatmul.mubr.f32.gmra.mxu0 %v1921
        %v1923 = vpop.f32.mrf.mxu0
        %v1924 = vadd.f32 %v1850, %v1923
        %v1925 = vpop.f32.mrf.mxu0
        %1926 = vdwg.mxu0
        %1927 = vmatprep.subr.mxu0 0.0
        %1928 = vmatpush1.msra.mxu0 0.0
        %1929 = vmatprep.subr.mxu0 0.0
        %1930 = vmatpush1.msra.mxu0 0.0
        %1931 = vmatprep.subr.mxu0 0.0
        %1932 = vmatpush1.msra.mxu0 0.0
        %1933 = vmatprep.subr.mxu0 0.0
        %1934 = vmatpush1.msra.mxu0 0.0
        %1935 = vmatprep.subr.mxu0 0.0
        %1936 = vmatpush1.msra.mxu0 0.0
        %1937 = vmatprep.subr.mxu0 0.0
        %1938 = vmatpush1.msra.mxu0 0.0
        %1939 = vmatprep.subr.mxu0 0.0
        %1940 = vmatpush1.msra.mxu0 0.0
        %1941 = vmatprep.subr.mxu0 0.0
        %1942 = vmatpush1.msra.mxu0 0.0
        %1943 = vmatprep.subr.mxu0 0.0
        %1944 = vmatpush1.msra.mxu0 0.0
        %1945 = vmatprep.subr.mxu0 0.0
        %1946 = vmatpush1.msra.mxu0 0.0
        %1947 = vmatprep.subr.mxu0 0.0
        %1948 = vmatpush1.msra.mxu0 0.0
        %1949 = vmatprep.subr.mxu0 0.0
        %1950 = vmatpush1.msra.mxu0 0.0
        %1951 = vmatprep.subr.mxu0 0.0
        %1952 = vmatpush1.msra.mxu0 0.0
        %1953 = vmatprep.subr.mxu0 0.0
        %1954 = vmatpush1.msra.mxu0 0.0
        %1955 = vmatprep.subr.mxu0 0.0
        %1956 = vmatpush1.msra.mxu0 0.0
        %1957 = vmatprep.subr.mxu0 0.0
        %v1958 = vand.u32 %v1548, 4294901760
        %1959 = vmatpush1.msra.mxu0 %v1958
        %1960 = vmatprep.subr.mxu0 0.0
        %1961 = vmatpush2.msra.mxu0 0.0
        %1962 = vmatprep.subr.mxu0 0.0
        %1963 = vmatpush2.msra.mxu0 0.0
        %1964 = vmatprep.subr.mxu0 0.0
        %1965 = vmatpush2.msra.mxu0 0.0
        %1966 = vmatprep.subr.mxu0 0.0
        %1967 = vmatpush2.msra.mxu0 0.0
        %1968 = vmatprep.subr.mxu0 0.0
        %1969 = vmatpush2.msra.mxu0 0.0
        %1970 = vmatprep.subr.mxu0 0.0
        %1971 = vmatpush2.msra.mxu0 0.0
        %1972 = vmatprep.subr.mxu0 0.0
        %1973 = vmatpush2.msra.mxu0 0.0
        %1974 = vmatprep.subr.mxu0 0.0
        %1975 = vmatpush2.msra.mxu0 0.0
        %1976 = vmatprep.subr.mxu0 0.0
        %1977 = vmatpush2.msra.mxu0 0.0
        %1978 = vmatprep.subr.mxu0 0.0
        %1979 = vmatpush2.msra.mxu0 0.0
        %1980 = vmatprep.subr.mxu0 0.0
        %1981 = vmatpush2.msra.mxu0 0.0
        %1982 = vmatprep.subr.mxu0 0.0
        %1983 = vmatpush2.msra.mxu0 0.0
        %1984 = vmatprep.subr.mxu0 0.0
        %1985 = vmatpush2.msra.mxu0 0.0
        %1986 = vmatprep.subr.mxu0 0.0
        %1987 = vmatpush2.msra.mxu0 0.0
        %1988 = vmatprep.subr.mxu0 0.0
        %1989 = vmatpush2.msra.mxu0 0.0
        %1990 = vmatprep.subr.mxu0 0.0
        %1991 = vmatpush2.msra.mxu0 0.0
        %1992 = vmatprep.mubr.f32.mxu0 0.0
        %v1993 = vand.u32 %v1551, 4294901760
        %1994 = vmatmul.mubr.f32.gmra.mxu0 %v1993
        %v1995 = vpop.f32.mrf.mxu0
        %v1996 = vadd.f32 %v1924, %v1995
        %v1997 = vpop.f32.mrf.mxu0
        %1998 = vdwg.mxu0
        %1999 = vrot.lane.b32.xlu0 %v153, 112
        %v2000 = vpop.permute.xlu0 %1999
        %2001 = vrot.lane.b32.xlu0 %v153, 80
        %v2002 = vpop.permute.xlu0 %2001
        %v2003 = vsel %vm158, %v2000, 0
        %v2005 = vsel %vm158, %v2002, 0
        %2007 = vmatprep.subr.mxu0 0.0
        %2008 = vmatpush1.xpose.msra.mxu0 0.0
        %2009 = vmatprep.subr.mxu0 0.0
        %2010 = vmatpush1.xpose.msra.mxu0 0.0
        %2011 = vmatprep.subr.mxu0 0.0
        %2012 = vmatpush1.xpose.msra.mxu0 0.0
        %2013 = vmatprep.subr.mxu0 0.0
        %2014 = vmatpush1.xpose.msra.mxu0 0.0
        %2015 = vmatprep.subr.mxu0 0.0
        %2016 = vmatpush1.xpose.msra.mxu0 0.0
        %2017 = vmatprep.subr.mxu0 0.0
        %2018 = vmatpush1.xpose.msra.mxu0 0.0
        %2019 = vmatprep.subr.mxu0 0.0
        %2020 = vmatpush1.xpose.msra.mxu0 0.0
        %2021 = vmatprep.subr.mxu0 0.0
        %2022 = vmatpush1.xpose.msra.mxu0 0.0
        %2023 = vmatprep.subr.mxu0 0.0
        %2024 = vmatpush1.xpose.msra.mxu0 0.0
        %2025 = vmatprep.subr.mxu0 0.0
        %2026 = vmatpush1.xpose.msra.mxu0 0.0
        %2027 = vmatprep.subr.mxu0 0.0
        %2028 = vmatpush1.xpose.msra.mxu0 0.0
        %2029 = vmatprep.subr.mxu0 0.0
        %2030 = vmatpush1.xpose.msra.mxu0 0.0
        %2031 = vmatprep.subr.mxu0 0.0
        %2032 = vmatpush1.xpose.msra.mxu0 0.0
        %2033 = vmatprep.subr.mxu0 0.0
        %2034 = vmatpush1.xpose.msra.mxu0 0.0
        %2035 = vmatprep.subr.mxu0 0.0
        %2036 = vmatpush1.xpose.msra.mxu0 0.0
        %2037 = vmatprep.subr.mxu0 0.0
        %v2038 = vand.u32 %v2005, 4294901760
        %2039 = vmatpush1.xpose.msra.mxu0 %v2038
        %2040 = vmatprep.subr.mxu0 0.0
        %2041 = vmatpush2.xpose.msra.mxu0 0.0
        %2042 = vmatprep.subr.mxu0 0.0
        %2043 = vmatpush2.xpose.msra.mxu0 0.0
        %2044 = vmatprep.subr.mxu0 0.0
        %2045 = vmatpush2.xpose.msra.mxu0 0.0
        %2046 = vmatprep.subr.mxu0 0.0
        %2047 = vmatpush2.xpose.msra.mxu0 0.0
        %2048 = vmatprep.subr.mxu0 0.0
        %2049 = vmatpush2.xpose.msra.mxu0 0.0
        %2050 = vmatprep.subr.mxu0 0.0
        %2051 = vmatpush2.xpose.msra.mxu0 0.0
        %2052 = vmatprep.subr.mxu0 0.0
        %2053 = vmatpush2.xpose.msra.mxu0 0.0
        %2054 = vmatprep.subr.mxu0 0.0
        %2055 = vmatpush2.xpose.msra.mxu0 0.0
        %2056 = vmatprep.subr.mxu0 0.0
        %2057 = vmatpush2.xpose.msra.mxu0 0.0
        %2058 = vmatprep.subr.mxu0 0.0
        %2059 = vmatpush2.xpose.msra.mxu0 0.0
        %2060 = vmatprep.subr.mxu0 0.0
        %2061 = vmatpush2.xpose.msra.mxu0 0.0
        %2062 = vmatprep.subr.mxu0 0.0
        %2063 = vmatpush2.xpose.msra.mxu0 0.0
        %2064 = vmatprep.subr.mxu0 0.0
        %2065 = vmatpush2.xpose.msra.mxu0 0.0
        %2066 = vmatprep.subr.mxu0 0.0
        %2067 = vmatpush2.xpose.msra.mxu0 0.0
        %2068 = vmatprep.subr.mxu0 0.0
        %2069 = vmatpush2.xpose.msra.mxu0 0.0
        %2070 = vmatprep.subr.mxu0 0.0
        %2071 = vmatpush2.xpose.msra.mxu0 0.0
        %2072 = vmatprep.mubr.f32.mxu0 0.0
        %v2073 = vand.u32 %v2003, 4294901760
        %v2074 = vsub.f32 %v2003, %v2073
        %v2075 = vand.u32 %v2074, 4294901760
        %v2076 = vsub.f32 %v2074, %v2075
        %v2077 = vand.u32 %v2076, 4294901760
        %2078 = vmatmul.mubr.f32.gmra.mxu0 %v2077
        %v2079 = vpop.f32.mrf.mxu0
        %v2080 = vadd.f32 0.0, %v2079
        %v2081 = vpop.f32.mrf.mxu0
        %2082 = vdwg.mxu0
        %2083 = vmatprep.subr.mxu0 0.0
        %2084 = vmatpush1.xpose.msra.mxu0 0.0
        %2085 = vmatprep.subr.mxu0 0.0
        %2086 = vmatpush1.xpose.msra.mxu0 0.0
        %2087 = vmatprep.subr.mxu0 0.0
        %2088 = vmatpush1.xpose.msra.mxu0 0.0
        %2089 = vmatprep.subr.mxu0 0.0
        %2090 = vmatpush1.xpose.msra.mxu0 0.0
        %2091 = vmatprep.subr.mxu0 0.0
        %2092 = vmatpush1.xpose.msra.mxu0 0.0
        %2093 = vmatprep.subr.mxu0 0.0
        %2094 = vmatpush1.xpose.msra.mxu0 0.0
        %2095 = vmatprep.subr.mxu0 0.0
        %2096 = vmatpush1.xpose.msra.mxu0 0.0
        %2097 = vmatprep.subr.mxu0 0.0
        %2098 = vmatpush1.xpose.msra.mxu0 0.0
        %2099 = vmatprep.subr.mxu0 0.0
        %2100 = vmatpush1.xpose.msra.mxu0 0.0
        %2101 = vmatprep.subr.mxu0 0.0
        %2102 = vmatpush1.xpose.msra.mxu0 0.0
        %2103 = vmatprep.subr.mxu0 0.0
        %2104 = vmatpush1.xpose.msra.mxu0 0.0
        %2105 = vmatprep.subr.mxu0 0.0
        %2106 = vmatpush1.xpose.msra.mxu0 0.0
        %2107 = vmatprep.subr.mxu0 0.0
        %2108 = vmatpush1.xpose.msra.mxu0 0.0
        %2109 = vmatprep.subr.mxu0 0.0
        %2110 = vmatpush1.xpose.msra.mxu0 0.0
        %2111 = vmatprep.subr.mxu0 0.0
        %2112 = vmatpush1.xpose.msra.mxu0 0.0
        %2113 = vmatprep.subr.mxu0 0.0
        %v2114 = vand.u32 %v2005, 4294901760
        %v2115 = vsub.f32 %v2005, %v2114
        %v2116 = vand.u32 %v2115, 4294901760
        %v2117 = vsub.f32 %v2115, %v2116
        %v2118 = vand.u32 %v2117, 4294901760
        %2119 = vmatpush1.xpose.msra.mxu0 %v2118
        %2120 = vmatprep.subr.mxu0 0.0
        %2121 = vmatpush2.xpose.msra.mxu0 0.0
        %2122 = vmatprep.subr.mxu0 0.0
        %2123 = vmatpush2.xpose.msra.mxu0 0.0
        %2124 = vmatprep.subr.mxu0 0.0
        %2125 = vmatpush2.xpose.msra.mxu0 0.0
        %2126 = vmatprep.subr.mxu0 0.0
        %2127 = vmatpush2.xpose.msra.mxu0 0.0
        %2128 = vmatprep.subr.mxu0 0.0
        %2129 = vmatpush2.xpose.msra.mxu0 0.0
        %2130 = vmatprep.subr.mxu0 0.0
        %2131 = vmatpush2.xpose.msra.mxu0 0.0
        %2132 = vmatprep.subr.mxu0 0.0
        %2133 = vmatpush2.xpose.msra.mxu0 0.0
        %2134 = vmatprep.subr.mxu0 0.0
        %2135 = vmatpush2.xpose.msra.mxu0 0.0
        %2136 = vmatprep.subr.mxu0 0.0
        %2137 = vmatpush2.xpose.msra.mxu0 0.0
        %2138 = vmatprep.subr.mxu0 0.0
        %2139 = vmatpush2.xpose.msra.mxu0 0.0
        %2140 = vmatprep.subr.mxu0 0.0
        %2141 = vmatpush2.xpose.msra.mxu0 0.0
        %2142 = vmatprep.subr.mxu0 0.0
        %2143 = vmatpush2.xpose.msra.mxu0 0.0
        %2144 = vmatprep.subr.mxu0 0.0
        %2145 = vmatpush2.xpose.msra.mxu0 0.0
        %2146 = vmatprep.subr.mxu0 0.0
        %2147 = vmatpush2.xpose.msra.mxu0 0.0
        %2148 = vmatprep.subr.mxu0 0.0
        %2149 = vmatpush2.xpose.msra.mxu0 0.0
        %2150 = vmatprep.subr.mxu0 0.0
        %2151 = vmatpush2.xpose.msra.mxu0 0.0
        %2152 = vmatprep.mubr.f32.mxu0 0.0
        %v2153 = vand.u32 %v2003, 4294901760
        %2154 = vmatmul.mubr.f32.gmra.mxu0 %v2153
        %v2155 = vpop.f32.mrf.mxu0
        %v2156 = vadd.f32 %v2080, %v2155
        %v2157 = vpop.f32.mrf.mxu0
        %2158 = vdwg.mxu0
        %2159 = vmatprep.subr.mxu0 0.0
        %2160 = vmatpush1.xpose.msra.mxu0 0.0
        %2161 = vmatprep.subr.mxu0 0.0
        %2162 = vmatpush1.xpose.msra.mxu0 0.0
        %2163 = vmatprep.subr.mxu0 0.0
        %2164 = vmatpush1.xpose.msra.mxu0 0.0
        %2165 = vmatprep.subr.mxu0 0.0
        %2166 = vmatpush1.xpose.msra.mxu0 0.0
        %2167 = vmatprep.subr.mxu0 0.0
        %2168 = vmatpush1.xpose.msra.mxu0 0.0
        %2169 = vmatprep.subr.mxu0 0.0
        %2170 = vmatpush1.xpose.msra.mxu0 0.0
        %2171 = vmatprep.subr.mxu0 0.0
        %2172 = vmatpush1.xpose.msra.mxu0 0.0
        %2173 = vmatprep.subr.mxu0 0.0
        %2174 = vmatpush1.xpose.msra.mxu0 0.0
        %2175 = vmatprep.subr.mxu0 0.0
        %2176 = vmatpush1.xpose.msra.mxu0 0.0
        %2177 = vmatprep.subr.mxu0 0.0
        %2178 = vmatpush1.xpose.msra.mxu0 0.0
        %2179 = vmatprep.subr.mxu0 0.0
        %2180 = vmatpush1.xpose.msra.mxu0 0.0
        %2181 = vmatprep.subr.mxu0 0.0
        %2182 = vmatpush1.xpose.msra.mxu0 0.0
        %2183 = vmatprep.subr.mxu0 0.0
        %2184 = vmatpush1.xpose.msra.mxu0 0.0
        %2185 = vmatprep.subr.mxu0 0.0
        %2186 = vmatpush1.xpose.msra.mxu0 0.0
        %2187 = vmatprep.subr.mxu0 0.0
        %2188 = vmatpush1.xpose.msra.mxu0 0.0
        %2189 = vmatprep.subr.mxu0 0.0
        %v2190 = vand.u32 %v2005, 4294901760
        %v2191 = vsub.f32 %v2005, %v2190
        %2192 = vmatpush1.xpose.msra.mxu0 %v2191
        %2193 = vmatprep.subr.mxu0 0.0
        %2194 = vmatpush2.xpose.msra.mxu0 0.0
        %2195 = vmatprep.subr.mxu0 0.0
        %2196 = vmatpush2.xpose.msra.mxu0 0.0
        %2197 = vmatprep.subr.mxu0 0.0
        %2198 = vmatpush2.xpose.msra.mxu0 0.0
        %2199 = vmatprep.subr.mxu0 0.0
        %2200 = vmatpush2.xpose.msra.mxu0 0.0
        %2201 = vmatprep.subr.mxu0 0.0
        %2202 = vmatpush2.xpose.msra.mxu0 0.0
        %2203 = vmatprep.subr.mxu0 0.0
        %2204 = vmatpush2.xpose.msra.mxu0 0.0
        %2205 = vmatprep.subr.mxu0 0.0
        %2206 = vmatpush2.xpose.msra.mxu0 0.0
        %2207 = vmatprep.subr.mxu0 0.0
        %2208 = vmatpush2.xpose.msra.mxu0 0.0
        %2209 = vmatprep.subr.mxu0 0.0
        %2210 = vmatpush2.xpose.msra.mxu0 0.0
        %2211 = vmatprep.subr.mxu0 0.0
        %2212 = vmatpush2.xpose.msra.mxu0 0.0
        %2213 = vmatprep.subr.mxu0 0.0
        %2214 = vmatpush2.xpose.msra.mxu0 0.0
        %2215 = vmatprep.subr.mxu0 0.0
        %2216 = vmatpush2.xpose.msra.mxu0 0.0
        %2217 = vmatprep.subr.mxu0 0.0
        %2218 = vmatpush2.xpose.msra.mxu0 0.0
        %2219 = vmatprep.subr.mxu0 0.0
        %2220 = vmatpush2.xpose.msra.mxu0 0.0
        %2221 = vmatprep.subr.mxu0 0.0
        %2222 = vmatpush2.xpose.msra.mxu0 0.0
        %2223 = vmatprep.subr.mxu0 0.0
        %2224 = vmatpush2.xpose.msra.mxu0 0.0
        %2225 = vmatprep.mubr.f32.mxu0 0.0
        %v2226 = vand.u32 %v2003, 4294901760
        %v2227 = vsub.f32 %v2003, %v2226
        %2228 = vmatmul.mubr.f32.gmra.mxu0 %v2227
        %v2229 = vpop.f32.mrf.mxu0
        %v2230 = vadd.f32 %v2156, %v2229
        %v2231 = vpop.f32.mrf.mxu0
        %2232 = vdwg.mxu0
        %2233 = vmatprep.subr.mxu0 0.0
        %2234 = vmatpush1.xpose.msra.mxu0 0.0
        %2235 = vmatprep.subr.mxu0 0.0
        %2236 = vmatpush1.xpose.msra.mxu0 0.0
        %2237 = vmatprep.subr.mxu0 0.0
        %2238 = vmatpush1.xpose.msra.mxu0 0.0
        %2239 = vmatprep.subr.mxu0 0.0
        %2240 = vmatpush1.xpose.msra.mxu0 0.0
        %2241 = vmatprep.subr.mxu0 0.0
        %2242 = vmatpush1.xpose.msra.mxu0 0.0
        %2243 = vmatprep.subr.mxu0 0.0
        %2244 = vmatpush1.xpose.msra.mxu0 0.0
        %2245 = vmatprep.subr.mxu0 0.0
        %2246 = vmatpush1.xpose.msra.mxu0 0.0
        %2247 = vmatprep.subr.mxu0 0.0
        %2248 = vmatpush1.xpose.msra.mxu0 0.0
        %2249 = vmatprep.subr.mxu0 0.0
        %2250 = vmatpush1.xpose.msra.mxu0 0.0
        %2251 = vmatprep.subr.mxu0 0.0
        %2252 = vmatpush1.xpose.msra.mxu0 0.0
        %2253 = vmatprep.subr.mxu0 0.0
        %2254 = vmatpush1.xpose.msra.mxu0 0.0
        %2255 = vmatprep.subr.mxu0 0.0
        %2256 = vmatpush1.xpose.msra.mxu0 0.0
        %2257 = vmatprep.subr.mxu0 0.0
        %2258 = vmatpush1.xpose.msra.mxu0 0.0
        %2259 = vmatprep.subr.mxu0 0.0
        %2260 = vmatpush1.xpose.msra.mxu0 0.0
        %2261 = vmatprep.subr.mxu0 0.0
        %2262 = vmatpush1.xpose.msra.mxu0 0.0
        %2263 = vmatprep.subr.mxu0 0.0
        %v2264 = vand.u32 %v2005, 4294901760
        %2265 = vmatpush1.xpose.msra.mxu0 %v2264
        %2266 = vmatprep.subr.mxu0 0.0
        %2267 = vmatpush2.xpose.msra.mxu0 0.0
        %2268 = vmatprep.subr.mxu0 0.0
        %2269 = vmatpush2.xpose.msra.mxu0 0.0
        %2270 = vmatprep.subr.mxu0 0.0
        %2271 = vmatpush2.xpose.msra.mxu0 0.0
        %2272 = vmatprep.subr.mxu0 0.0
        %2273 = vmatpush2.xpose.msra.mxu0 0.0
        %2274 = vmatprep.subr.mxu0 0.0
        %2275 = vmatpush2.xpose.msra.mxu0 0.0
        %2276 = vmatprep.subr.mxu0 0.0
        %2277 = vmatpush2.xpose.msra.mxu0 0.0
        %2278 = vmatprep.subr.mxu0 0.0
        %2279 = vmatpush2.xpose.msra.mxu0 0.0
        %2280 = vmatprep.subr.mxu0 0.0
        %2281 = vmatpush2.xpose.msra.mxu0 0.0
        %2282 = vmatprep.subr.mxu0 0.0
        %2283 = vmatpush2.xpose.msra.mxu0 0.0
        %2284 = vmatprep.subr.mxu0 0.0
        %2285 = vmatpush2.xpose.msra.mxu0 0.0
        %2286 = vmatprep.subr.mxu0 0.0
        %2287 = vmatpush2.xpose.msra.mxu0 0.0
        %2288 = vmatprep.subr.mxu0 0.0
        %2289 = vmatpush2.xpose.msra.mxu0 0.0
        %2290 = vmatprep.subr.mxu0 0.0
        %2291 = vmatpush2.xpose.msra.mxu0 0.0
        %2292 = vmatprep.subr.mxu0 0.0
        %2293 = vmatpush2.xpose.msra.mxu0 0.0
        %2294 = vmatprep.subr.mxu0 0.0
        %2295 = vmatpush2.xpose.msra.mxu0 0.0
        %2296 = vmatprep.subr.mxu0 0.0
        %2297 = vmatpush2.xpose.msra.mxu0 0.0
        %2298 = vmatprep.mubr.f32.mxu0 0.0
        %v2299 = vand.u32 %v2003, 4294901760
        %v2300 = vsub.f32 %v2003, %v2299
        %v2301 = vand.u32 %v2300, 4294901760
        %2302 = vmatmul.mubr.f32.gmra.mxu0 %v2301
        %v2303 = vpop.f32.mrf.mxu0
        %v2304 = vadd.f32 %v2230, %v2303
        %v2305 = vpop.f32.mrf.mxu0
        %2306 = vdwg.mxu0
        %2307 = vmatprep.subr.mxu0 0.0
        %2308 = vmatpush1.xpose.msra.mxu0 0.0
        %2309 = vmatprep.subr.mxu0 0.0
        %2310 = vmatpush1.xpose.msra.mxu0 0.0
        %2311 = vmatprep.subr.mxu0 0.0
        %2312 = vmatpush1.xpose.msra.mxu0 0.0
        %2313 = vmatprep.subr.mxu0 0.0
        %2314 = vmatpush1.xpose.msra.mxu0 0.0
        %2315 = vmatprep.subr.mxu0 0.0
        %2316 = vmatpush1.xpose.msra.mxu0 0.0
        %2317 = vmatprep.subr.mxu0 0.0
        %2318 = vmatpush1.xpose.msra.mxu0 0.0
        %2319 = vmatprep.subr.mxu0 0.0
        %2320 = vmatpush1.xpose.msra.mxu0 0.0
        %2321 = vmatprep.subr.mxu0 0.0
        %2322 = vmatpush1.xpose.msra.mxu0 0.0
        %2323 = vmatprep.subr.mxu0 0.0
        %2324 = vmatpush1.xpose.msra.mxu0 0.0
        %2325 = vmatprep.subr.mxu0 0.0
        %2326 = vmatpush1.xpose.msra.mxu0 0.0
        %2327 = vmatprep.subr.mxu0 0.0
        %2328 = vmatpush1.xpose.msra.mxu0 0.0
        %2329 = vmatprep.subr.mxu0 0.0
        %2330 = vmatpush1.xpose.msra.mxu0 0.0
        %2331 = vmatprep.subr.mxu0 0.0
        %2332 = vmatpush1.xpose.msra.mxu0 0.0
        %2333 = vmatprep.subr.mxu0 0.0
        %2334 = vmatpush1.xpose.msra.mxu0 0.0
        %2335 = vmatprep.subr.mxu0 0.0
        %2336 = vmatpush1.xpose.msra.mxu0 0.0
        %2337 = vmatprep.subr.mxu0 0.0
        %v2338 = vand.u32 %v2005, 4294901760
        %v2339 = vsub.f32 %v2005, %v2338
        %v2340 = vand.u32 %v2339, 4294901760
        %2341 = vmatpush1.xpose.msra.mxu0 %v2340
        %2342 = vmatprep.subr.mxu0 0.0
        %2343 = vmatpush2.xpose.msra.mxu0 0.0
        %2344 = vmatprep.subr.mxu0 0.0
        %2345 = vmatpush2.xpose.msra.mxu0 0.0
        %2346 = vmatprep.subr.mxu0 0.0
        %2347 = vmatpush2.xpose.msra.mxu0 0.0
        %2348 = vmatprep.subr.mxu0 0.0
        %2349 = vmatpush2.xpose.msra.mxu0 0.0
        %2350 = vmatprep.subr.mxu0 0.0
        %2351 = vmatpush2.xpose.msra.mxu0 0.0
        %2352 = vmatprep.subr.mxu0 0.0
        %2353 = vmatpush2.xpose.msra.mxu0 0.0
        %2354 = vmatprep.subr.mxu0 0.0
        %2355 = vmatpush2.xpose.msra.mxu0 0.0
        %2356 = vmatprep.subr.mxu0 0.0
        %2357 = vmatpush2.xpose.msra.mxu0 0.0
        %2358 = vmatprep.subr.mxu0 0.0
        %2359 = vmatpush2.xpose.msra.mxu0 0.0
        %2360 = vmatprep.subr.mxu0 0.0
        %2361 = vmatpush2.xpose.msra.mxu0 0.0
        %2362 = vmatprep.subr.mxu0 0.0
        %2363 = vmatpush2.xpose.msra.mxu0 0.0
        %2364 = vmatprep.subr.mxu0 0.0
        %2365 = vmatpush2.xpose.msra.mxu0 0.0
        %2366 = vmatprep.subr.mxu0 0.0
        %2367 = vmatpush2.xpose.msra.mxu0 0.0
        %2368 = vmatprep.subr.mxu0 0.0
        %2369 = vmatpush2.xpose.msra.mxu0 0.0
        %2370 = vmatprep.subr.mxu0 0.0
        %2371 = vmatpush2.xpose.msra.mxu0 0.0
        %2372 = vmatprep.subr.mxu0 0.0
        %2373 = vmatpush2.xpose.msra.mxu0 0.0
        %2374 = vmatprep.mubr.f32.mxu0 0.0
        %v2375 = vand.u32 %v2003, 4294901760
        %2376 = vmatmul.mubr.f32.gmra.mxu0 %v2375
        %v2377 = vpop.f32.mrf.mxu0
        %v2378 = vadd.f32 %v2304, %v2377
        %v2379 = vpop.f32.mrf.mxu0
        %2380 = vdwg.mxu0
        %2381 = vmatprep.subr.mxu0 0.0
        %2382 = vmatpush1.xpose.msra.mxu0 0.0
        %2383 = vmatprep.subr.mxu0 0.0
        %2384 = vmatpush1.xpose.msra.mxu0 0.0
        %2385 = vmatprep.subr.mxu0 0.0
        %2386 = vmatpush1.xpose.msra.mxu0 0.0
        %2387 = vmatprep.subr.mxu0 0.0
        %2388 = vmatpush1.xpose.msra.mxu0 0.0
        %2389 = vmatprep.subr.mxu0 0.0
        %2390 = vmatpush1.xpose.msra.mxu0 0.0
        %2391 = vmatprep.subr.mxu0 0.0
        %2392 = vmatpush1.xpose.msra.mxu0 0.0
        %2393 = vmatprep.subr.mxu0 0.0
        %2394 = vmatpush1.xpose.msra.mxu0 0.0
        %2395 = vmatprep.subr.mxu0 0.0
        %2396 = vmatpush1.xpose.msra.mxu0 0.0
        %2397 = vmatprep.subr.mxu0 0.0
        %2398 = vmatpush1.xpose.msra.mxu0 0.0
        %2399 = vmatprep.subr.mxu0 0.0
        %2400 = vmatpush1.xpose.msra.mxu0 0.0
        %2401 = vmatprep.subr.mxu0 0.0
        %2402 = vmatpush1.xpose.msra.mxu0 0.0
        %2403 = vmatprep.subr.mxu0 0.0
        %2404 = vmatpush1.xpose.msra.mxu0 0.0
        %2405 = vmatprep.subr.mxu0 0.0
        %2406 = vmatpush1.xpose.msra.mxu0 0.0
        %2407 = vmatprep.subr.mxu0 0.0
        %2408 = vmatpush1.xpose.msra.mxu0 0.0
        %2409 = vmatprep.subr.mxu0 0.0
        %2410 = vmatpush1.xpose.msra.mxu0 0.0
        %2411 = vmatprep.subr.mxu0 0.0
        %v2412 = vand.u32 %v2005, 4294901760
        %2413 = vmatpush1.xpose.msra.mxu0 %v2412
        %2414 = vmatprep.subr.mxu0 0.0
        %2415 = vmatpush2.xpose.msra.mxu0 0.0
        %2416 = vmatprep.subr.mxu0 0.0
        %2417 = vmatpush2.xpose.msra.mxu0 0.0
        %2418 = vmatprep.subr.mxu0 0.0
        %2419 = vmatpush2.xpose.msra.mxu0 0.0
        %2420 = vmatprep.subr.mxu0 0.0
        %2421 = vmatpush2.xpose.msra.mxu0 0.0
        %2422 = vmatprep.subr.mxu0 0.0
        %2423 = vmatpush2.xpose.msra.mxu0 0.0
        %2424 = vmatprep.subr.mxu0 0.0
        %2425 = vmatpush2.xpose.msra.mxu0 0.0
        %2426 = vmatprep.subr.mxu0 0.0
        %2427 = vmatpush2.xpose.msra.mxu0 0.0
        %2428 = vmatprep.subr.mxu0 0.0
        %2429 = vmatpush2.xpose.msra.mxu0 0.0
        %2430 = vmatprep.subr.mxu0 0.0
        %2431 = vmatpush2.xpose.msra.mxu0 0.0
        %2432 = vmatprep.subr.mxu0 0.0
        %2433 = vmatpush2.xpose.msra.mxu0 0.0
        %2434 = vmatprep.subr.mxu0 0.0
        %2435 = vmatpush2.xpose.msra.mxu0 0.0
        %2436 = vmatprep.subr.mxu0 0.0
        %2437 = vmatpush2.xpose.msra.mxu0 0.0
        %2438 = vmatprep.subr.mxu0 0.0
        %2439 = vmatpush2.xpose.msra.mxu0 0.0
        %2440 = vmatprep.subr.mxu0 0.0
        %2441 = vmatpush2.xpose.msra.mxu0 0.0
        %2442 = vmatprep.subr.mxu0 0.0
        %2443 = vmatpush2.xpose.msra.mxu0 0.0
        %2444 = vmatprep.subr.mxu0 0.0
        %2445 = vmatpush2.xpose.msra.mxu0 0.0
        %2446 = vmatprep.mubr.f32.mxu0 0.0
        %v2447 = vand.u32 %v2003, 4294901760
        %2448 = vmatmul.mubr.f32.gmra.mxu0 %v2447
        %v2449 = vpop.f32.mrf.mxu0
        %v2450 = vadd.f32 %v2378, %v2449
        %v2451 = vpop.f32.mrf.mxu0
        %2452 = vdwg.mxu0
        %v2453 = vmul.f32 %v2450, 0.35355338
        %v2454 = vadd.f32 %v2453, %v614
        %v2455 = vsel %vm158, %v2454, -inf
        %2456 = vmax.xlane.f32.xlu0 %v2455
        %v2457 = vpop.xlane.xlu0 %2456
        %v2458 = vsub.f32 %v2454, %v2457
        %v2459 = vmul.f32 %v2458, 1.442695
        %v2460 = vpow.pop %v2459
        %v2461 = vsel %vm158, %v2460, 0.0
        %2462 = vadd.xlane.f32.xlu0 %v2461
        %v2463 = vpop.xlane.xlu0 %2462
        %v2464 = vrcp.pop %v2463
        %v2465 = vmul.f32 %v2460, %v2464
        %2466 = vrot.lane.b32.xlu0 %v153, 48
        %v2467 = vpop.permute.xlu0 %2466
        %v2470 = vsel %vm158, %v2465, 0
        %2472 = vmatprep.subr.mxu0 0.0
        %2473 = vmatpush1.msra.mxu0 0.0
        %2474 = vmatprep.subr.mxu0 0.0
        %2475 = vmatpush1.msra.mxu0 0.0
        %2476 = vmatprep.subr.mxu0 0.0
        %2477 = vmatpush1.msra.mxu0 0.0
        %2478 = vmatprep.subr.mxu0 0.0
        %2479 = vmatpush1.msra.mxu0 0.0
        %2480 = vmatprep.subr.mxu0 0.0
        %2481 = vmatpush1.msra.mxu0 0.0
        %2482 = vmatprep.subr.mxu0 0.0
        %2483 = vmatpush1.msra.mxu0 0.0
        %2484 = vmatprep.subr.mxu0 0.0
        %2485 = vmatpush1.msra.mxu0 0.0
        %2486 = vmatprep.subr.mxu0 0.0
        %2487 = vmatpush1.msra.mxu0 0.0
        %2488 = vmatprep.subr.mxu0 0.0
        %2489 = vmatpush1.msra.mxu0 0.0
        %2490 = vmatprep.subr.mxu0 0.0
        %2491 = vmatpush1.msra.mxu0 0.0
        %2492 = vmatprep.subr.mxu0 0.0
        %2493 = vmatpush1.msra.mxu0 0.0
        %2494 = vmatprep.subr.mxu0 0.0
        %2495 = vmatpush1.msra.mxu0 0.0
        %2496 = vmatprep.subr.mxu0 0.0
        %2497 = vmatpush1.msra.mxu0 0.0
        %2498 = vmatprep.subr.mxu0 0.0
        %2499 = vmatpush1.msra.mxu0 0.0
        %2500 = vmatprep.subr.mxu0 0.0
        %2501 = vmatpush1.msra.mxu0 0.0
        %2502 = vmatprep.subr.mxu0 0.0
        %v2503 = vand.u32 %v2467, 4294901760
        %2504 = vmatpush1.msra.mxu0 %v2503
        %2505 = vmatprep.subr.mxu0 0.0
        %2506 = vmatpush2.msra.mxu0 0.0
        %2507 = vmatprep.subr.mxu0 0.0
        %2508 = vmatpush2.msra.mxu0 0.0
        %2509 = vmatprep.subr.mxu0 0.0
        %2510 = vmatpush2.msra.mxu0 0.0
        %2511 = vmatprep.subr.mxu0 0.0
        %2512 = vmatpush2.msra.mxu0 0.0
        %2513 = vmatprep.subr.mxu0 0.0
        %2514 = vmatpush2.msra.mxu0 0.0
        %2515 = vmatprep.subr.mxu0 0.0
        %2516 = vmatpush2.msra.mxu0 0.0
        %2517 = vmatprep.subr.mxu0 0.0
        %2518 = vmatpush2.msra.mxu0 0.0
        %2519 = vmatprep.subr.mxu0 0.0
        %2520 = vmatpush2.msra.mxu0 0.0
        %2521 = vmatprep.subr.mxu0 0.0
        %2522 = vmatpush2.msra.mxu0 0.0
        %2523 = vmatprep.subr.mxu0 0.0
        %2524 = vmatpush2.msra.mxu0 0.0
        %2525 = vmatprep.subr.mxu0 0.0
        %2526 = vmatpush2.msra.mxu0 0.0
        %2527 = vmatprep.subr.mxu0 0.0
        %2528 = vmatpush2.msra.mxu0 0.0
        %2529 = vmatprep.subr.mxu0 0.0
        %2530 = vmatpush2.msra.mxu0 0.0
        %2531 = vmatprep.subr.mxu0 0.0
        %2532 = vmatpush2.msra.mxu0 0.0
        %2533 = vmatprep.subr.mxu0 0.0
        %2534 = vmatpush2.msra.mxu0 0.0
        %2535 = vmatprep.subr.mxu0 0.0
        %2536 = vmatpush2.msra.mxu0 0.0
        %2537 = vmatprep.mubr.f32.mxu0 0.0
        %v2538 = vand.u32 %v2470, 4294901760
        %v2539 = vsub.f32 %v2470, %v2538
        %v2540 = vand.u32 %v2539, 4294901760
        %v2541 = vsub.f32 %v2539, %v2540
        %v2542 = vand.u32 %v2541, 4294901760
        %2543 = vmatmul.mubr.f32.gmra.mxu0 %v2542
        %v2544 = vpop.f32.mrf.mxu0
        %v2545 = vadd.f32 0.0, %v2544
        %v2546 = vpop.f32.mrf.mxu0
        %2547 = vdwg.mxu0
        %2548 = vmatprep.subr.mxu0 0.0
        %2549 = vmatpush1.msra.mxu0 0.0
        %2550 = vmatprep.subr.mxu0 0.0
        %2551 = vmatpush1.msra.mxu0 0.0
        %2552 = vmatprep.subr.mxu0 0.0
        %2553 = vmatpush1.msra.mxu0 0.0
        %2554 = vmatprep.subr.mxu0 0.0
        %2555 = vmatpush1.msra.mxu0 0.0
        %2556 = vmatprep.subr.mxu0 0.0
        %2557 = vmatpush1.msra.mxu0 0.0
        %2558 = vmatprep.subr.mxu0 0.0
        %2559 = vmatpush1.msra.mxu0 0.0
        %2560 = vmatprep.subr.mxu0 0.0
        %2561 = vmatpush1.msra.mxu0 0.0
        %2562 = vmatprep.subr.mxu0 0.0
        %2563 = vmatpush1.msra.mxu0 0.0
        %2564 = vmatprep.subr.mxu0 0.0
        %2565 = vmatpush1.msra.mxu0 0.0
        %2566 = vmatprep.subr.mxu0 0.0
        %2567 = vmatpush1.msra.mxu0 0.0
        %2568 = vmatprep.subr.mxu0 0.0
        %2569 = vmatpush1.msra.mxu0 0.0
        %2570 = vmatprep.subr.mxu0 0.0
        %2571 = vmatpush1.msra.mxu0 0.0
        %2572 = vmatprep.subr.mxu0 0.0
        %2573 = vmatpush1.msra.mxu0 0.0
        %2574 = vmatprep.subr.mxu0 0.0
        %2575 = vmatpush1.msra.mxu0 0.0
        %2576 = vmatprep.subr.mxu0 0.0
        %2577 = vmatpush1.msra.mxu0 0.0
        %2578 = vmatprep.subr.mxu0 0.0
        %v2579 = vand.u32 %v2467, 4294901760
        %v2580 = vsub.f32 %v2467, %v2579
        %v2581 = vand.u32 %v2580, 4294901760
        %v2582 = vsub.f32 %v2580, %v2581
        %v2583 = vand.u32 %v2582, 4294901760
        %2584 = vmatpush1.msra.mxu0 %v2583
        %2585 = vmatprep.subr.mxu0 0.0
        %2586 = vmatpush2.msra.mxu0 0.0
        %2587 = vmatprep.subr.mxu0 0.0
        %2588 = vmatpush2.msra.mxu0 0.0
        %2589 = vmatprep.subr.mxu0 0.0
        %2590 = vmatpush2.msra.mxu0 0.0
        %2591 = vmatprep.subr.mxu0 0.0
        %2592 = vmatpush2.msra.mxu0 0.0
        %2593 = vmatprep.subr.mxu0 0.0
        %2594 = vmatpush2.msra.mxu0 0.0
        %2595 = vmatprep.subr.mxu0 0.0
        %2596 = vmatpush2.msra.mxu0 0.0
        %2597 = vmatprep.subr.mxu0 0.0
        %2598 = vmatpush2.msra.mxu0 0.0
        %2599 = vmatprep.subr.mxu0 0.0
        %2600 = vmatpush2.msra.mxu0 0.0
        %2601 = vmatprep.subr.mxu0 0.0
        %2602 = vmatpush2.msra.mxu0 0.0
        %2603 = vmatprep.subr.mxu0 0.0
        %2604 = vmatpush2.msra.mxu0 0.0
        %2605 = vmatprep.subr.mxu0 0.0
        %2606 = vmatpush2.msra.mxu0 0.0
        %2607 = vmatprep.subr.mxu0 0.0
        %2608 = vmatpush2.msra.mxu0 0.0
        %2609 = vmatprep.subr.mxu0 0.0
        %2610 = vmatpush2.msra.mxu0 0.0
        %2611 = vmatprep.subr.mxu0 0.0
        %2612 = vmatpush2.msra.mxu0 0.0
        %2613 = vmatprep.subr.mxu0 0.0
        %2614 = vmatpush2.msra.mxu0 0.0
        %2615 = vmatprep.subr.mxu0 0.0
        %2616 = vmatpush2.msra.mxu0 0.0
        %2617 = vmatprep.mubr.f32.mxu0 0.0
        %v2618 = vand.u32 %v2470, 4294901760
        %2619 = vmatmul.mubr.f32.gmra.mxu0 %v2618
        %v2620 = vpop.f32.mrf.mxu0
        %v2621 = vadd.f32 %v2545, %v2620
        %v2622 = vpop.f32.mrf.mxu0
        %2623 = vdwg.mxu0
        %2624 = vmatprep.subr.mxu0 0.0
        %2625 = vmatpush1.msra.mxu0 0.0
        %2626 = vmatprep.subr.mxu0 0.0
        %2627 = vmatpush1.msra.mxu0 0.0
        %2628 = vmatprep.subr.mxu0 0.0
        %2629 = vmatpush1.msra.mxu0 0.0
        %2630 = vmatprep.subr.mxu0 0.0
        %2631 = vmatpush1.msra.mxu0 0.0
        %2632 = vmatprep.subr.mxu0 0.0
        %2633 = vmatpush1.msra.mxu0 0.0
        %2634 = vmatprep.subr.mxu0 0.0
        %2635 = vmatpush1.msra.mxu0 0.0
        %2636 = vmatprep.subr.mxu0 0.0
        %2637 = vmatpush1.msra.mxu0 0.0
        %2638 = vmatprep.subr.mxu0 0.0
        %2639 = vmatpush1.msra.mxu0 0.0
        %2640 = vmatprep.subr.mxu0 0.0
        %2641 = vmatpush1.msra.mxu0 0.0
        %2642 = vmatprep.subr.mxu0 0.0
        %2643 = vmatpush1.msra.mxu0 0.0
        %2644 = vmatprep.subr.mxu0 0.0
        %2645 = vmatpush1.msra.mxu0 0.0
        %2646 = vmatprep.subr.mxu0 0.0
        %2647 = vmatpush1.msra.mxu0 0.0
        %2648 = vmatprep.subr.mxu0 0.0
        %2649 = vmatpush1.msra.mxu0 0.0
        %2650 = vmatprep.subr.mxu0 0.0
        %2651 = vmatpush1.msra.mxu0 0.0
        %2652 = vmatprep.subr.mxu0 0.0
        %2653 = vmatpush1.msra.mxu0 0.0
        %2654 = vmatprep.subr.mxu0 0.0
        %v2655 = vand.u32 %v2467, 4294901760
        %v2656 = vsub.f32 %v2467, %v2655
        %2657 = vmatpush1.msra.mxu0 %v2656
        %2658 = vmatprep.subr.mxu0 0.0
        %2659 = vmatpush2.msra.mxu0 0.0
        %2660 = vmatprep.subr.mxu0 0.0
        %2661 = vmatpush2.msra.mxu0 0.0
        %2662 = vmatprep.subr.mxu0 0.0
        %2663 = vmatpush2.msra.mxu0 0.0
        %2664 = vmatprep.subr.mxu0 0.0
        %2665 = vmatpush2.msra.mxu0 0.0
        %2666 = vmatprep.subr.mxu0 0.0
        %2667 = vmatpush2.msra.mxu0 0.0
        %2668 = vmatprep.subr.mxu0 0.0
        %2669 = vmatpush2.msra.mxu0 0.0
        %2670 = vmatprep.subr.mxu0 0.0
        %2671 = vmatpush2.msra.mxu0 0.0
        %2672 = vmatprep.subr.mxu0 0.0
        %2673 = vmatpush2.msra.mxu0 0.0
        %2674 = vmatprep.subr.mxu0 0.0
        %2675 = vmatpush2.msra.mxu0 0.0
        %2676 = vmatprep.subr.mxu0 0.0
        %2677 = vmatpush2.msra.mxu0 0.0
        %2678 = vmatprep.subr.mxu0 0.0
        %2679 = vmatpush2.msra.mxu0 0.0
        %2680 = vmatprep.subr.mxu0 0.0
        %2681 = vmatpush2.msra.mxu0 0.0
        %2682 = vmatprep.subr.mxu0 0.0
        %2683 = vmatpush2.msra.mxu0 0.0
        %2684 = vmatprep.subr.mxu0 0.0
        %2685 = vmatpush2.msra.mxu0 0.0
        %2686 = vmatprep.subr.mxu0 0.0
        %2687 = vmatpush2.msra.mxu0 0.0
        %2688 = vmatprep.subr.mxu0 0.0
        %2689 = vmatpush2.msra.mxu0 0.0
        %2690 = vmatprep.mubr.f32.mxu0 0.0
        %v2691 = vand.u32 %v2470, 4294901760
        %v2692 = vsub.f32 %v2470, %v2691
        %2693 = vmatmul.mubr.f32.gmra.mxu0 %v2692
        %v2694 = vpop.f32.mrf.mxu0
        %v2695 = vadd.f32 %v2621, %v2694
        %v2696 = vpop.f32.mrf.mxu0
        %2697 = vdwg.mxu0
        %2698 = vmatprep.subr.mxu0 0.0
        %2699 = vmatpush1.msra.mxu0 0.0
        %2700 = vmatprep.subr.mxu0 0.0
        %2701 = vmatpush1.msra.mxu0 0.0
        %2702 = vmatprep.subr.mxu0 0.0
        %2703 = vmatpush1.msra.mxu0 0.0
        %2704 = vmatprep.subr.mxu0 0.0
        %2705 = vmatpush1.msra.mxu0 0.0
        %2706 = vmatprep.subr.mxu0 0.0
        %2707 = vmatpush1.msra.mxu0 0.0
        %2708 = vmatprep.subr.mxu0 0.0
        %2709 = vmatpush1.msra.mxu0 0.0
        %2710 = vmatprep.subr.mxu0 0.0
        %2711 = vmatpush1.msra.mxu0 0.0
        %2712 = vmatprep.subr.mxu0 0.0
        %2713 = vmatpush1.msra.mxu0 0.0
        %2714 = vmatprep.subr.mxu0 0.0
        %2715 = vmatpush1.msra.mxu0 0.0
        %2716 = vmatprep.subr.mxu0 0.0
        %2717 = vmatpush1.msra.mxu0 0.0
        %2718 = vmatprep.subr.mxu0 0.0
        %2719 = vmatpush1.msra.mxu0 0.0
        %2720 = vmatprep.subr.mxu0 0.0
        %2721 = vmatpush1.msra.mxu0 0.0
        %2722 = vmatprep.subr.mxu0 0.0
        %2723 = vmatpush1.msra.mxu0 0.0
        %2724 = vmatprep.subr.mxu0 0.0
        %2725 = vmatpush1.msra.mxu0 0.0
        %2726 = vmatprep.subr.mxu0 0.0
        %2727 = vmatpush1.msra.mxu0 0.0
        %2728 = vmatprep.subr.mxu0 0.0
        %v2729 = vand.u32 %v2467, 4294901760
        %2730 = vmatpush1.msra.mxu0 %v2729
        %2731 = vmatprep.subr.mxu0 0.0
        %2732 = vmatpush2.msra.mxu0 0.0
        %2733 = vmatprep.subr.mxu0 0.0
        %2734 = vmatpush2.msra.mxu0 0.0
        %2735 = vmatprep.subr.mxu0 0.0
        %2736 = vmatpush2.msra.mxu0 0.0
        %2737 = vmatprep.subr.mxu0 0.0
        %2738 = vmatpush2.msra.mxu0 0.0
        %2739 = vmatprep.subr.mxu0 0.0
        %2740 = vmatpush2.msra.mxu0 0.0
        %2741 = vmatprep.subr.mxu0 0.0
        %2742 = vmatpush2.msra.mxu0 0.0
        %2743 = vmatprep.subr.mxu0 0.0
        %2744 = vmatpush2.msra.mxu0 0.0
        %2745 = vmatprep.subr.mxu0 0.0
        %2746 = vmatpush2.msra.mxu0 0.0
        %2747 = vmatprep.subr.mxu0 0.0
        %2748 = vmatpush2.msra.mxu0 0.0
        %2749 = vmatprep.subr.mxu0 0.0
        %2750 = vmatpush2.msra.mxu0 0.0
        %2751 = vmatprep.subr.mxu0 0.0
        %2752 = vmatpush2.msra.mxu0 0.0
        %2753 = vmatprep.subr.mxu0 0.0
        %2754 = vmatpush2.msra.mxu0 0.0
        %2755 = vmatprep.subr.mxu0 0.0
        %2756 = vmatpush2.msra.mxu0 0.0
        %2757 = vmatprep.subr.mxu0 0.0
        %2758 = vmatpush2.msra.mxu0 0.0
        %2759 = vmatprep.subr.mxu0 0.0
        %2760 = vmatpush2.msra.mxu0 0.0
        %2761 = vmatprep.subr.mxu0 0.0
        %2762 = vmatpush2.msra.mxu0 0.0
        %2763 = vmatprep.mubr.f32.mxu0 0.0
        %v2764 = vand.u32 %v2470, 4294901760
        %v2765 = vsub.f32 %v2470, %v2764
        %v2766 = vand.u32 %v2765, 4294901760
        %2767 = vmatmul.mubr.f32.gmra.mxu0 %v2766
        %v2768 = vpop.f32.mrf.mxu0
        %v2769 = vadd.f32 %v2695, %v2768
        %v2770 = vpop.f32.mrf.mxu0
        %2771 = vdwg.mxu0
        %2772 = vmatprep.subr.mxu0 0.0
        %2773 = vmatpush1.msra.mxu0 0.0
        %2774 = vmatprep.subr.mxu0 0.0
        %2775 = vmatpush1.msra.mxu0 0.0
        %2776 = vmatprep.subr.mxu0 0.0
        %2777 = vmatpush1.msra.mxu0 0.0
        %2778 = vmatprep.subr.mxu0 0.0
        %2779 = vmatpush1.msra.mxu0 0.0
        %2780 = vmatprep.subr.mxu0 0.0
        %2781 = vmatpush1.msra.mxu0 0.0
        %2782 = vmatprep.subr.mxu0 0.0
        %2783 = vmatpush1.msra.mxu0 0.0
        %2784 = vmatprep.subr.mxu0 0.0
        %2785 = vmatpush1.msra.mxu0 0.0
        %2786 = vmatprep.subr.mxu0 0.0
        %2787 = vmatpush1.msra.mxu0 0.0
        %2788 = vmatprep.subr.mxu0 0.0
        %2789 = vmatpush1.msra.mxu0 0.0
        %2790 = vmatprep.subr.mxu0 0.0
        %2791 = vmatpush1.msra.mxu0 0.0
        %2792 = vmatprep.subr.mxu0 0.0
        %2793 = vmatpush1.msra.mxu0 0.0
        %2794 = vmatprep.subr.mxu0 0.0
        %2795 = vmatpush1.msra.mxu0 0.0
        %2796 = vmatprep.subr.mxu0 0.0
        %2797 = vmatpush1.msra.mxu0 0.0
        %2798 = vmatprep.subr.mxu0 0.0
        %2799 = vmatpush1.msra.mxu0 0.0
        %2800 = vmatprep.subr.mxu0 0.0
        %2801 = vmatpush1.msra.mxu0 0.0
        %2802 = vmatprep.subr.mxu0 0.0
        %v2803 = vand.u32 %v2467, 4294901760
        %v2804 = vsub.f32 %v2467, %v2803
        %v2805 = vand.u32 %v2804, 4294901760
        %2806 = vmatpush1.msra.mxu0 %v2805
        %2807 = vmatprep.subr.mxu0 0.0
        %2808 = vmatpush2.msra.mxu0 0.0
        %2809 = vmatprep.subr.mxu0 0.0
        %2810 = vmatpush2.msra.mxu0 0.0
        %2811 = vmatprep.subr.mxu0 0.0
        %2812 = vmatpush2.msra.mxu0 0.0
        %2813 = vmatprep.subr.mxu0 0.0
        %2814 = vmatpush2.msra.mxu0 0.0
        %2815 = vmatprep.subr.mxu0 0.0
        %2816 = vmatpush2.msra.mxu0 0.0
        %2817 = vmatprep.subr.mxu0 0.0
        %2818 = vmatpush2.msra.mxu0 0.0
        %2819 = vmatprep.subr.mxu0 0.0
        %2820 = vmatpush2.msra.mxu0 0.0
        %2821 = vmatprep.subr.mxu0 0.0
        %2822 = vmatpush2.msra.mxu0 0.0
        %2823 = vmatprep.subr.mxu0 0.0
        %2824 = vmatpush2.msra.mxu0 0.0
        %2825 = vmatprep.subr.mxu0 0.0
        %2826 = vmatpush2.msra.mxu0 0.0
        %2827 = vmatprep.subr.mxu0 0.0
        %2828 = vmatpush2.msra.mxu0 0.0
        %2829 = vmatprep.subr.mxu0 0.0
        %2830 = vmatpush2.msra.mxu0 0.0
        %2831 = vmatprep.subr.mxu0 0.0
        %2832 = vmatpush2.msra.mxu0 0.0
        %2833 = vmatprep.subr.mxu0 0.0
        %2834 = vmatpush2.msra.mxu0 0.0
        %2835 = vmatprep.subr.mxu0 0.0
        %2836 = vmatpush2.msra.mxu0 0.0
        %2837 = vmatprep.subr.mxu0 0.0
        %2838 = vmatpush2.msra.mxu0 0.0
        %2839 = vmatprep.mubr.f32.mxu0 0.0
        %v2840 = vand.u32 %v2470, 4294901760
        %2841 = vmatmul.mubr.f32.gmra.mxu0 %v2840
        %v2842 = vpop.f32.mrf.mxu0
        %v2843 = vadd.f32 %v2769, %v2842
        %v2844 = vpop.f32.mrf.mxu0
        %2845 = vdwg.mxu0
        %2846 = vmatprep.subr.mxu0 0.0
        %2847 = vmatpush1.msra.mxu0 0.0
        %2848 = vmatprep.subr.mxu0 0.0
        %2849 = vmatpush1.msra.mxu0 0.0
        %2850 = vmatprep.subr.mxu0 0.0
        %2851 = vmatpush1.msra.mxu0 0.0
        %2852 = vmatprep.subr.mxu0 0.0
        %2853 = vmatpush1.msra.mxu0 0.0
        %2854 = vmatprep.subr.mxu0 0.0
        %2855 = vmatpush1.msra.mxu0 0.0
        %2856 = vmatprep.subr.mxu0 0.0
        %2857 = vmatpush1.msra.mxu0 0.0
        %2858 = vmatprep.subr.mxu0 0.0
        %2859 = vmatpush1.msra.mxu0 0.0
        %2860 = vmatprep.subr.mxu0 0.0
        %2861 = vmatpush1.msra.mxu0 0.0
        %2862 = vmatprep.subr.mxu0 0.0
        %2863 = vmatpush1.msra.mxu0 0.0
        %2864 = vmatprep.subr.mxu0 0.0
        %2865 = vmatpush1.msra.mxu0 0.0
        %2866 = vmatprep.subr.mxu0 0.0
        %2867 = vmatpush1.msra.mxu0 0.0
        %2868 = vmatprep.subr.mxu0 0.0
        %2869 = vmatpush1.msra.mxu0 0.0
        %2870 = vmatprep.subr.mxu0 0.0
        %2871 = vmatpush1.msra.mxu0 0.0
        %2872 = vmatprep.subr.mxu0 0.0
        %2873 = vmatpush1.msra.mxu0 0.0
        %2874 = vmatprep.subr.mxu0 0.0
        %2875 = vmatpush1.msra.mxu0 0.0
        %2876 = vmatprep.subr.mxu0 0.0
        %v2877 = vand.u32 %v2467, 4294901760
        %2878 = vmatpush1.msra.mxu0 %v2877
        %2879 = vmatprep.subr.mxu0 0.0
        %2880 = vmatpush2.msra.mxu0 0.0
        %2881 = vmatprep.subr.mxu0 0.0
        %2882 = vmatpush2.msra.mxu0 0.0
        %2883 = vmatprep.subr.mxu0 0.0
        %2884 = vmatpush2.msra.mxu0 0.0
        %2885 = vmatprep.subr.mxu0 0.0
        %2886 = vmatpush2.msra.mxu0 0.0
        %2887 = vmatprep.subr.mxu0 0.0
        %2888 = vmatpush2.msra.mxu0 0.0
        %2889 = vmatprep.subr.mxu0 0.0
        %2890 = vmatpush2.msra.mxu0 0.0
        %2891 = vmatprep.subr.mxu0 0.0
        %2892 = vmatpush2.msra.mxu0 0.0
        %2893 = vmatprep.subr.mxu0 0.0
        %2894 = vmatpush2.msra.mxu0 0.0
        %2895 = vmatprep.subr.mxu0 0.0
        %2896 = vmatpush2.msra.mxu0 0.0
        %2897 = vmatprep.subr.mxu0 0.0
        %2898 = vmatpush2.msra.mxu0 0.0
        %2899 = vmatprep.subr.mxu0 0.0
        %2900 = vmatpush2.msra.mxu0 0.0
        %2901 = vmatprep.subr.mxu0 0.0
        %2902 = vmatpush2.msra.mxu0 0.0
        %2903 = vmatprep.subr.mxu0 0.0
        %2904 = vmatpush2.msra.mxu0 0.0
        %2905 = vmatprep.subr.mxu0 0.0
        %2906 = vmatpush2.msra.mxu0 0.0
        %2907 = vmatprep.subr.mxu0 0.0
        %2908 = vmatpush2.msra.mxu0 0.0
        %2909 = vmatprep.subr.mxu0 0.0
        %2910 = vmatpush2.msra.mxu0 0.0
        %2911 = vmatprep.mubr.f32.mxu0 0.0
        %v2912 = vand.u32 %v2470, 4294901760
        %2913 = vmatmul.mubr.f32.gmra.mxu0 %v2912
        %v2914 = vpop.f32.mrf.mxu0
        %v2915 = vadd.f32 %v2843, %v2914
        %v2916 = vpop.f32.mrf.mxu0
        %2917 = vdwg.mxu0
        %2918 = vrot.lane.b32.xlu0 %v153, 104
        %v2919 = vpop.permute.xlu0 %2918
        %2920 = vrot.lane.b32.xlu0 %v153, 72
        %v2921 = vpop.permute.xlu0 %2920
        %v2922 = vsel %vm158, %v2919, 0
        %v2924 = vsel %vm158, %v2921, 0
        %2926 = vmatprep.subr.mxu0 0.0
        %2927 = vmatpush1.xpose.msra.mxu0 0.0
        %2928 = vmatprep.subr.mxu0 0.0
        %2929 = vmatpush1.xpose.msra.mxu0 0.0
        %2930 = vmatprep.subr.mxu0 0.0
        %2931 = vmatpush1.xpose.msra.mxu0 0.0
        %2932 = vmatprep.subr.mxu0 0.0
        %2933 = vmatpush1.xpose.msra.mxu0 0.0
        %2934 = vmatprep.subr.mxu0 0.0
        %2935 = vmatpush1.xpose.msra.mxu0 0.0
        %2936 = vmatprep.subr.mxu0 0.0
        %2937 = vmatpush1.xpose.msra.mxu0 0.0
        %2938 = vmatprep.subr.mxu0 0.0
        %2939 = vmatpush1.xpose.msra.mxu0 0.0
        %2940 = vmatprep.subr.mxu0 0.0
        %2941 = vmatpush1.xpose.msra.mxu0 0.0
        %2942 = vmatprep.subr.mxu0 0.0
        %2943 = vmatpush1.xpose.msra.mxu0 0.0
        %2944 = vmatprep.subr.mxu0 0.0
        %2945 = vmatpush1.xpose.msra.mxu0 0.0
        %2946 = vmatprep.subr.mxu0 0.0
        %2947 = vmatpush1.xpose.msra.mxu0 0.0
        %2948 = vmatprep.subr.mxu0 0.0
        %2949 = vmatpush1.xpose.msra.mxu0 0.0
        %2950 = vmatprep.subr.mxu0 0.0
        %2951 = vmatpush1.xpose.msra.mxu0 0.0
        %2952 = vmatprep.subr.mxu0 0.0
        %2953 = vmatpush1.xpose.msra.mxu0 0.0
        %2954 = vmatprep.subr.mxu0 0.0
        %2955 = vmatpush1.xpose.msra.mxu0 0.0
        %2956 = vmatprep.subr.mxu0 0.0
        %v2957 = vand.u32 %v2924, 4294901760
        %2958 = vmatpush1.xpose.msra.mxu0 %v2957
        %2959 = vmatprep.subr.mxu0 0.0
        %2960 = vmatpush2.xpose.msra.mxu0 0.0
        %2961 = vmatprep.subr.mxu0 0.0
        %2962 = vmatpush2.xpose.msra.mxu0 0.0
        %2963 = vmatprep.subr.mxu0 0.0
        %2964 = vmatpush2.xpose.msra.mxu0 0.0
        %2965 = vmatprep.subr.mxu0 0.0
        %2966 = vmatpush2.xpose.msra.mxu0 0.0
        %2967 = vmatprep.subr.mxu0 0.0
        %2968 = vmatpush2.xpose.msra.mxu0 0.0
        %2969 = vmatprep.subr.mxu0 0.0
        %2970 = vmatpush2.xpose.msra.mxu0 0.0
        %2971 = vmatprep.subr.mxu0 0.0
        %2972 = vmatpush2.xpose.msra.mxu0 0.0
        %2973 = vmatprep.subr.mxu0 0.0
        %2974 = vmatpush2.xpose.msra.mxu0 0.0
        %2975 = vmatprep.subr.mxu0 0.0
        %2976 = vmatpush2.xpose.msra.mxu0 0.0
        %2977 = vmatprep.subr.mxu0 0.0
        %2978 = vmatpush2.xpose.msra.mxu0 0.0
        %2979 = vmatprep.subr.mxu0 0.0
        %2980 = vmatpush2.xpose.msra.mxu0 0.0
        %2981 = vmatprep.subr.mxu0 0.0
        %2982 = vmatpush2.xpose.msra.mxu0 0.0
        %2983 = vmatprep.subr.mxu0 0.0
        %2984 = vmatpush2.xpose.msra.mxu0 0.0
        %2985 = vmatprep.subr.mxu0 0.0
        %2986 = vmatpush2.xpose.msra.mxu0 0.0
        %2987 = vmatprep.subr.mxu0 0.0
        %2988 = vmatpush2.xpose.msra.mxu0 0.0
        %2989 = vmatprep.subr.mxu0 0.0
        %2990 = vmatpush2.xpose.msra.mxu0 0.0
        %2991 = vmatprep.mubr.f32.mxu0 0.0
        %v2992 = vand.u32 %v2922, 4294901760
        %v2993 = vsub.f32 %v2922, %v2992
        %v2994 = vand.u32 %v2993, 4294901760
        %v2995 = vsub.f32 %v2993, %v2994
        %v2996 = vand.u32 %v2995, 4294901760
        %2997 = vmatmul.mubr.f32.gmra.mxu0 %v2996
        %v2998 = vpop.f32.mrf.mxu0
        %v2999 = vadd.f32 0.0, %v2998
        %v3000 = vpop.f32.mrf.mxu0
        %3001 = vdwg.mxu0
        %3002 = vmatprep.subr.mxu0 0.0
        %3003 = vmatpush1.xpose.msra.mxu0 0.0
        %3004 = vmatprep.subr.mxu0 0.0
        %3005 = vmatpush1.xpose.msra.mxu0 0.0
        %3006 = vmatprep.subr.mxu0 0.0
        %3007 = vmatpush1.xpose.msra.mxu0 0.0
        %3008 = vmatprep.subr.mxu0 0.0
        %3009 = vmatpush1.xpose.msra.mxu0 0.0
        %3010 = vmatprep.subr.mxu0 0.0
        %3011 = vmatpush1.xpose.msra.mxu0 0.0
        %3012 = vmatprep.subr.mxu0 0.0
        %3013 = vmatpush1.xpose.msra.mxu0 0.0
        %3014 = vmatprep.subr.mxu0 0.0
        %3015 = vmatpush1.xpose.msra.mxu0 0.0
        %3016 = vmatprep.subr.mxu0 0.0
        %3017 = vmatpush1.xpose.msra.mxu0 0.0
        %3018 = vmatprep.subr.mxu0 0.0
        %3019 = vmatpush1.xpose.msra.mxu0 0.0
        %3020 = vmatprep.subr.mxu0 0.0
        %3021 = vmatpush1.xpose.msra.mxu0 0.0
        %3022 = vmatprep.subr.mxu0 0.0
        %3023 = vmatpush1.xpose.msra.mxu0 0.0
        %3024 = vmatprep.subr.mxu0 0.0
        %3025 = vmatpush1.xpose.msra.mxu0 0.0
        %3026 = vmatprep.subr.mxu0 0.0
        %3027 = vmatpush1.xpose.msra.mxu0 0.0
        %3028 = vmatprep.subr.mxu0 0.0
        %3029 = vmatpush1.xpose.msra.mxu0 0.0
        %3030 = vmatprep.subr.mxu0 0.0
        %3031 = vmatpush1.xpose.msra.mxu0 0.0
        %3032 = vmatprep.subr.mxu0 0.0
        %v3033 = vand.u32 %v2924, 4294901760
        %v3034 = vsub.f32 %v2924, %v3033
        %v3035 = vand.u32 %v3034, 4294901760
        %v3036 = vsub.f32 %v3034, %v3035
        %v3037 = vand.u32 %v3036, 4294901760
        %3038 = vmatpush1.xpose.msra.mxu0 %v3037
        %3039 = vmatprep.subr.mxu0 0.0
        %3040 = vmatpush2.xpose.msra.mxu0 0.0
        %3041 = vmatprep.subr.mxu0 0.0
        %3042 = vmatpush2.xpose.msra.mxu0 0.0
        %3043 = vmatprep.subr.mxu0 0.0
        %3044 = vmatpush2.xpose.msra.mxu0 0.0
        %3045 = vmatprep.subr.mxu0 0.0
        %3046 = vmatpush2.xpose.msra.mxu0 0.0
        %3047 = vmatprep.subr.mxu0 0.0
        %3048 = vmatpush2.xpose.msra.mxu0 0.0
        %3049 = vmatprep.subr.mxu0 0.0
        %3050 = vmatpush2.xpose.msra.mxu0 0.0
        %3051 = vmatprep.subr.mxu0 0.0
        %3052 = vmatpush2.xpose.msra.mxu0 0.0
        %3053 = vmatprep.subr.mxu0 0.0
        %3054 = vmatpush2.xpose.msra.mxu0 0.0
        %3055 = vmatprep.subr.mxu0 0.0
        %3056 = vmatpush2.xpose.msra.mxu0 0.0
        %3057 = vmatprep.subr.mxu0 0.0
        %3058 = vmatpush2.xpose.msra.mxu0 0.0
        %3059 = vmatprep.subr.mxu0 0.0
        %3060 = vmatpush2.xpose.msra.mxu0 0.0
        %3061 = vmatprep.subr.mxu0 0.0
        %3062 = vmatpush2.xpose.msra.mxu0 0.0
        %3063 = vmatprep.subr.mxu0 0.0
        %3064 = vmatpush2.xpose.msra.mxu0 0.0
        %3065 = vmatprep.subr.mxu0 0.0
        %3066 = vmatpush2.xpose.msra.mxu0 0.0
        %3067 = vmatprep.subr.mxu0 0.0
        %3068 = vmatpush2.xpose.msra.mxu0 0.0
        %3069 = vmatprep.subr.mxu0 0.0
        %3070 = vmatpush2.xpose.msra.mxu0 0.0
        %3071 = vmatprep.mubr.f32.mxu0 0.0
        %v3072 = vand.u32 %v2922, 4294901760
        %3073 = vmatmul.mubr.f32.gmra.mxu0 %v3072
        %v3074 = vpop.f32.mrf.mxu0
        %v3075 = vadd.f32 %v2999, %v3074
        %v3076 = vpop.f32.mrf.mxu0
        %3077 = vdwg.mxu0
        %3078 = vmatprep.subr.mxu0 0.0
        %3079 = vmatpush1.xpose.msra.mxu0 0.0
        %3080 = vmatprep.subr.mxu0 0.0
        %3081 = vmatpush1.xpose.msra.mxu0 0.0
        %3082 = vmatprep.subr.mxu0 0.0
        %3083 = vmatpush1.xpose.msra.mxu0 0.0
        %3084 = vmatprep.subr.mxu0 0.0
        %3085 = vmatpush1.xpose.msra.mxu0 0.0
        %3086 = vmatprep.subr.mxu0 0.0
        %3087 = vmatpush1.xpose.msra.mxu0 0.0
        %3088 = vmatprep.subr.mxu0 0.0
        %3089 = vmatpush1.xpose.msra.mxu0 0.0
        %3090 = vmatprep.subr.mxu0 0.0
        %3091 = vmatpush1.xpose.msra.mxu0 0.0
        %3092 = vmatprep.subr.mxu0 0.0
        %3093 = vmatpush1.xpose.msra.mxu0 0.0
        %3094 = vmatprep.subr.mxu0 0.0
        %3095 = vmatpush1.xpose.msra.mxu0 0.0
        %3096 = vmatprep.subr.mxu0 0.0
        %3097 = vmatpush1.xpose.msra.mxu0 0.0
        %3098 = vmatprep.subr.mxu0 0.0
        %3099 = vmatpush1.xpose.msra.mxu0 0.0
        %3100 = vmatprep.subr.mxu0 0.0
        %3101 = vmatpush1.xpose.msra.mxu0 0.0
        %3102 = vmatprep.subr.mxu0 0.0
        %3103 = vmatpush1.xpose.msra.mxu0 0.0
        %3104 = vmatprep.subr.mxu0 0.0
        %3105 = vmatpush1.xpose.msra.mxu0 0.0
        %3106 = vmatprep.subr.mxu0 0.0
        %3107 = vmatpush1.xpose.msra.mxu0 0.0
        %3108 = vmatprep.subr.mxu0 0.0
        %v3109 = vand.u32 %v2924, 4294901760
        %v3110 = vsub.f32 %v2924, %v3109
        %3111 = vmatpush1.xpose.msra.mxu0 %v3110
        %3112 = vmatprep.subr.mxu0 0.0
        %3113 = vmatpush2.xpose.msra.mxu0 0.0
        %3114 = vmatprep.subr.mxu0 0.0
        %3115 = vmatpush2.xpose.msra.mxu0 0.0
        %3116 = vmatprep.subr.mxu0 0.0
        %3117 = vmatpush2.xpose.msra.mxu0 0.0
        %3118 = vmatprep.subr.mxu0 0.0
        %3119 = vmatpush2.xpose.msra.mxu0 0.0
        %3120 = vmatprep.subr.mxu0 0.0
        %3121 = vmatpush2.xpose.msra.mxu0 0.0
        %3122 = vmatprep.subr.mxu0 0.0
        %3123 = vmatpush2.xpose.msra.mxu0 0.0
        %3124 = vmatprep.subr.mxu0 0.0
        %3125 = vmatpush2.xpose.msra.mxu0 0.0
        %3126 = vmatprep.subr.mxu0 0.0
        %3127 = vmatpush2.xpose.msra.mxu0 0.0
        %3128 = vmatprep.subr.mxu0 0.0
        %3129 = vmatpush2.xpose.msra.mxu0 0.0
        %3130 = vmatprep.subr.mxu0 0.0
        %3131 = vmatpush2.xpose.msra.mxu0 0.0
        %3132 = vmatprep.subr.mxu0 0.0
        %3133 = vmatpush2.xpose.msra.mxu0 0.0
        %3134 = vmatprep.subr.mxu0 0.0
        %3135 = vmatpush2.xpose.msra.mxu0 0.0
        %3136 = vmatprep.subr.mxu0 0.0
        %3137 = vmatpush2.xpose.msra.mxu0 0.0
        %3138 = vmatprep.subr.mxu0 0.0
        %3139 = vmatpush2.xpose.msra.mxu0 0.0
        %3140 = vmatprep.subr.mxu0 0.0
        %3141 = vmatpush2.xpose.msra.mxu0 0.0
        %3142 = vmatprep.subr.mxu0 0.0
        %3143 = vmatpush2.xpose.msra.mxu0 0.0
        %3144 = vmatprep.mubr.f32.mxu0 0.0
        %v3145 = vand.u32 %v2922, 4294901760
        %v3146 = vsub.f32 %v2922, %v3145
        %3147 = vmatmul.mubr.f32.gmra.mxu0 %v3146
        %v3148 = vpop.f32.mrf.mxu0
        %v3149 = vadd.f32 %v3075, %v3148
        %v3150 = vpop.f32.mrf.mxu0
        %3151 = vdwg.mxu0
        %3152 = vmatprep.subr.mxu0 0.0
        %3153 = vmatpush1.xpose.msra.mxu0 0.0
        %3154 = vmatprep.subr.mxu0 0.0
        %3155 = vmatpush1.xpose.msra.mxu0 0.0
        %3156 = vmatprep.subr.mxu0 0.0
        %3157 = vmatpush1.xpose.msra.mxu0 0.0
        %3158 = vmatprep.subr.mxu0 0.0
        %3159 = vmatpush1.xpose.msra.mxu0 0.0
        %3160 = vmatprep.subr.mxu0 0.0
        %3161 = vmatpush1.xpose.msra.mxu0 0.0
        %3162 = vmatprep.subr.mxu0 0.0
        %3163 = vmatpush1.xpose.msra.mxu0 0.0
        %3164 = vmatprep.subr.mxu0 0.0
        %3165 = vmatpush1.xpose.msra.mxu0 0.0
        %3166 = vmatprep.subr.mxu0 0.0
        %3167 = vmatpush1.xpose.msra.mxu0 0.0
        %3168 = vmatprep.subr.mxu0 0.0
        %3169 = vmatpush1.xpose.msra.mxu0 0.0
        %3170 = vmatprep.subr.mxu0 0.0
        %3171 = vmatpush1.xpose.msra.mxu0 0.0
        %3172 = vmatprep.subr.mxu0 0.0
        %3173 = vmatpush1.xpose.msra.mxu0 0.0
        %3174 = vmatprep.subr.mxu0 0.0
        %3175 = vmatpush1.xpose.msra.mxu0 0.0
        %3176 = vmatprep.subr.mxu0 0.0
        %3177 = vmatpush1.xpose.msra.mxu0 0.0
        %3178 = vmatprep.subr.mxu0 0.0
        %3179 = vmatpush1.xpose.msra.mxu0 0.0
        %3180 = vmatprep.subr.mxu0 0.0
        %3181 = vmatpush1.xpose.msra.mxu0 0.0
        %3182 = vmatprep.subr.mxu0 0.0
        %v3183 = vand.u32 %v2924, 4294901760
        %3184 = vmatpush1.xpose.msra.mxu0 %v3183
        %3185 = vmatprep.subr.mxu0 0.0
        %3186 = vmatpush2.xpose.msra.mxu0 0.0
        %3187 = vmatprep.subr.mxu0 0.0
        %3188 = vmatpush2.xpose.msra.mxu0 0.0
        %3189 = vmatprep.subr.mxu0 0.0
        %3190 = vmatpush2.xpose.msra.mxu0 0.0
        %3191 = vmatprep.subr.mxu0 0.0
        %3192 = vmatpush2.xpose.msra.mxu0 0.0
        %3193 = vmatprep.subr.mxu0 0.0
        %3194 = vmatpush2.xpose.msra.mxu0 0.0
        %3195 = vmatprep.subr.mxu0 0.0
        %3196 = vmatpush2.xpose.msra.mxu0 0.0
        %3197 = vmatprep.subr.mxu0 0.0
        %3198 = vmatpush2.xpose.msra.mxu0 0.0
        %3199 = vmatprep.subr.mxu0 0.0
        %3200 = vmatpush2.xpose.msra.mxu0 0.0
        %3201 = vmatprep.subr.mxu0 0.0
        %3202 = vmatpush2.xpose.msra.mxu0 0.0
        %3203 = vmatprep.subr.mxu0 0.0
        %3204 = vmatpush2.xpose.msra.mxu0 0.0
        %3205 = vmatprep.subr.mxu0 0.0
        %3206 = vmatpush2.xpose.msra.mxu0 0.0
        %3207 = vmatprep.subr.mxu0 0.0
        %3208 = vmatpush2.xpose.msra.mxu0 0.0
        %3209 = vmatprep.subr.mxu0 0.0
        %3210 = vmatpush2.xpose.msra.mxu0 0.0
        %3211 = vmatprep.subr.mxu0 0.0
        %3212 = vmatpush2.xpose.msra.mxu0 0.0
        %3213 = vmatprep.subr.mxu0 0.0
        %3214 = vmatpush2.xpose.msra.mxu0 0.0
        %3215 = vmatprep.subr.mxu0 0.0
        %3216 = vmatpush2.xpose.msra.mxu0 0.0
        %3217 = vmatprep.mubr.f32.mxu0 0.0
        %v3218 = vand.u32 %v2922, 4294901760
        %v3219 = vsub.f32 %v2922, %v3218
        %v3220 = vand.u32 %v3219, 4294901760
        %3221 = vmatmul.mubr.f32.gmra.mxu0 %v3220
        %v3222 = vpop.f32.mrf.mxu0
        %v3223 = vadd.f32 %v3149, %v3222
        %v3224 = vpop.f32.mrf.mxu0
        %3225 = vdwg.mxu0
        %3226 = vmatprep.subr.mxu0 0.0
        %3227 = vmatpush1.xpose.msra.mxu0 0.0
        %3228 = vmatprep.subr.mxu0 0.0
        %3229 = vmatpush1.xpose.msra.mxu0 0.0
        %3230 = vmatprep.subr.mxu0 0.0
        %3231 = vmatpush1.xpose.msra.mxu0 0.0
        %3232 = vmatprep.subr.mxu0 0.0
        %3233 = vmatpush1.xpose.msra.mxu0 0.0
        %3234 = vmatprep.subr.mxu0 0.0
        %3235 = vmatpush1.xpose.msra.mxu0 0.0
        %3236 = vmatprep.subr.mxu0 0.0
        %3237 = vmatpush1.xpose.msra.mxu0 0.0
        %3238 = vmatprep.subr.mxu0 0.0
        %3239 = vmatpush1.xpose.msra.mxu0 0.0
        %3240 = vmatprep.subr.mxu0 0.0
        %3241 = vmatpush1.xpose.msra.mxu0 0.0
        %3242 = vmatprep.subr.mxu0 0.0
        %3243 = vmatpush1.xpose.msra.mxu0 0.0
        %3244 = vmatprep.subr.mxu0 0.0
        %3245 = vmatpush1.xpose.msra.mxu0 0.0
        %3246 = vmatprep.subr.mxu0 0.0
        %3247 = vmatpush1.xpose.msra.mxu0 0.0
        %3248 = vmatprep.subr.mxu0 0.0
        %3249 = vmatpush1.xpose.msra.mxu0 0.0
        %3250 = vmatprep.subr.mxu0 0.0
        %3251 = vmatpush1.xpose.msra.mxu0 0.0
        %3252 = vmatprep.subr.mxu0 0.0
        %3253 = vmatpush1.xpose.msra.mxu0 0.0
        %3254 = vmatprep.subr.mxu0 0.0
        %3255 = vmatpush1.xpose.msra.mxu0 0.0
        %3256 = vmatprep.subr.mxu0 0.0
        %v3257 = vand.u32 %v2924, 4294901760
        %v3258 = vsub.f32 %v2924, %v3257
        %v3259 = vand.u32 %v3258, 4294901760
        %3260 = vmatpush1.xpose.msra.mxu0 %v3259
        %3261 = vmatprep.subr.mxu0 0.0
        %3262 = vmatpush2.xpose.msra.mxu0 0.0
        %3263 = vmatprep.subr.mxu0 0.0
        %3264 = vmatpush2.xpose.msra.mxu0 0.0
        %3265 = vmatprep.subr.mxu0 0.0
        %3266 = vmatpush2.xpose.msra.mxu0 0.0
        %3267 = vmatprep.subr.mxu0 0.0
        %3268 = vmatpush2.xpose.msra.mxu0 0.0
        %3269 = vmatprep.subr.mxu0 0.0
        %3270 = vmatpush2.xpose.msra.mxu0 0.0
        %3271 = vmatprep.subr.mxu0 0.0
        %3272 = vmatpush2.xpose.msra.mxu0 0.0
        %3273 = vmatprep.subr.mxu0 0.0
        %3274 = vmatpush2.xpose.msra.mxu0 0.0
        %3275 = vmatprep.subr.mxu0 0.0
        %3276 = vmatpush2.xpose.msra.mxu0 0.0
        %3277 = vmatprep.subr.mxu0 0.0
        %3278 = vmatpush2.xpose.msra.mxu0 0.0
        %3279 = vmatprep.subr.mxu0 0.0
        %3280 = vmatpush2.xpose.msra.mxu0 0.0
        %3281 = vmatprep.subr.mxu0 0.0
        %3282 = vmatpush2.xpose.msra.mxu0 0.0
        %3283 = vmatprep.subr.mxu0 0.0
        %3284 = vmatpush2.xpose.msra.mxu0 0.0
        %3285 = vmatprep.subr.mxu0 0.0
        %3286 = vmatpush2.xpose.msra.mxu0 0.0
        %3287 = vmatprep.subr.mxu0 0.0
        %3288 = vmatpush2.xpose.msra.mxu0 0.0
        %3289 = vmatprep.subr.mxu0 0.0
        %3290 = vmatpush2.xpose.msra.mxu0 0.0
        %3291 = vmatprep.subr.mxu0 0.0
        %3292 = vmatpush2.xpose.msra.mxu0 0.0
        %3293 = vmatprep.mubr.f32.mxu0 0.0
        %v3294 = vand.u32 %v2922, 4294901760
        %3295 = vmatmul.mubr.f32.gmra.mxu0 %v3294
        %v3296 = vpop.f32.mrf.mxu0
        %v3297 = vadd.f32 %v3223, %v3296
        %v3298 = vpop.f32.mrf.mxu0
        %3299 = vdwg.mxu0
        %3300 = vmatprep.subr.mxu0 0.0
        %3301 = vmatpush1.xpose.msra.mxu0 0.0
        %3302 = vmatprep.subr.mxu0 0.0
        %3303 = vmatpush1.xpose.msra.mxu0 0.0
        %3304 = vmatprep.subr.mxu0 0.0
        %3305 = vmatpush1.xpose.msra.mxu0 0.0
        %3306 = vmatprep.subr.mxu0 0.0
        %3307 = vmatpush1.xpose.msra.mxu0 0.0
        %3308 = vmatprep.subr.mxu0 0.0
        %3309 = vmatpush1.xpose.msra.mxu0 0.0
        %3310 = vmatprep.subr.mxu0 0.0
        %3311 = vmatpush1.xpose.msra.mxu0 0.0
        %3312 = vmatprep.subr.mxu0 0.0
        %3313 = vmatpush1.xpose.msra.mxu0 0.0
        %3314 = vmatprep.subr.mxu0 0.0
        %3315 = vmatpush1.xpose.msra.mxu0 0.0
        %3316 = vmatprep.subr.mxu0 0.0
        %3317 = vmatpush1.xpose.msra.mxu0 0.0
        %3318 = vmatprep.subr.mxu0 0.0
        %3319 = vmatpush1.xpose.msra.mxu0 0.0
        %3320 = vmatprep.subr.mxu0 0.0
        %3321 = vmatpush1.xpose.msra.mxu0 0.0
        %3322 = vmatprep.subr.mxu0 0.0
        %3323 = vmatpush1.xpose.msra.mxu0 0.0
        %3324 = vmatprep.subr.mxu0 0.0
        %3325 = vmatpush1.xpose.msra.mxu0 0.0
        %3326 = vmatprep.subr.mxu0 0.0
        %3327 = vmatpush1.xpose.msra.mxu0 0.0
        %3328 = vmatprep.subr.mxu0 0.0
        %3329 = vmatpush1.xpose.msra.mxu0 0.0
        %3330 = vmatprep.subr.mxu0 0.0
        %v3331 = vand.u32 %v2924, 4294901760
        %3332 = vmatpush1.xpose.msra.mxu0 %v3331
        %3333 = vmatprep.subr.mxu0 0.0
        %3334 = vmatpush2.xpose.msra.mxu0 0.0
        %3335 = vmatprep.subr.mxu0 0.0
        %3336 = vmatpush2.xpose.msra.mxu0 0.0
        %3337 = vmatprep.subr.mxu0 0.0
        %3338 = vmatpush2.xpose.msra.mxu0 0.0
        %3339 = vmatprep.subr.mxu0 0.0
        %3340 = vmatpush2.xpose.msra.mxu0 0.0
        %3341 = vmatprep.subr.mxu0 0.0
        %3342 = vmatpush2.xpose.msra.mxu0 0.0
        %3343 = vmatprep.subr.mxu0 0.0
        %3344 = vmatpush2.xpose.msra.mxu0 0.0
        %3345 = vmatprep.subr.mxu0 0.0
        %3346 = vmatpush2.xpose.msra.mxu0 0.0
        %3347 = vmatprep.subr.mxu0 0.0
        %3348 = vmatpush2.xpose.msra.mxu0 0.0
        %3349 = vmatprep.subr.mxu0 0.0
        %3350 = vmatpush2.xpose.msra.mxu0 0.0
        %3351 = vmatprep.subr.mxu0 0.0
        %3352 = vmatpush2.xpose.msra.mxu0 0.0
        %3353 = vmatprep.subr.mxu0 0.0
        %3354 = vmatpush2.xpose.msra.mxu0 0.0
        %3355 = vmatprep.subr.mxu0 0.0
        %3356 = vmatpush2.xpose.msra.mxu0 0.0
        %3357 = vmatprep.subr.mxu0 0.0
        %3358 = vmatpush2.xpose.msra.mxu0 0.0
        %3359 = vmatprep.subr.mxu0 0.0
        %3360 = vmatpush2.xpose.msra.mxu0 0.0
        %3361 = vmatprep.subr.mxu0 0.0
        %3362 = vmatpush2.xpose.msra.mxu0 0.0
        %3363 = vmatprep.subr.mxu0 0.0
        %3364 = vmatpush2.xpose.msra.mxu0 0.0
        %3365 = vmatprep.mubr.f32.mxu0 0.0
        %v3366 = vand.u32 %v2922, 4294901760
        %3367 = vmatmul.mubr.f32.gmra.mxu0 %v3366
        %v3368 = vpop.f32.mrf.mxu0
        %v3369 = vadd.f32 %v3297, %v3368
        %v3370 = vpop.f32.mrf.mxu0
        %3371 = vdwg.mxu0
        %v3372 = vmul.f32 %v3369, 0.35355338
        %v3373 = vadd.f32 %v3372, %v614
        %v3374 = vsel %vm158, %v3373, -inf
        %3375 = vmax.xlane.f32.xlu0 %v3374
        %v3376 = vpop.xlane.xlu0 %3375
        %v3377 = vsub.f32 %v3373, %v3376
        %v3378 = vmul.f32 %v3377, 1.442695
        %v3379 = vpow.pop %v3378
        %v3380 = vsel %vm158, %v3379, 0.0
        %3381 = vadd.xlane.f32.xlu0 %v3380
        %v3382 = vpop.xlane.xlu0 %3381
        %v3383 = vrcp.pop %v3382
        %v3384 = vmul.f32 %v3379, %v3383
        %3385 = vrot.lane.b32.xlu0 %v153, 40
        %v3386 = vpop.permute.xlu0 %3385
        %v3389 = vsel %vm158, %v3384, 0
        %3391 = vmatprep.subr.mxu0 0.0
        %3392 = vmatpush1.msra.mxu0 0.0
        %3393 = vmatprep.subr.mxu0 0.0
        %3394 = vmatpush1.msra.mxu0 0.0
        %3395 = vmatprep.subr.mxu0 0.0
        %3396 = vmatpush1.msra.mxu0 0.0
        %3397 = vmatprep.subr.mxu0 0.0
        %3398 = vmatpush1.msra.mxu0 0.0
        %3399 = vmatprep.subr.mxu0 0.0
        %3400 = vmatpush1.msra.mxu0 0.0
        %3401 = vmatprep.subr.mxu0 0.0
        %3402 = vmatpush1.msra.mxu0 0.0
        %3403 = vmatprep.subr.mxu0 0.0
        %3404 = vmatpush1.msra.mxu0 0.0
        %3405 = vmatprep.subr.mxu0 0.0
        %3406 = vmatpush1.msra.mxu0 0.0
        %3407 = vmatprep.subr.mxu0 0.0
        %3408 = vmatpush1.msra.mxu0 0.0
        %3409 = vmatprep.subr.mxu0 0.0
        %3410 = vmatpush1.msra.mxu0 0.0
        %3411 = vmatprep.subr.mxu0 0.0
        %3412 = vmatpush1.msra.mxu0 0.0
        %3413 = vmatprep.subr.mxu0 0.0
        %3414 = vmatpush1.msra.mxu0 0.0
        %3415 = vmatprep.subr.mxu0 0.0
        %3416 = vmatpush1.msra.mxu0 0.0
        %3417 = vmatprep.subr.mxu0 0.0
        %3418 = vmatpush1.msra.mxu0 0.0
        %3419 = vmatprep.subr.mxu0 0.0
        %3420 = vmatpush1.msra.mxu0 0.0
        %3421 = vmatprep.subr.mxu0 0.0
        %v3422 = vand.u32 %v3386, 4294901760
        %3423 = vmatpush1.msra.mxu0 %v3422
        %3424 = vmatprep.subr.mxu0 0.0
        %3425 = vmatpush2.msra.mxu0 0.0
        %3426 = vmatprep.subr.mxu0 0.0
        %3427 = vmatpush2.msra.mxu0 0.0
        %3428 = vmatprep.subr.mxu0 0.0
        %3429 = vmatpush2.msra.mxu0 0.0
        %3430 = vmatprep.subr.mxu0 0.0
        %3431 = vmatpush2.msra.mxu0 0.0
        %3432 = vmatprep.subr.mxu0 0.0
        %3433 = vmatpush2.msra.mxu0 0.0
        %3434 = vmatprep.subr.mxu0 0.0
        %3435 = vmatpush2.msra.mxu0 0.0
        %3436 = vmatprep.subr.mxu0 0.0
        %3437 = vmatpush2.msra.mxu0 0.0
        %3438 = vmatprep.subr.mxu0 0.0
        %3439 = vmatpush2.msra.mxu0 0.0
        %3440 = vmatprep.subr.mxu0 0.0
        %3441 = vmatpush2.msra.mxu0 0.0
        %3442 = vmatprep.subr.mxu0 0.0
        %3443 = vmatpush2.msra.mxu0 0.0
        %3444 = vmatprep.subr.mxu0 0.0
        %3445 = vmatpush2.msra.mxu0 0.0
        %3446 = vmatprep.subr.mxu0 0.0
        %3447 = vmatpush2.msra.mxu0 0.0
        %3448 = vmatprep.subr.mxu0 0.0
        %3449 = vmatpush2.msra.mxu0 0.0
        %3450 = vmatprep.subr.mxu0 0.0
        %3451 = vmatpush2.msra.mxu0 0.0
        %3452 = vmatprep.subr.mxu0 0.0
        %3453 = vmatpush2.msra.mxu0 0.0
        %3454 = vmatprep.subr.mxu0 0.0
        %3455 = vmatpush2.msra.mxu0 0.0
        %3456 = vmatprep.mubr.f32.mxu0 0.0
        %v3457 = vand.u32 %v3389, 4294901760
        %v3458 = vsub.f32 %v3389, %v3457
        %v3459 = vand.u32 %v3458, 4294901760
        %v3460 = vsub.f32 %v3458, %v3459
        %v3461 = vand.u32 %v3460, 4294901760
        %3462 = vmatmul.mubr.f32.gmra.mxu0 %v3461
        %v3463 = vpop.f32.mrf.mxu0
        %v3464 = vadd.f32 0.0, %v3463
        %v3465 = vpop.f32.mrf.mxu0
        %3466 = vdwg.mxu0
        %3467 = vmatprep.subr.mxu0 0.0
        %3468 = vmatpush1.msra.mxu0 0.0
        %3469 = vmatprep.subr.mxu0 0.0
        %3470 = vmatpush1.msra.mxu0 0.0
        %3471 = vmatprep.subr.mxu0 0.0
        %3472 = vmatpush1.msra.mxu0 0.0
        %3473 = vmatprep.subr.mxu0 0.0
        %3474 = vmatpush1.msra.mxu0 0.0
        %3475 = vmatprep.subr.mxu0 0.0
        %3476 = vmatpush1.msra.mxu0 0.0
        %3477 = vmatprep.subr.mxu0 0.0
        %3478 = vmatpush1.msra.mxu0 0.0
        %3479 = vmatprep.subr.mxu0 0.0
        %3480 = vmatpush1.msra.mxu0 0.0
        %3481 = vmatprep.subr.mxu0 0.0
        %3482 = vmatpush1.msra.mxu0 0.0
        %3483 = vmatprep.subr.mxu0 0.0
        %3484 = vmatpush1.msra.mxu0 0.0
        %3485 = vmatprep.subr.mxu0 0.0
        %3486 = vmatpush1.msra.mxu0 0.0
        %3487 = vmatprep.subr.mxu0 0.0
        %3488 = vmatpush1.msra.mxu0 0.0
        %3489 = vmatprep.subr.mxu0 0.0
        %3490 = vmatpush1.msra.mxu0 0.0
        %3491 = vmatprep.subr.mxu0 0.0
        %3492 = vmatpush1.msra.mxu0 0.0
        %3493 = vmatprep.subr.mxu0 0.0
        %3494 = vmatpush1.msra.mxu0 0.0
        %3495 = vmatprep.subr.mxu0 0.0
        %3496 = vmatpush1.msra.mxu0 0.0
        %3497 = vmatprep.subr.mxu0 0.0
        %v3498 = vand.u32 %v3386, 4294901760
        %v3499 = vsub.f32 %v3386, %v3498
        %v3500 = vand.u32 %v3499, 4294901760
        %v3501 = vsub.f32 %v3499, %v3500
        %v3502 = vand.u32 %v3501, 4294901760
        %3503 = vmatpush1.msra.mxu0 %v3502
        %3504 = vmatprep.subr.mxu0 0.0
        %3505 = vmatpush2.msra.mxu0 0.0
        %3506 = vmatprep.subr.mxu0 0.0
        %3507 = vmatpush2.msra.mxu0 0.0
        %3508 = vmatprep.subr.mxu0 0.0
        %3509 = vmatpush2.msra.mxu0 0.0
        %3510 = vmatprep.subr.mxu0 0.0
        %3511 = vmatpush2.msra.mxu0 0.0
        %3512 = vmatprep.subr.mxu0 0.0
        %3513 = vmatpush2.msra.mxu0 0.0
        %3514 = vmatprep.subr.mxu0 0.0
        %3515 = vmatpush2.msra.mxu0 0.0
        %3516 = vmatprep.subr.mxu0 0.0
        %3517 = vmatpush2.msra.mxu0 0.0
        %3518 = vmatprep.subr.mxu0 0.0
        %3519 = vmatpush2.msra.mxu0 0.0
        %3520 = vmatprep.subr.mxu0 0.0
        %3521 = vmatpush2.msra.mxu0 0.0
        %3522 = vmatprep.subr.mxu0 0.0
        %3523 = vmatpush2.msra.mxu0 0.0
        %3524 = vmatprep.subr.mxu0 0.0
        %3525 = vmatpush2.msra.mxu0 0.0
        %3526 = vmatprep.subr.mxu0 0.0
        %3527 = vmatpush2.msra.mxu0 0.0
        %3528 = vmatprep.subr.mxu0 0.0
        %3529 = vmatpush2.msra.mxu0 0.0
        %3530 = vmatprep.subr.mxu0 0.0
        %3531 = vmatpush2.msra.mxu0 0.0
        %3532 = vmatprep.subr.mxu0 0.0
        %3533 = vmatpush2.msra.mxu0 0.0
        %3534 = vmatprep.subr.mxu0 0.0
        %3535 = vmatpush2.msra.mxu0 0.0
        %3536 = vmatprep.mubr.f32.mxu0 0.0
        %v3537 = vand.u32 %v3389, 4294901760
        %3538 = vmatmul.mubr.f32.gmra.mxu0 %v3537
        %v3539 = vpop.f32.mrf.mxu0
        %v3540 = vadd.f32 %v3464, %v3539
        %v3541 = vpop.f32.mrf.mxu0
        %3542 = vdwg.mxu0
        %3543 = vmatprep.subr.mxu0 0.0
        %3544 = vmatpush1.msra.mxu0 0.0
        %3545 = vmatprep.subr.mxu0 0.0
        %3546 = vmatpush1.msra.mxu0 0.0
        %3547 = vmatprep.subr.mxu0 0.0
        %3548 = vmatpush1.msra.mxu0 0.0
        %3549 = vmatprep.subr.mxu0 0.0
        %3550 = vmatpush1.msra.mxu0 0.0
        %3551 = vmatprep.subr.mxu0 0.0
        %3552 = vmatpush1.msra.mxu0 0.0
        %3553 = vmatprep.subr.mxu0 0.0
        %3554 = vmatpush1.msra.mxu0 0.0
        %3555 = vmatprep.subr.mxu0 0.0
        %3556 = vmatpush1.msra.mxu0 0.0
        %3557 = vmatprep.subr.mxu0 0.0
        %3558 = vmatpush1.msra.mxu0 0.0
        %3559 = vmatprep.subr.mxu0 0.0
        %3560 = vmatpush1.msra.mxu0 0.0
        %3561 = vmatprep.subr.mxu0 0.0
        %3562 = vmatpush1.msra.mxu0 0.0
        %3563 = vmatprep.subr.mxu0 0.0
        %3564 = vmatpush1.msra.mxu0 0.0
        %3565 = vmatprep.subr.mxu0 0.0
        %3566 = vmatpush1.msra.mxu0 0.0
        %3567 = vmatprep.subr.mxu0 0.0
        %3568 = vmatpush1.msra.mxu0 0.0
        %3569 = vmatprep.subr.mxu0 0.0
        %3570 = vmatpush1.msra.mxu0 0.0
        %3571 = vmatprep.subr.mxu0 0.0
        %3572 = vmatpush1.msra.mxu0 0.0
        %3573 = vmatprep.subr.mxu0 0.0
        %v3574 = vand.u32 %v3386, 4294901760
        %v3575 = vsub.f32 %v3386, %v3574
        %3576 = vmatpush1.msra.mxu0 %v3575
        %3577 = vmatprep.subr.mxu0 0.0
        %3578 = vmatpush2.msra.mxu0 0.0
        %3579 = vmatprep.subr.mxu0 0.0
        %3580 = vmatpush2.msra.mxu0 0.0
        %3581 = vmatprep.subr.mxu0 0.0
        %3582 = vmatpush2.msra.mxu0 0.0
        %3583 = vmatprep.subr.mxu0 0.0
        %3584 = vmatpush2.msra.mxu0 0.0
        %3585 = vmatprep.subr.mxu0 0.0
        %3586 = vmatpush2.msra.mxu0 0.0
        %3587 = vmatprep.subr.mxu0 0.0
        %3588 = vmatpush2.msra.mxu0 0.0
        %3589 = vmatprep.subr.mxu0 0.0
        %3590 = vmatpush2.msra.mxu0 0.0
        %3591 = vmatprep.subr.mxu0 0.0
        %3592 = vmatpush2.msra.mxu0 0.0
        %3593 = vmatprep.subr.mxu0 0.0
        %3594 = vmatpush2.msra.mxu0 0.0
        %3595 = vmatprep.subr.mxu0 0.0
        %3596 = vmatpush2.msra.mxu0 0.0
        %3597 = vmatprep.subr.mxu0 0.0
        %3598 = vmatpush2.msra.mxu0 0.0
        %3599 = vmatprep.subr.mxu0 0.0
        %3600 = vmatpush2.msra.mxu0 0.0
        %3601 = vmatprep.subr.mxu0 0.0
        %3602 = vmatpush2.msra.mxu0 0.0
        %3603 = vmatprep.subr.mxu0 0.0
        %3604 = vmatpush2.msra.mxu0 0.0
        %3605 = vmatprep.subr.mxu0 0.0
        %3606 = vmatpush2.msra.mxu0 0.0
        %3607 = vmatprep.subr.mxu0 0.0
        %3608 = vmatpush2.msra.mxu0 0.0
        %3609 = vmatprep.mubr.f32.mxu0 0.0
        %v3610 = vand.u32 %v3389, 4294901760
        %v3611 = vsub.f32 %v3389, %v3610
        %3612 = vmatmul.mubr.f32.gmra.mxu0 %v3611
        %v3613 = vpop.f32.mrf.mxu0
        %v3614 = vadd.f32 %v3540, %v3613
        %v3615 = vpop.f32.mrf.mxu0
        %3616 = vdwg.mxu0
        %3617 = vmatprep.subr.mxu0 0.0
        %3618 = vmatpush1.msra.mxu0 0.0
        %3619 = vmatprep.subr.mxu0 0.0
        %3620 = vmatpush1.msra.mxu0 0.0
        %3621 = vmatprep.subr.mxu0 0.0
        %3622 = vmatpush1.msra.mxu0 0.0
        %3623 = vmatprep.subr.mxu0 0.0
        %3624 = vmatpush1.msra.mxu0 0.0
        %3625 = vmatprep.subr.mxu0 0.0
        %3626 = vmatpush1.msra.mxu0 0.0
        %3627 = vmatprep.subr.mxu0 0.0
        %3628 = vmatpush1.msra.mxu0 0.0
        %3629 = vmatprep.subr.mxu0 0.0
        %3630 = vmatpush1.msra.mxu0 0.0
        %3631 = vmatprep.subr.mxu0 0.0
        %3632 = vmatpush1.msra.mxu0 0.0
        %3633 = vmatprep.subr.mxu0 0.0
        %3634 = vmatpush1.msra.mxu0 0.0
        %3635 = vmatprep.subr.mxu0 0.0
        %3636 = vmatpush1.msra.mxu0 0.0
        %3637 = vmatprep.subr.mxu0 0.0
        %3638 = vmatpush1.msra.mxu0 0.0
        %3639 = vmatprep.subr.mxu0 0.0
        %3640 = vmatpush1.msra.mxu0 0.0
        %3641 = vmatprep.subr.mxu0 0.0
        %3642 = vmatpush1.msra.mxu0 0.0
        %3643 = vmatprep.subr.mxu0 0.0
        %3644 = vmatpush1.msra.mxu0 0.0
        %3645 = vmatprep.subr.mxu0 0.0
        %3646 = vmatpush1.msra.mxu0 0.0
        %3647 = vmatprep.subr.mxu0 0.0
        %v3648 = vand.u32 %v3386, 4294901760
        %3649 = vmatpush1.msra.mxu0 %v3648
        %3650 = vmatprep.subr.mxu0 0.0
        %3651 = vmatpush2.msra.mxu0 0.0
        %3652 = vmatprep.subr.mxu0 0.0
        %3653 = vmatpush2.msra.mxu0 0.0
        %3654 = vmatprep.subr.mxu0 0.0
        %3655 = vmatpush2.msra.mxu0 0.0
        %3656 = vmatprep.subr.mxu0 0.0
        %3657 = vmatpush2.msra.mxu0 0.0
        %3658 = vmatprep.subr.mxu0 0.0
        %3659 = vmatpush2.msra.mxu0 0.0
        %3660 = vmatprep.subr.mxu0 0.0
        %3661 = vmatpush2.msra.mxu0 0.0
        %3662 = vmatprep.subr.mxu0 0.0
        %3663 = vmatpush2.msra.mxu0 0.0
        %3664 = vmatprep.subr.mxu0 0.0
        %3665 = vmatpush2.msra.mxu0 0.0
        %3666 = vmatprep.subr.mxu0 0.0
        %3667 = vmatpush2.msra.mxu0 0.0
        %3668 = vmatprep.subr.mxu0 0.0
        %3669 = vmatpush2.msra.mxu0 0.0
        %3670 = vmatprep.subr.mxu0 0.0
        %3671 = vmatpush2.msra.mxu0 0.0
        %3672 = vmatprep.subr.mxu0 0.0
        %3673 = vmatpush2.msra.mxu0 0.0
        %3674 = vmatprep.subr.mxu0 0.0
        %3675 = vmatpush2.msra.mxu0 0.0
        %3676 = vmatprep.subr.mxu0 0.0
        %3677 = vmatpush2.msra.mxu0 0.0
        %3678 = vmatprep.subr.mxu0 0.0
        %3679 = vmatpush2.msra.mxu0 0.0
        %3680 = vmatprep.subr.mxu0 0.0
        %3681 = vmatpush2.msra.mxu0 0.0
        %3682 = vmatprep.mubr.f32.mxu0 0.0
        %v3683 = vand.u32 %v3389, 4294901760
        %v3684 = vsub.f32 %v3389, %v3683
        %v3685 = vand.u32 %v3684, 4294901760
        %3686 = vmatmul.mubr.f32.gmra.mxu0 %v3685
        %v3687 = vpop.f32.mrf.mxu0
        %v3688 = vadd.f32 %v3614, %v3687
        %v3689 = vpop.f32.mrf.mxu0
        %3690 = vdwg.mxu0
        %3691 = vmatprep.subr.mxu0 0.0
        %3692 = vmatpush1.msra.mxu0 0.0
        %3693 = vmatprep.subr.mxu0 0.0
        %3694 = vmatpush1.msra.mxu0 0.0
        %3695 = vmatprep.subr.mxu0 0.0
        %3696 = vmatpush1.msra.mxu0 0.0
        %3697 = vmatprep.subr.mxu0 0.0
        %3698 = vmatpush1.msra.mxu0 0.0
        %3699 = vmatprep.subr.mxu0 0.0
        %3700 = vmatpush1.msra.mxu0 0.0
        %3701 = vmatprep.subr.mxu0 0.0
        %3702 = vmatpush1.msra.mxu0 0.0
        %3703 = vmatprep.subr.mxu0 0.0
        %3704 = vmatpush1.msra.mxu0 0.0
        %3705 = vmatprep.subr.mxu0 0.0
        %3706 = vmatpush1.msra.mxu0 0.0
        %3707 = vmatprep.subr.mxu0 0.0
        %3708 = vmatpush1.msra.mxu0 0.0
        %3709 = vmatprep.subr.mxu0 0.0
        %3710 = vmatpush1.msra.mxu0 0.0
        %3711 = vmatprep.subr.mxu0 0.0
        %3712 = vmatpush1.msra.mxu0 0.0
        %3713 = vmatprep.subr.mxu0 0.0
        %3714 = vmatpush1.msra.mxu0 0.0
        %3715 = vmatprep.subr.mxu0 0.0
        %3716 = vmatpush1.msra.mxu0 0.0
        %3717 = vmatprep.subr.mxu0 0.0
        %3718 = vmatpush1.msra.mxu0 0.0
        %3719 = vmatprep.subr.mxu0 0.0
        %3720 = vmatpush1.msra.mxu0 0.0
        %3721 = vmatprep.subr.mxu0 0.0
        %v3722 = vand.u32 %v3386, 4294901760
        %v3723 = vsub.f32 %v3386, %v3722
        %v3724 = vand.u32 %v3723, 4294901760
        %3725 = vmatpush1.msra.mxu0 %v3724
        %3726 = vmatprep.subr.mxu0 0.0
        %3727 = vmatpush2.msra.mxu0 0.0
        %3728 = vmatprep.subr.mxu0 0.0
        %3729 = vmatpush2.msra.mxu0 0.0
        %3730 = vmatprep.subr.mxu0 0.0
        %3731 = vmatpush2.msra.mxu0 0.0
        %3732 = vmatprep.subr.mxu0 0.0
        %3733 = vmatpush2.msra.mxu0 0.0
        %3734 = vmatprep.subr.mxu0 0.0
        %3735 = vmatpush2.msra.mxu0 0.0
        %3736 = vmatprep.subr.mxu0 0.0
        %3737 = vmatpush2.msra.mxu0 0.0
        %3738 = vmatprep.subr.mxu0 0.0
        %3739 = vmatpush2.msra.mxu0 0.0
        %3740 = vmatprep.subr.mxu0 0.0
        %3741 = vmatpush2.msra.mxu0 0.0
        %3742 = vmatprep.subr.mxu0 0.0
        %3743 = vmatpush2.msra.mxu0 0.0
        %3744 = vmatprep.subr.mxu0 0.0
        %3745 = vmatpush2.msra.mxu0 0.0
        %3746 = vmatprep.subr.mxu0 0.0
        %3747 = vmatpush2.msra.mxu0 0.0
        %3748 = vmatprep.subr.mxu0 0.0
        %3749 = vmatpush2.msra.mxu0 0.0
        %3750 = vmatprep.subr.mxu0 0.0
        %3751 = vmatpush2.msra.mxu0 0.0
        %3752 = vmatprep.subr.mxu0 0.0
        %3753 = vmatpush2.msra.mxu0 0.0
        %3754 = vmatprep.subr.mxu0 0.0
        %3755 = vmatpush2.msra.mxu0 0.0
        %3756 = vmatprep.subr.mxu0 0.0
        %3757 = vmatpush2.msra.mxu0 0.0
        %3758 = vmatprep.mubr.f32.mxu0 0.0
        %v3759 = vand.u32 %v3389, 4294901760
        %3760 = vmatmul.mubr.f32.gmra.mxu0 %v3759
        %v3761 = vpop.f32.mrf.mxu0
        %v3762 = vadd.f32 %v3688, %v3761
        %v3763 = vpop.f32.mrf.mxu0
        %3764 = vdwg.mxu0
        %3765 = vmatprep.subr.mxu0 0.0
        %3766 = vmatpush1.msra.mxu0 0.0
        %3767 = vmatprep.subr.mxu0 0.0
        %3768 = vmatpush1.msra.mxu0 0.0
        %3769 = vmatprep.subr.mxu0 0.0
        %3770 = vmatpush1.msra.mxu0 0.0
        %3771 = vmatprep.subr.mxu0 0.0
        %3772 = vmatpush1.msra.mxu0 0.0
        %3773 = vmatprep.subr.mxu0 0.0
        %3774 = vmatpush1.msra.mxu0 0.0
        %3775 = vmatprep.subr.mxu0 0.0
        %3776 = vmatpush1.msra.mxu0 0.0
        %3777 = vmatprep.subr.mxu0 0.0
        %3778 = vmatpush1.msra.mxu0 0.0
        %3779 = vmatprep.subr.mxu0 0.0
        %3780 = vmatpush1.msra.mxu0 0.0
        %3781 = vmatprep.subr.mxu0 0.0
        %3782 = vmatpush1.msra.mxu0 0.0
        %3783 = vmatprep.subr.mxu0 0.0
        %3784 = vmatpush1.msra.mxu0 0.0
        %3785 = vmatprep.subr.mxu0 0.0
        %3786 = vmatpush1.msra.mxu0 0.0
        %3787 = vmatprep.subr.mxu0 0.0
        %3788 = vmatpush1.msra.mxu0 0.0
        %3789 = vmatprep.subr.mxu0 0.0
        %3790 = vmatpush1.msra.mxu0 0.0
        %3791 = vmatprep.subr.mxu0 0.0
        %3792 = vmatpush1.msra.mxu0 0.0
        %3793 = vmatprep.subr.mxu0 0.0
        %3794 = vmatpush1.msra.mxu0 0.0
        %3795 = vmatprep.subr.mxu0 0.0
        %v3796 = vand.u32 %v3386, 4294901760
        %3797 = vmatpush1.msra.mxu0 %v3796
        %3798 = vmatprep.subr.mxu0 0.0
        %3799 = vmatpush2.msra.mxu0 0.0
        %3800 = vmatprep.subr.mxu0 0.0
        %3801 = vmatpush2.msra.mxu0 0.0
        %3802 = vmatprep.subr.mxu0 0.0
        %3803 = vmatpush2.msra.mxu0 0.0
        %3804 = vmatprep.subr.mxu0 0.0
        %3805 = vmatpush2.msra.mxu0 0.0
        %3806 = vmatprep.subr.mxu0 0.0
        %3807 = vmatpush2.msra.mxu0 0.0
        %3808 = vmatprep.subr.mxu0 0.0
        %3809 = vmatpush2.msra.mxu0 0.0
        %3810 = vmatprep.subr.mxu0 0.0
        %3811 = vmatpush2.msra.mxu0 0.0
        %3812 = vmatprep.subr.mxu0 0.0
        %3813 = vmatpush2.msra.mxu0 0.0
        %3814 = vmatprep.subr.mxu0 0.0
        %3815 = vmatpush2.msra.mxu0 0.0
        %3816 = vmatprep.subr.mxu0 0.0
        %3817 = vmatpush2.msra.mxu0 0.0
        %3818 = vmatprep.subr.mxu0 0.0
        %3819 = vmatpush2.msra.mxu0 0.0
        %3820 = vmatprep.subr.mxu0 0.0
        %3821 = vmatpush2.msra.mxu0 0.0
        %3822 = vmatprep.subr.mxu0 0.0
        %3823 = vmatpush2.msra.mxu0 0.0
        %3824 = vmatprep.subr.mxu0 0.0
        %3825 = vmatpush2.msra.mxu0 0.0
        %3826 = vmatprep.subr.mxu0 0.0
        %3827 = vmatpush2.msra.mxu0 0.0
        %3828 = vmatprep.subr.mxu0 0.0
        %3829 = vmatpush2.msra.mxu0 0.0
        %3830 = vmatprep.mubr.f32.mxu0 0.0
        %v3831 = vand.u32 %v3389, 4294901760
        %3832 = vmatmul.mubr.f32.gmra.mxu0 %v3831
        %v3833 = vpop.f32.mrf.mxu0
        %v3834 = vadd.f32 %v3762, %v3833
        %v3835 = vpop.f32.mrf.mxu0
        %3836 = vdwg.mxu0
        %3838 = vrot.lane.b32.xlu0 %v1996, 8
        %v3839 = vpop.permute.xlu0 %3838
        %3842 = vrot.lane.b32.xlu0 %v2915, 16
        %v3843 = vpop.permute.xlu0 %3842
        %3846 = vrot.lane.b32.xlu0 %v3834, 24
        %v3847 = vpop.permute.xlu0 %3846
        %v3849 = vsel %vm158, %v1077, %v3839
        %vm3850 = vcmask 130048
        %v3851 = vsel %vm3850, %v3849, %v3843
        %vm3852 = vcmask 195584
        %v3853 = vsel %vm3852, %v3851, %v3847
        %vm3854 = vcmask 261120
        %3855 = vst.msk [vmem:[%s145] sm:$0xff] %vm3854, %v3853
        %s3856 = sand.u32 %s76, 1
        %s3857 = scalar_lea.sflag [#allocation3], %s3856
        %s3858 = sand.u32 %s76, 1
        %s3859 = smul.addr %s3858, 8
        %s3860 = scalar_lea.vmem [#allocation2], %s3859
        // Predicated region
        $region29: #{bert_image_self_attention.3} parent=27 // pred_check
          %p3861 = pneg %p86
        $region30: #{bert_image_self_attention.3} parent=27 // pred_check_branch
          %3863 = sbr.rel (%p3861) target = $region32
        $region31: #{bert_image_self_attention.3} parent=27 // pred_region
          %s3865 = ssub.s32 128, 128
          %3866 = vsyncadd %s3857, %s3865
          %s3867 = smul.addr %s16, 128
          %s3868 = scalar_lea.hbm %s2, %s3867
          %s3870 = sshll.u32 %s3860, 4
          %s3871 = int_to_ptr.vmem [resolvable:$true] %s3870
          %3873 = dma.vmem_to_hbm [thread:$0]  %s3871, 128, %s3868, %s3857
        $region32: #{bert_image_self_attention.3} parent=27 // pred_fallthru
          _
      $region28: #{bert_image_self_attention.3} parent=5 // pred_fallthru
        _
      %p3874 = scmp.le.s32.totalorder 2, %s11
      // Predicated region
      $region33: #{bert_image_self_attention.3} parent=5 // pred_check
        %p3875 = pneg %p3874
      $region34: #{bert_image_self_attention.3} parent=5 // pred_check_branch
        %3877 = sbr.rel (%p3875) target = $region36
      $region35: #{bert_image_self_attention.3} parent=5 // pred_region
        %s3878 = ssub.s32 %s11, 2
        // Predicated region
        $region37: #{bert_image_self_attention.3} parent=35 // pred_check
          %p3879 = pneg %p92
        $region38: #{bert_image_self_attention.3} parent=35 // pred_check_branch
          %3881 = sbr.rel (%p3879) target = $region40
        $region39: #{bert_image_self_attention.3} parent=35 // pred_region
          %s3882 = sand.u32 %s77, 1
          %s3883 = scalar_lea.sflag [#allocation3], %s3882
          %s3884 = sand.u32 %s77, 1
          %s3885 = smul.addr %s3884, 8
          %s3886 = scalar_lea.vmem [#allocation2], %s3885
          %3887 = dma.done %s3883, 128
        $region40: #{bert_image_self_attention.3} parent=35 // pred_fallthru
          _
      $region36: #{bert_image_self_attention.3} parent=5 // pred_fallthru
        _
    $region6: #{bert_image_self_attention.3} parent=1 // loop_footer
      %s15 = sadd.s32 1, %s11
    $region7: #{bert_image_self_attention.3} parent=1 // loop_footer_branch
      %10 = sbr.rel target = $region3
    $region8: #{bert_image_self_attention.3} parent=1 // loop_exit
      _
    %3888 = vsyncpa [#allocation3], 1
    %s3889 = scalar_lea.sflag [#allocation3], 1
    %3890 = vsyncpa %s3889, 1

</llo_original>
